<compile_context>
chip_gen: v7x
topology: tpu7x:2x2x1
jax: 0.10.0
libtpu: 0.0.40
codegen_flags: <defaults>
</compile_context>

<pallas_src>
import functools

import jax
import jax.numpy as jnp
from jax.experimental import pallas as pl
from jax.experimental.pallas import tpu as pltpu


# ----------------------------------------------------------------------------
# Sizes implied by the module
# ----------------------------------------------------------------------------
D_IN = 1024              # flattened NCHW input feature size (4*16*16)
D_TIME = 1024            # time feature width
D_FREQ = 256             # freq feature width
D_CAT = D_TIME + D_FREQ  # 1280
HID = 768                # fc01 hidden
NUM_CLASSES = 40
N_PAD = 128              # lane-padded classifier width


# ----------------------------------------------------------------------------
# Fused forward kernel, img_loss=False:
#   lastrep = encoded = x @ W_cat + b_cat ;  scores = lastrep @ w03 + b03
# Single grid step: everything is resident in VMEM; no accumulation loop.
# ----------------------------------------------------------------------------
def _fused_fwd_kernel(x_ref, wcat_ref, bcat_ref, w03_ref, b03_ref,
                      lastrep_ref, scores_ref):
    lr = jnp.dot(x_ref[...], wcat_ref[...],
                 preferred_element_type=jnp.float32) + bcat_ref[...]
    lastrep_ref[...] = lr                                    # [B, 1280]
    scores_ref[...] = (
        jnp.dot(lr.astype(jnp.bfloat16), w03_ref[...],
                preferred_element_type=jnp.float32) + b03_ref[...]
    )


def _fused_forward(x_bf16, params):
    B = x_bf16.shape[0]
    flops = 2 * B * (D_IN * D_CAT + D_CAT * N_PAD)
    bytes_accessed = (B * D_IN * 2 + D_IN * D_CAT * 2 + D_CAT * N_PAD * 2
                      + (D_CAT + N_PAD) * 4 + B * (D_CAT + N_PAD) * 4)
    return pl.pallas_call(
        _fused_fwd_kernel,
        out_shape=(
            jax.ShapeDtypeStruct((B, D_CAT), jnp.float32),   # lastrep (== encoded)
            jax.ShapeDtypeStruct((B, N_PAD), jnp.float32),   # padded scores
        ),
        grid_spec=pltpu.PrefetchScalarGridSpec(
            num_scalar_prefetch=0,
            grid=(1,),
            in_specs=[
                pl.BlockSpec((B, D_IN), lambda i: (0, 0)),        # x (bf16)
                pl.BlockSpec((D_IN, D_CAT), lambda i: (0, 0)),    # W_cat (full)
                pl.BlockSpec((1, D_CAT), lambda i: (0, 0)),       # b_cat
                pl.BlockSpec((D_CAT, N_PAD), lambda i: (0, 0)),   # w03 (full)
                pl.BlockSpec((1, N_PAD), lambda i: (0, 0)),       # b03
            ],
            out_specs=(
                pl.BlockSpec((B, D_CAT), lambda i: (0, 0)),       # lastrep
                pl.BlockSpec((B, N_PAD), lambda i: (0, 0)),       # scores
            ),
        ),
        compiler_params=pltpu.CompilerParams(
            dimension_semantics=("arbitrary",),
        ),
        cost_estimate=pl.CostEstimate(flops=flops, transcendentals=0,
                                      bytes_accessed=bytes_accessed),
    )(x_bf16, params["wcat"], params["bcat"], params["w03p"], params["b03p"])


# ----------------------------------------------------------------------------
# Fused forward kernel, img_loss=True:
#   lastrep = x @ W_cat + b_cat ; encoded = fc01(lastrep) ; scores = fc02(encoded)
# Single grid step: all three matmuls in one pass, no scratch.
# ----------------------------------------------------------------------------
def _fused_fwd_img_kernel(x_ref, wcat_ref, bcat_ref, w01_ref, b01_ref,
                          w02_ref, b02_ref,
                          lastrep_ref, encoded_ref, scores_ref):
    lr = jnp.dot(x_ref[...], wcat_ref[...],
                 preferred_element_type=jnp.float32) + bcat_ref[...]
    lastrep_ref[...] = lr
    enc = jnp.dot(lr.astype(jnp.bfloat16), w01_ref[...],
                  preferred_element_type=jnp.float32) + b01_ref[...]
    encoded_ref[...] = enc
    scores_ref[...] = (
        jnp.dot(enc.astype(jnp.bfloat16), w02_ref[...],
                preferred_element_type=jnp.float32) + b02_ref[...]
    )


def _fused_forward_img(x_bf16, params):
    B = x_bf16.shape[0]
    flops = 2 * B * (D_IN * D_CAT + D_CAT * HID + HID * N_PAD)
    bytes_accessed = (B * D_IN * 2 + D_IN * D_CAT * 2 + D_CAT * HID * 2
                      + HID * N_PAD * 2 + (D_CAT + HID + N_PAD) * 4
                      + B * (D_CAT + HID + N_PAD) * 4)
    return pl.pallas_call(
        _fused_fwd_img_kernel,
        out_shape=(
            jax.ShapeDtypeStruct((B, D_CAT), jnp.float32),   # lastrep
            jax.ShapeDtypeStruct((B, HID), jnp.float32),     # encoded
            jax.ShapeDtypeStruct((B, N_PAD), jnp.float32),   # padded scores
        ),
        grid_spec=pltpu.PrefetchScalarGridSpec(
            num_scalar_prefetch=0,
            grid=(1,),
            in_specs=[
                pl.BlockSpec((B, D_IN), lambda i: (0, 0)),        # x (bf16)
                pl.BlockSpec((D_IN, D_CAT), lambda i: (0, 0)),    # W_cat
                pl.BlockSpec((1, D_CAT), lambda i: (0, 0)),       # b_cat
                pl.BlockSpec((D_CAT, HID), lambda i: (0, 0)),     # w01
                pl.BlockSpec((1, HID), lambda i: (0, 0)),         # b01
                pl.BlockSpec((HID, N_PAD), lambda i: (0, 0)),     # w02
                pl.BlockSpec((1, N_PAD), lambda i: (0, 0)),       # b02
            ],
            out_specs=(
                pl.BlockSpec((B, D_CAT), lambda i: (0, 0)),       # lastrep
                pl.BlockSpec((B, HID), lambda i: (0, 0)),         # encoded
                pl.BlockSpec((B, N_PAD), lambda i: (0, 0)),       # scores
            ),
        ),
        compiler_params=pltpu.CompilerParams(
            dimension_semantics=("arbitrary",),
        ),
        cost_estimate=pl.CostEstimate(flops=flops, transcendentals=0,
                                      bytes_accessed=bytes_accessed),
    )(x_bf16, params["wcat"], params["bcat"],
      params["w01"], params["b01"], params["w02p"], params["b02p"])


# ----------------------------------------------------------------------------
# Parameter init (PyTorch nn.Linear-style uniform), weights stored bf16
# ----------------------------------------------------------------------------
def _linear_init(key, fan_in, fan_out):
    kw, kb = jax.random.split(key)
    bound = 1.0 / float(fan_in) ** 0.5
    w = jax.random.uniform(kw, (fan_in, fan_out), jnp.float32, -bound, bound)
    b = jax.random.uniform(kb, (fan_out,), jnp.float32, -bound, bound)
    return w, b


def _pad_lane(w, b, n_pad):
    wp = jnp.zeros((w.shape[0], n_pad), jnp.float32).at[:, : w.shape[1]].set(w)
    bp = jnp.zeros((1, n_pad), jnp.float32).at[0, : b.shape[0]].set(b)
    return wp.astype(jnp.bfloat16), bp


def init_params(key):
    ks = jax.random.split(key, 5)
    w_time, b_time = _linear_init(ks[0], D_IN, D_TIME)   # stub time extractor
    w_freq, b_freq = _linear_init(ks[1], D_IN, D_FREQ)   # stub freq extractor
    w01, b01 = _linear_init(ks[2], D_CAT, HID)
    w02, b02 = _linear_init(ks[3], HID, NUM_CLASSES)
    w03, b03 = _linear_init(ks[4], D_CAT, NUM_CLASSES)

    # Host-side fusion: one concatenated weight / bias for concat(time, freq).
    wcat = jnp.concatenate([w_time, w_freq], axis=1).astype(jnp.bfloat16)
    bcat = jnp.concatenate([b_time, b_freq]).reshape(1, D_CAT)

    w03p, b03p = _pad_lane(w03, b03, N_PAD)
    w02p, b02p = _pad_lane(w02, b02, N_PAD)
    return dict(
        wcat=wcat, bcat=bcat,
        w01=w01.astype(jnp.bfloat16), b01=b01.reshape(1, HID),
        w02p=w02p, b02p=b02p,
        w03p=w03p, b03p=b03p,
    )


# ----------------------------------------------------------------------------
# Full forward
# ----------------------------------------------------------------------------
@functools.partial(jax.jit, static_argnames=("img_loss",))
def cls_time_freq_encoder(params, x, img_loss=False):
    B = x.shape[0]
    # Flatten NCHW and cast to bf16 once on the host side (weights are bf16;
    # the matmul operand would be rounded anyway, so precision is unchanged).
    x_flat = x.reshape(B, -1).astype(jnp.bfloat16)
    if img_loss:
        lastrep, encoded, scores_pad = _fused_forward_img(x_flat, params)
        return lastrep, encoded, scores_pad[:, :NUM_CLASSES]
    lastrep, scores_pad = _fused_forward(x_flat, params)
    return lastrep, lastrep, scores_pad[:, :NUM_CLASSES]


# ----------------------------------------------------------------------------
# Pure-JAX reference (uses the same bf16-rounded weights/activations)
# ----------------------------------------------------------------------------
def _reference(params, x, img_loss=False):
    B = x.shape[0]
    x_flat = x.reshape(B, -1).astype(jnp.float32)
    xb = x_flat.astype(jnp.bfloat16).astype(jnp.float32)
    wcat = params["wcat"].astype(jnp.float32)
    lastrep = xb @ wcat + params["bcat"]
    lrb = lastrep.astype(jnp.bfloat16).astype(jnp.float32)
    if img_loss:
        enc = lrb @ params["w01"].astype(jnp.float32) + params["b01"]
        encb = enc.astype(jnp.bfloat16).astype(jnp.float32)
        scores = (encb @ params["w02p"].astype(jnp.float32)
                  + params["b02p"])[:, :NUM_CLASSES]
        return lastrep, enc, scores
    scores = (lrb @ params["w03p"].astype(jnp.float32)
              + params["b03p"])[:, :NUM_CLASSES]
    return lastrep, lastrep, scores


if __name__ == "__main__":
    key = jax.random.PRNGKey(0)
    kp, kx = jax.random.split(key)
    params = init_params(kp)

    # x: NCHW, flattened feature size = 4*16*16 = 1024; B=8 keeps sublanes full.
    x = jax.random.normal(kx, (8, 4, 16, 16), jnp.float32)

    # img_loss=False (default branch)
    lastrep, encoded, scores = cls_time_freq_encoder(params, x, img_loss=False)
    jax.block_until_ready(scores)
    r_lastrep, r_encoded, r_scores = _reference(params, x, img_loss=False)
    assert jnp.allclose(lastrep, r_lastrep, atol=1e-2, rtol=1e-2)
    assert jnp.allclose(encoded, r_encoded, atol=1e-2, rtol=1e-2)
    assert jnp.allclose(scores, r_scores, atol=1e-2, rtol=1e-2)

    # img_loss=True branch
    lastrep2, encoded2, scores2 = cls_time_freq_encoder(params, x, img_loss=True)
    jax.block_until_ready(scores2)
    r_lastrep2, r_encoded2, r_scores2 = _reference(params, x, img_loss=True)
    assert jnp.allclose(lastrep2, r_lastrep2, atol=1e-2, rtol=1e-2)
    assert jnp.allclose(encoded2, r_encoded2, atol=1e-2, rtol=1e-2)
    assert jnp.allclose(scores2, r_scores2, atol=1e-2, rtol=1e-2)

    print("KERNEL_OK")
</pallas_src>

<mosaic_0001>
module attributes {stable_mosaic.version = 11 : i64} {
  func.func @_fused_fwd_kernel(%arg0: i32, %arg1: memref<8x1024xbf16, #tpu.memory_space<vmem>>, %arg2: memref<1024x1280xbf16, #tpu.memory_space<vmem>>, %arg3: memref<1x1280xf32, #tpu.memory_space<vmem>>, %arg4: memref<1280x128xbf16, #tpu.memory_space<vmem>>, %arg5: memref<1x128xf32, #tpu.memory_space<vmem>>, %arg6: memref<8x1280xf32, #tpu.memory_space<vmem>>, %arg7: memref<8x128xf32, #tpu.memory_space<vmem>>) attributes {dimension_semantics = [#tpu.dimension_semantics<arbitrary>], iteration_bounds = array<i64: 1>, scalar_prefetch = 0 : i64, scratch_operands = 0 : i64, tpu.core_type = #tpu.core_type<tc>, window_params = [{pipeline_mode = #tpu.pipeline_mode<synchronous>, transform_indices = @transform_0, window_bounds = array<i64: 8, 1024>}, {pipeline_mode = #tpu.pipeline_mode<synchronous>, transform_indices = @transform_1, window_bounds = array<i64: 1024, 1280>}, {pipeline_mode = #tpu.pipeline_mode<synchronous>, transform_indices = @transform_2, window_bounds = array<i64: 1, 1280>}, {pipeline_mode = #tpu.pipeline_mode<synchronous>, transform_indices = @transform_3, window_bounds = array<i64: 1280, 128>}, {pipeline_mode = #tpu.pipeline_mode<synchronous>, transform_indices = @transform_4, window_bounds = array<i64: 1, 128>}, {pipeline_mode = #tpu.pipeline_mode<synchronous>, transform_indices = @transform_5, window_bounds = array<i64: 8, 1280>}, {pipeline_mode = #tpu.pipeline_mode<synchronous>, transform_indices = @transform_6, window_bounds = array<i64: 8, 128>}]} {
    %c0 = arith.constant 0 : index
    %c0_0 = arith.constant 0 : index
    %0 = vector.load %arg1[%c0, %c0_0] : memref<8x1024xbf16, #tpu.memory_space<vmem>>, vector<8x1024xbf16>
    %c0_1 = arith.constant 0 : index
    %c0_2 = arith.constant 0 : index
    %1 = vector.load %arg2[%c0_1, %c0_2] : memref<1024x1280xbf16, #tpu.memory_space<vmem>>, vector<1024x1280xbf16>
    %cst = arith.constant dense<0.000000e+00> : vector<8x1280xf32>
    %2 = tpu.matmul %0, %1, %cst {dimension_numbers = #tpu.dot_dimension_numbers<[1], [0], [0], [1], [0, 0, 1, 1], [], []>} : vector<8x1024xbf16>, vector<1024x1280xbf16>, vector<8x1280xf32> -> vector<8x1280xf32>
    %c0_3 = arith.constant 0 : index
    %c0_4 = arith.constant 0 : index
    %3 = vector.load %arg3[%c0_3, %c0_4] : memref<1x1280xf32, #tpu.memory_space<vmem>>, vector<1x1280xf32>
    %4 = vector.broadcast %3 : vector<1x1280xf32> to vector<8x1280xf32>
    %5 = arith.addf %2, %4 : vector<8x1280xf32>
    %c0_5 = arith.constant 0 : index
    %c0_6 = arith.constant 0 : index
    %6 = vector.load %arg6[%c0_5, %c0_6] : memref<8x1280xf32, #tpu.memory_space<vmem>>, vector<8x1280xf32>
    tpu.vector_store %arg6[%c0_5, %c0_6], %5 {strides = array<i32>} : memref<8x1280xf32, #tpu.memory_space<vmem>>, vector<8x1280xf32>,
    %7 = arith.truncf %5 : vector<8x1280xf32> to vector<8x1280xbf16>
    %c0_7 = arith.constant 0 : index
    %c0_8 = arith.constant 0 : index
    %8 = vector.load %arg4[%c0_7, %c0_8] : memref<1280x128xbf16, #tpu.memory_space<vmem>>, vector<1280x128xbf16>
    %cst_9 = arith.constant dense<0.000000e+00> : vector<8x128xf32>
    %9 = tpu.matmul %7, %8, %cst_9 {dimension_numbers = #tpu.dot_dimension_numbers<[1], [0], [0], [1], [0, 0, 1, 1], [], []>} : vector<8x1280xbf16>, vector<1280x128xbf16>, vector<8x128xf32> -> vector<8x128xf32>
    %c0_10 = arith.constant 0 : index
    %c0_11 = arith.constant 0 : index
    %10 = vector.load %arg5[%c0_10, %c0_11] : memref<1x128xf32, #tpu.memory_space<vmem>>, vector<1x128xf32>
    %11 = vector.broadcast %10 : vector<1x128xf32> to vector<8x128xf32>
    %12 = arith.addf %9, %11 : vector<8x128xf32>
    %c0_12 = arith.constant 0 : index
    %c0_13 = arith.constant 0 : index
    %13 = vector.load %arg7[%c0_12, %c0_13] : memref<8x128xf32, #tpu.memory_space<vmem>>, vector<8x128xf32>
    tpu.vector_store %arg7[%c0_12, %c0_13], %12 {strides = array<i32>} : memref<8x128xf32, #tpu.memory_space<vmem>>, vector<8x128xf32>,
    return
  }
  func.func @transform_0(%arg0: i32) -> (i32, i32) {
    %c0_i32 = arith.constant 0 : i32
    %c0_i32_0 = arith.constant 0 : i32
    %c0_i32_1 = arith.constant 0 : i32
    return %c0_i32, %c0_i32_0 : i32, i32
  }
  func.func @transform_1(%arg0: i32) -> (i32, i32) {
    %c0_i32 = arith.constant 0 : i32
    %c0_i32_0 = arith.constant 0 : i32
    %c0_i32_1 = arith.constant 0 : i32
    return %c0_i32, %c0_i32_0 : i32, i32
  }
  func.func @transform_2(%arg0: i32) -> (i32, i32) {
    %c0_i32 = arith.constant 0 : i32
    %c0_i32_0 = arith.constant 0 : i32
    %c0_i32_1 = arith.constant 0 : i32
    return %c0_i32, %c0_i32_0 : i32, i32
  }
  func.func @transform_3(%arg0: i32) -> (i32, i32) {
    %c0_i32 = arith.constant 0 : i32
    %c0_i32_0 = arith.constant 0 : i32
    %c0_i32_1 = arith.constant 0 : i32
    return %c0_i32, %c0_i32_0 : i32, i32
  }
  func.func @transform_4(%arg0: i32) -> (i32, i32) {
    %c0_i32 = arith.constant 0 : i32
    %c0_i32_0 = arith.constant 0 : i32
    %c0_i32_1 = arith.constant 0 : i32
    return %c0_i32, %c0_i32_0 : i32, i32
  }
  func.func @transform_5(%arg0: i32) -> (i32, i32) {
    %c0_i32 = arith.constant 0 : i32
    %c0_i32_0 = arith.constant 0 : i32
    %c0_i32_1 = arith.constant 0 : i32
    return %c0_i32, %c0_i32_0 : i32, i32
  }
  func.func @transform_6(%arg0: i32) -> (i32, i32) {
    %c0_i32 = arith.constant 0 : i32
    %c0_i32_0 = arith.constant 0 : i32
    %c0_i32_1 = arith.constant 0 : i32
    return %c0_i32, %c0_i32_0 : i32, i32
  }
}

</mosaic_0001>

<llo_original>
// kernel: cls_time_freq_encoder.1
$region0: #{cls_time_freq_encoder.1}
  #allocation0 [shape = 'u32[]', space=smem, size = 0x4, offset = 0x4, fixed_abs, tag = 'smem constant byte address 0x4 - core index']
  #allocation1 [shape = 'u32[144,128]{1,0:T(1,128)}', space=vmem, size = 0x12000, scoped, tag = 'internal scratch']
  %s0 = inlined_call_operand.vmem [shape: bf16[8,1024], index: 0, kind: input, shape index: {}]
  %s1 = inlined_call_operand.hbm [shape: bf16[1024,1280], index: 1, kind: input, shape index: {}]
  %s2 = inlined_call_operand.hbm [shape: f32[1,1280], index: 2, kind: input, shape index: {}]
  %s3 = inlined_call_operand.hbm [shape: bf16[1280,128], index: 3, kind: input, shape index: {}]
  %s4 = inlined_call_operand.hbm [shape: f32[1,128], index: 4, kind: input, shape index: {}]
  %s5 = inlined_call_operand.vmem [shape: f32[8,1280], index: 5, kind: output, shape index: {0}]
  %s6 = inlined_call_operand.hbm [shape: f32[8,128], index: 6, kind: output, shape index: {1}]
  %7 = xla_tuple %s5, %s6
  %s8 = sld [smem:[#allocation0]]
  $region54: #{cls_time_freq_encoder.1} parent=0
    _
  %s10 = ssub.s32 1, %s8
  %s11 = scalar_select 0, %s10, %s8
  $region1: #{cls_time_freq_encoder.1} parent=0
    #allocation2 [shape = 'u8[2621440]{0}', space=vmem, size = 0x280000, scoped, tag = 'input window, operand 1, single buffered']
    #allocation3 [shape = 's32[1]{0}', space=sflag, size = 0x4, scoped, tag = 'scoped memory for cls_time_freq_encoder.1']
    #allocation4 [shape = 's32[1]{0}', space=sflag, size = 0x4, scoped, tag = 'scoped memory for cls_time_freq_encoder.1']
    #allocation5 [shape = 'u8[5120]{0}', space=vmem, size = 0x1400, scoped, tag = 'input window, operand 2, single buffered']
    #allocation6 [shape = 's32[1]{0}', space=sflag, size = 0x4, scoped, tag = 'scoped memory for cls_time_freq_encoder.1']
    #allocation7 [shape = 'u8[327680]{0}', space=vmem, size = 0x50000, scoped, tag = 'input window, operand 3, single buffered']
    #allocation8 [shape = 'u8[512]{0}', space=vmem, size = 0x400, scoped, tag = 'input window, operand 4, single buffered']
    #allocation9 [shape = 's32[1]{0}', space=sflag, size = 0x4, scoped, tag = 'scoped memory for cls_time_freq_encoder.1']
    #allocation10 [shape = 'u8[4096]{0}', space=vmem, size = 0x1000, scoped, tag = 'output window, operand 1, single buffered']
    %12 = vsyncpa [#allocation3], 0
    %13 = vsyncpa [#allocation6], 0
    %14 = vsyncpa [#allocation9], 0
    %15 = vsyncpa [#allocation4], 0
    // Predicated region
    $region2: #{cls_time_freq_encoder.1} parent=1 // pred_check
      _
    $region3: #{cls_time_freq_encoder.1} parent=1 // pred_check_branch
      %17 = sbr.rel (0) target = $region5
    $region4: #{cls_time_freq_encoder.1} parent=1 // pred_region
      _
    $region5: #{cls_time_freq_encoder.1} parent=1 // pred_fallthru
      _
    // Predicated region
    $region6: #{cls_time_freq_encoder.1} parent=1 // pred_check
      _
    $region7: #{cls_time_freq_encoder.1} parent=1 // pred_check_branch
      %19 = sbr.rel (0) target = $region9
    $region8: #{cls_time_freq_encoder.1} parent=1 // pred_region
      %s21 = ssub.s32 81920, 81920
      %22 = vsyncadd [#allocation3], %s21
      %s23 = sshll.u32 [#allocation2], 4
      %s24 = int_to_ptr.vmem [resolvable:$true] %s23
      %29 = dma.hbm_to_vmem [thread:$0]  %s1, 81920, %s24, [#allocation3], 640, 640, 40
    $region9: #{cls_time_freq_encoder.1} parent=1 // pred_fallthru
      _
    // Predicated region
    $region10: #{cls_time_freq_encoder.1} parent=1 // pred_check
      _
    $region11: #{cls_time_freq_encoder.1} parent=1 // pred_check_branch
      %31 = sbr.rel (0) target = $region13
    $region12: #{cls_time_freq_encoder.1} parent=1 // pred_region
      %s33 = ssub.s32 160, 160
      %34 = vsyncadd [#allocation6], %s33
      %s36 = sshll.u32 [#allocation5], 4
      %s37 = int_to_ptr.vmem [resolvable:$true] %s36
      %39 = dma.hbm_to_vmem [thread:$0]  %s2, 160, %s37, [#allocation6]
    $region13: #{cls_time_freq_encoder.1} parent=1 // pred_fallthru
      _
    // Predicated region
    $region14: #{cls_time_freq_encoder.1} parent=1 // pred_check
      _
    $region15: #{cls_time_freq_encoder.1} parent=1 // pred_check_branch
      %41 = sbr.rel (0) target = $region17
    $region16: #{cls_time_freq_encoder.1} parent=1 // pred_region
      %s43 = ssub.s32 10240, 10240
      %44 = vsyncadd [#allocation6], %s43
      %s45 = sshll.u32 [#allocation7], 4
      %s46 = int_to_ptr.vmem [resolvable:$true] %s45
      %51 = dma.hbm_to_vmem [thread:$0]  %s3, 10240, %s46, [#allocation6], 64, 64, 4
    $region17: #{cls_time_freq_encoder.1} parent=1 // pred_fallthru
      _
    // Predicated region
    $region18: #{cls_time_freq_encoder.1} parent=1 // pred_check
      _
    $region19: #{cls_time_freq_encoder.1} parent=1 // pred_check_branch
      %53 = sbr.rel (0) target = $region21
    $region20: #{cls_time_freq_encoder.1} parent=1 // pred_region
      %s55 = ssub.s32 16, 16
      %56 = vsyncadd [#allocation9], %s55
      %s58 = sshll.u32 [#allocation8], 4
      %s59 = int_to_ptr.vmem [resolvable:$true] %s58
      %61 = dma.hbm_to_vmem [thread:$0]  %s4, 16, %s59, [#allocation9]
    $region21: #{cls_time_freq_encoder.1} parent=1 // pred_fallthru
      _
    // Predicated region
    $region22: #{cls_time_freq_encoder.1} parent=1 // pred_check
      _
    $region23: #{cls_time_freq_encoder.1} parent=1 // pred_check_branch
      %63 = sbr.rel (0) target = $region25
    $region24: #{cls_time_freq_encoder.1} parent=1 // pred_region
      %64 = dma.done [#allocation3], 81920
    $region25: #{cls_time_freq_encoder.1} parent=1 // pred_fallthru
      _
    // Predicated region
    $region26: #{cls_time_freq_encoder.1} parent=1 // pred_check
      _
    $region27: #{cls_time_freq_encoder.1} parent=1 // pred_check_branch
      %66 = sbr.rel (0) target = $region29
    $region28: #{cls_time_freq_encoder.1} parent=1 // pred_region
      %67 = dma.done [#allocation6], 160
    $region29: #{cls_time_freq_encoder.1} parent=1 // pred_fallthru
      _
    // Predicated region
    $region30: #{cls_time_freq_encoder.1} parent=1 // pred_check
      _
    $region31: #{cls_time_freq_encoder.1} parent=1 // pred_check_branch
      %69 = sbr.rel (0) target = $region33
    $region32: #{cls_time_freq_encoder.1} parent=1 // pred_region
      %70 = dma.done [#allocation6], 10240
    $region33: #{cls_time_freq_encoder.1} parent=1 // pred_fallthru
      _
    // Predicated region
    $region34: #{cls_time_freq_encoder.1} parent=1 // pred_check
      _
    $region35: #{cls_time_freq_encoder.1} parent=1 // pred_check_branch
      %72 = sbr.rel (0) target = $region37
    $region36: #{cls_time_freq_encoder.1} parent=1 // pred_region
      %73 = dma.done [#allocation9], 16
    $region37: #{cls_time_freq_encoder.1} parent=1 // pred_fallthru
      _
    %v75 = vld [vmem:[%s0] sm:$0xff]
    %v76 = vld [vmem:[%s0 + $0x8] sm:$0xff]
    %v77 = vld [vmem:[%s0 + $0x10] sm:$0xff]
    %v78 = vld [vmem:[%s0 + $0x18] sm:$0xff]
    %v79 = vld [vmem:[#allocation2] sm:$0xff]
    %v80 = vld [vmem:[#allocation2 + $0x8] sm:$0xff]
    %v81 = vld [vmem:[#allocation2 + $0x10] sm:$0xff]
    %v82 = vld [vmem:[#allocation2 + $0x18] sm:$0xff]
    %v83 = vld [vmem:[#allocation2 + $0x20] sm:$0xff]
    %v84 = vld [vmem:[#allocation2 + $0x28] sm:$0xff]
    %v85 = vld [vmem:[#allocation2 + $0x30] sm:$0xff]
    %v86 = vld [vmem:[#allocation2 + $0x38] sm:$0xff]
    %v87 = vld [vmem:[#allocation2 + $0x40] sm:$0xff]
    %v88 = vld [vmem:[#allocation2 + $0x48] sm:$0xff]
    %v89 = vld [vmem:[#allocation2 + $0x50] sm:$0xff]
    %v90 = vld [vmem:[#allocation2 + $0x58] sm:$0xff]
    %v91 = vld [vmem:[#allocation2 + $0x60] sm:$0xff]
    %v92 = vld [vmem:[#allocation2 + $0x68] sm:$0xff]
    %v93 = vld [vmem:[#allocation2 + $0x70] sm:$0xff]
    %v94 = vld [vmem:[#allocation2 + $0x78] sm:$0xff]
    %v95 = vld [vmem:[#allocation2 + $0x80] sm:$0xff]
    %v96 = vld [vmem:[#allocation2 + $0x88] sm:$0xff]
    %v97 = vld [vmem:[#allocation2 + $0x90] sm:$0xff]
    %v98 = vld [vmem:[#allocation2 + $0x98] sm:$0xff]
    %v99 = vld [vmem:[#allocation2 + $0xa0] sm:$0xff]
    %v100 = vld [vmem:[#allocation2 + $0xa8] sm:$0xff]
    %v101 = vld [vmem:[#allocation2 + $0xb0] sm:$0xff]
    %v102 = vld [vmem:[#allocation2 + $0xb8] sm:$0xff]
    %v103 = vld [vmem:[#allocation2 + $0xc0] sm:$0xff]
    %v104 = vld [vmem:[#allocation2 + $0xc8] sm:$0xff]
    %v105 = vld [vmem:[#allocation2 + $0xd0] sm:$0xff]
    %v106 = vld [vmem:[#allocation2 + $0xd8] sm:$0xff]
    %v107 = vld [vmem:[#allocation2 + $0xe0] sm:$0xff]
    %v108 = vld [vmem:[#allocation2 + $0xe8] sm:$0xff]
    %v109 = vld [vmem:[#allocation2 + $0xf0] sm:$0xff]
    %v110 = vld [vmem:[#allocation2 + $0xf8] sm:$0xff]
    %v111 = vld [vmem:[#allocation2 + $0x100] sm:$0xff]
    %v112 = vld [vmem:[#allocation2 + $0x108] sm:$0xff]
    %v113 = vld [vmem:[#allocation2 + $0x110] sm:$0xff]
    %v114 = vld [vmem:[#allocation2 + $0x118] sm:$0xff]
    %v115 = vld [vmem:[#allocation2 + $0x120] sm:$0xff]
    %v116 = vld [vmem:[#allocation2 + $0x128] sm:$0xff]
    %v117 = vld [vmem:[#allocation2 + $0x130] sm:$0xff]
    %v118 = vld [vmem:[#allocation2 + $0x138] sm:$0xff]
    %v119 = vld [vmem:[#allocation2 + $0x140] sm:$0xff]
    %v120 = vld [vmem:[#allocation2 + $0x148] sm:$0xff]
    %v121 = vld [vmem:[#allocation2 + $0x150] sm:$0xff]
    %v122 = vld [vmem:[#allocation2 + $0x158] sm:$0xff]
    %v123 = vld [vmem:[#allocation2 + $0x160] sm:$0xff]
    %v124 = vld [vmem:[#allocation2 + $0x168] sm:$0xff]
    %v125 = vld [vmem:[#allocation2 + $0x170] sm:$0xff]
    %v126 = vld [vmem:[#allocation2 + $0x178] sm:$0xff]
    %v127 = vld [vmem:[#allocation2 + $0x180] sm:$0xff]
    %v128 = vld [vmem:[#allocation2 + $0x188] sm:$0xff]
    %v129 = vld [vmem:[#allocation2 + $0x190] sm:$0xff]
    %v130 = vld [vmem:[#allocation2 + $0x198] sm:$0xff]
    %v131 = vld [vmem:[#allocation2 + $0x1a0] sm:$0xff]
    %v132 = vld [vmem:[#allocation2 + $0x1a8] sm:$0xff]
    %v133 = vld [vmem:[#allocation2 + $0x1b0] sm:$0xff]
    %v134 = vld [vmem:[#allocation2 + $0x1b8] sm:$0xff]
    %v135 = vld [vmem:[#allocation2 + $0x1c0] sm:$0xff]
    %v136 = vld [vmem:[#allocation2 + $0x1c8] sm:$0xff]
    %v137 = vld [vmem:[#allocation2 + $0x1d0] sm:$0xff]
    %v138 = vld [vmem:[#allocation2 + $0x1d8] sm:$0xff]
    %v139 = vld [vmem:[#allocation2 + $0x1e0] sm:$0xff]
    %v140 = vld [vmem:[#allocation2 + $0x1e8] sm:$0xff]
    %v141 = vld [vmem:[#allocation2 + $0x1f0] sm:$0xff]
    %v142 = vld [vmem:[#allocation2 + $0x1f8] sm:$0xff]
    %v143 = vld [vmem:[#allocation2 + $0x200] sm:$0xff]
    %v144 = vld [vmem:[#allocation2 + $0x208] sm:$0xff]
    %v145 = vld [vmem:[#allocation2 + $0x210] sm:$0xff]
    %v146 = vld [vmem:[#allocation2 + $0x218] sm:$0xff]
    %v147 = vld [vmem:[#allocation2 + $0x220] sm:$0xff]
    %v148 = vld [vmem:[#allocation2 + $0x228] sm:$0xff]
    %v149 = vld [vmem:[#allocation2 + $0x230] sm:$0xff]
    %v150 = vld [vmem:[#allocation2 + $0x238] sm:$0xff]
    %v151 = vld [vmem:[#allocation2 + $0x240] sm:$0xff]
    %v152 = vld [vmem:[#allocation2 + $0x248] sm:$0xff]
    %v153 = vld [vmem:[#allocation2 + $0x250] sm:$0xff]
    %v154 = vld [vmem:[#allocation2 + $0x258] sm:$0xff]
    %v155 = vld [vmem:[#allocation2 + $0x260] sm:$0xff]
    %v156 = vld [vmem:[#allocation2 + $0x268] sm:$0xff]
    %v157 = vld [vmem:[#allocation2 + $0x270] sm:$0xff]
    %v158 = vld [vmem:[#allocation2 + $0x278] sm:$0xff]
    %v159 = vld [vmem:[#allocation2 + $0x280] sm:$0xff]
    %v160 = vld [vmem:[#allocation2 + $0x288] sm:$0xff]
    %v161 = vld [vmem:[#allocation2 + $0x290] sm:$0xff]
    %v162 = vld [vmem:[#allocation2 + $0x298] sm:$0xff]
    %v163 = vld [vmem:[#allocation2 + $0x2a0] sm:$0xff]
    %v164 = vld [vmem:[#allocation2 + $0x2a8] sm:$0xff]
    %v165 = vld [vmem:[#allocation2 + $0x2b0] sm:$0xff]
    %v166 = vld [vmem:[#allocation2 + $0x2b8] sm:$0xff]
    %v167 = vld [vmem:[#allocation2 + $0x2c0] sm:$0xff]
    %v168 = vld [vmem:[#allocation2 + $0x2c8] sm:$0xff]
    %v169 = vld [vmem:[#allocation2 + $0x2d0] sm:$0xff]
    %v170 = vld [vmem:[#allocation2 + $0x2d8] sm:$0xff]
    %v171 = vld [vmem:[#allocation2 + $0x2e0] sm:$0xff]
    %v172 = vld [vmem:[#allocation2 + $0x2e8] sm:$0xff]
    %v173 = vld [vmem:[#allocation2 + $0x2f0] sm:$0xff]
    %v174 = vld [vmem:[#allocation2 + $0x2f8] sm:$0xff]
    %v175 = vld [vmem:[#allocation2 + $0x300] sm:$0xff]
    %v176 = vld [vmem:[#allocation2 + $0x308] sm:$0xff]
    %v177 = vld [vmem:[#allocation2 + $0x310] sm:$0xff]
    %v178 = vld [vmem:[#allocation2 + $0x318] sm:$0xff]
    %v179 = vld [vmem:[#allocation2 + $0x320] sm:$0xff]
    %v180 = vld [vmem:[#allocation2 + $0x328] sm:$0xff]
    %v181 = vld [vmem:[#allocation2 + $0x330] sm:$0xff]
    %v182 = vld [vmem:[#allocation2 + $0x338] sm:$0xff]
    %v183 = vld [vmem:[#allocation2 + $0x340] sm:$0xff]
    %v184 = vld [vmem:[#allocation2 + $0x348] sm:$0xff]
    %v185 = vld [vmem:[#allocation2 + $0x350] sm:$0xff]
    %v186 = vld [vmem:[#allocation2 + $0x358] sm:$0xff]
    %v187 = vld [vmem:[#allocation2 + $0x360] sm:$0xff]
    %v188 = vld [vmem:[#allocation2 + $0x368] sm:$0xff]
    %v189 = vld [vmem:[#allocation2 + $0x370] sm:$0xff]
    %v190 = vld [vmem:[#allocation2 + $0x378] sm:$0xff]
    %v191 = vld [vmem:[#allocation2 + $0x380] sm:$0xff]
    %v192 = vld [vmem:[#allocation2 + $0x388] sm:$0xff]
    %v193 = vld [vmem:[#allocation2 + $0x390] sm:$0xff]
    %v194 = vld [vmem:[#allocation2 + $0x398] sm:$0xff]
    %v195 = vld [vmem:[#allocation2 + $0x3a0] sm:$0xff]
    %v196 = vld [vmem:[#allocation2 + $0x3a8] sm:$0xff]
    %v197 = vld [vmem:[#allocation2 + $0x3b0] sm:$0xff]
    %v198 = vld [vmem:[#allocation2 + $0x3b8] sm:$0xff]
    %v199 = vld [vmem:[#allocation2 + $0x3c0] sm:$0xff]
    %v200 = vld [vmem:[#allocation2 + $0x3c8] sm:$0xff]
    %v201 = vld [vmem:[#allocation2 + $0x3d0] sm:$0xff]
    %v202 = vld [vmem:[#allocation2 + $0x3d8] sm:$0xff]
    %v203 = vld [vmem:[#allocation2 + $0x3e0] sm:$0xff]
    %v204 = vld [vmem:[#allocation2 + $0x3e8] sm:$0xff]
    %v205 = vld [vmem:[#allocation2 + $0x3f0] sm:$0xff]
    %v206 = vld [vmem:[#allocation2 + $0x3f8] sm:$0xff]
    %v207 = vld [vmem:[#allocation2 + $0x400] sm:$0xff]
    %v208 = vld [vmem:[#allocation2 + $0x408] sm:$0xff]
    %v209 = vld [vmem:[#allocation2 + $0x410] sm:$0xff]
    %v210 = vld [vmem:[#allocation2 + $0x418] sm:$0xff]
    %v211 = vld [vmem:[#allocation2 + $0x420] sm:$0xff]
    %v212 = vld [vmem:[#allocation2 + $0x428] sm:$0xff]
    %v213 = vld [vmem:[#allocation2 + $0x430] sm:$0xff]
    %v214 = vld [vmem:[#allocation2 + $0x438] sm:$0xff]
    %v215 = vld [vmem:[#allocation2 + $0x440] sm:$0xff]
    %v216 = vld [vmem:[#allocation2 + $0x448] sm:$0xff]
    %v217 = vld [vmem:[#allocation2 + $0x450] sm:$0xff]
    %v218 = vld [vmem:[#allocation2 + $0x458] sm:$0xff]
    %v219 = vld [vmem:[#allocation2 + $0x460] sm:$0xff]
    %v220 = vld [vmem:[#allocation2 + $0x468] sm:$0xff]
    %v221 = vld [vmem:[#allocation2 + $0x470] sm:$0xff]
    %v222 = vld [vmem:[#allocation2 + $0x478] sm:$0xff]
    %v223 = vld [vmem:[#allocation2 + $0x480] sm:$0xff]
    %v224 = vld [vmem:[#allocation2 + $0x488] sm:$0xff]
    %v225 = vld [vmem:[#allocation2 + $0x490] sm:$0xff]
    %v226 = vld [vmem:[#allocation2 + $0x498] sm:$0xff]
    %v227 = vld [vmem:[#allocation2 + $0x4a0] sm:$0xff]
    %v228 = vld [vmem:[#allocation2 + $0x4a8] sm:$0xff]
    %v229 = vld [vmem:[#allocation2 + $0x4b0] sm:$0xff]
    %v230 = vld [vmem:[#allocation2 + $0x4b8] sm:$0xff]
    %v231 = vld [vmem:[#allocation2 + $0x4c0] sm:$0xff]
    %v232 = vld [vmem:[#allocation2 + $0x4c8] sm:$0xff]
    %v233 = vld [vmem:[#allocation2 + $0x4d0] sm:$0xff]
    %v234 = vld [vmem:[#allocation2 + $0x4d8] sm:$0xff]
    %v235 = vld [vmem:[#allocation2 + $0x4e0] sm:$0xff]
    %v236 = vld [vmem:[#allocation2 + $0x4e8] sm:$0xff]
    %v237 = vld [vmem:[#allocation2 + $0x4f0] sm:$0xff]
    %v238 = vld [vmem:[#allocation2 + $0x4f8] sm:$0xff]
    %v239 = vld [vmem:[#allocation2 + $0x500] sm:$0xff]
    %v240 = vld [vmem:[#allocation2 + $0x508] sm:$0xff]
    %v241 = vld [vmem:[#allocation2 + $0x510] sm:$0xff]
    %v242 = vld [vmem:[#allocation2 + $0x518] sm:$0xff]
    %v243 = vld [vmem:[#allocation2 + $0x520] sm:$0xff]
    %v244 = vld [vmem:[#allocation2 + $0x528] sm:$0xff]
    %v245 = vld [vmem:[#allocation2 + $0x530] sm:$0xff]
    %v246 = vld [vmem:[#allocation2 + $0x538] sm:$0xff]
    %v247 = vld [vmem:[#allocation2 + $0x540] sm:$0xff]
    %v248 = vld [vmem:[#allocation2 + $0x548] sm:$0xff]
    %v249 = vld [vmem:[#allocation2 + $0x550] sm:$0xff]
    %v250 = vld [vmem:[#allocation2 + $0x558] sm:$0xff]
    %v251 = vld [vmem:[#allocation2 + $0x560] sm:$0xff]
    %v252 = vld [vmem:[#allocation2 + $0x568] sm:$0xff]
    %v253 = vld [vmem:[#allocation2 + $0x570] sm:$0xff]
    %v254 = vld [vmem:[#allocation2 + $0x578] sm:$0xff]
    %v255 = vld [vmem:[#allocation2 + $0x580] sm:$0xff]
    %v256 = vld [vmem:[#allocation2 + $0x588] sm:$0xff]
    %v257 = vld [vmem:[#allocation2 + $0x590] sm:$0xff]
    %v258 = vld [vmem:[#allocation2 + $0x598] sm:$0xff]
    %v259 = vld [vmem:[#allocation2 + $0x5a0] sm:$0xff]
    %v260 = vld [vmem:[#allocation2 + $0x5a8] sm:$0xff]
    %v261 = vld [vmem:[#allocation2 + $0x5b0] sm:$0xff]
    %v262 = vld [vmem:[#allocation2 + $0x5b8] sm:$0xff]
    %v263 = vld [vmem:[#allocation2 + $0x5c0] sm:$0xff]
    %v264 = vld [vmem:[#allocation2 + $0x5c8] sm:$0xff]
    %v265 = vld [vmem:[#allocation2 + $0x5d0] sm:$0xff]
    %v266 = vld [vmem:[#allocation2 + $0x5d8] sm:$0xff]
    %v267 = vld [vmem:[#allocation2 + $0x5e0] sm:$0xff]
    %v268 = vld [vmem:[#allocation2 + $0x5e8] sm:$0xff]
    %v269 = vld [vmem:[#allocation2 + $0x5f0] sm:$0xff]
    %v270 = vld [vmem:[#allocation2 + $0x5f8] sm:$0xff]
    %v271 = vld [vmem:[#allocation2 + $0x600] sm:$0xff]
    %v272 = vld [vmem:[#allocation2 + $0x608] sm:$0xff]
    %v273 = vld [vmem:[#allocation2 + $0x610] sm:$0xff]
    %v274 = vld [vmem:[#allocation2 + $0x618] sm:$0xff]
    %v275 = vld [vmem:[#allocation2 + $0x620] sm:$0xff]
    %v276 = vld [vmem:[#allocation2 + $0x628] sm:$0xff]
    %v277 = vld [vmem:[#allocation2 + $0x630] sm:$0xff]
    %v278 = vld [vmem:[#allocation2 + $0x638] sm:$0xff]
    %v279 = vld [vmem:[#allocation2 + $0x640] sm:$0xff]
    %v280 = vld [vmem:[#allocation2 + $0x648] sm:$0xff]
    %v281 = vld [vmem:[#allocation2 + $0x650] sm:$0xff]
    %v282 = vld [vmem:[#allocation2 + $0x658] sm:$0xff]
    %v283 = vld [vmem:[#allocation2 + $0x660] sm:$0xff]
    %v284 = vld [vmem:[#allocation2 + $0x668] sm:$0xff]
    %v285 = vld [vmem:[#allocation2 + $0x670] sm:$0xff]
    %v286 = vld [vmem:[#allocation2 + $0x678] sm:$0xff]
    %v287 = vld [vmem:[#allocation2 + $0x680] sm:$0xff]
    %v288 = vld [vmem:[#allocation2 + $0x688] sm:$0xff]
    %v289 = vld [vmem:[#allocation2 + $0x690] sm:$0xff]
    %v290 = vld [vmem:[#allocation2 + $0x698] sm:$0xff]
    %v291 = vld [vmem:[#allocation2 + $0x6a0] sm:$0xff]
    %v292 = vld [vmem:[#allocation2 + $0x6a8] sm:$0xff]
    %v293 = vld [vmem:[#allocation2 + $0x6b0] sm:$0xff]
    %v294 = vld [vmem:[#allocation2 + $0x6b8] sm:$0xff]
    %v295 = vld [vmem:[#allocation2 + $0x6c0] sm:$0xff]
    %v296 = vld [vmem:[#allocation2 + $0x6c8] sm:$0xff]
    %v297 = vld [vmem:[#allocation2 + $0x6d0] sm:$0xff]
    %v298 = vld [vmem:[#allocation2 + $0x6d8] sm:$0xff]
    %v299 = vld [vmem:[#allocation2 + $0x6e0] sm:$0xff]
    %v300 = vld [vmem:[#allocation2 + $0x6e8] sm:$0xff]
    %v301 = vld [vmem:[#allocation2 + $0x6f0] sm:$0xff]
    %v302 = vld [vmem:[#allocation2 + $0x6f8] sm:$0xff]
    %v303 = vld [vmem:[#allocation2 + $0x700] sm:$0xff]
    %v304 = vld [vmem:[#allocation2 + $0x708] sm:$0xff]
    %v305 = vld [vmem:[#allocation2 + $0x710] sm:$0xff]
    %v306 = vld [vmem:[#allocation2 + $0x718] sm:$0xff]
    %v307 = vld [vmem:[#allocation2 + $0x720] sm:$0xff]
    %v308 = vld [vmem:[#allocation2 + $0x728] sm:$0xff]
    %v309 = vld [vmem:[#allocation2 + $0x730] sm:$0xff]
    %v310 = vld [vmem:[#allocation2 + $0x738] sm:$0xff]
    %v311 = vld [vmem:[#allocation2 + $0x740] sm:$0xff]
    %v312 = vld [vmem:[#allocation2 + $0x748] sm:$0xff]
    %v313 = vld [vmem:[#allocation2 + $0x750] sm:$0xff]
    %v314 = vld [vmem:[#allocation2 + $0x758] sm:$0xff]
    %v315 = vld [vmem:[#allocation2 + $0x760] sm:$0xff]
    %v316 = vld [vmem:[#allocation2 + $0x768] sm:$0xff]
    %v317 = vld [vmem:[#allocation2 + $0x770] sm:$0xff]
    %v318 = vld [vmem:[#allocation2 + $0x778] sm:$0xff]
    %v319 = vld [vmem:[#allocation2 + $0x780] sm:$0xff]
    %v320 = vld [vmem:[#allocation2 + $0x788] sm:$0xff]
    %v321 = vld [vmem:[#allocation2 + $0x790] sm:$0xff]
    %v322 = vld [vmem:[#allocation2 + $0x798] sm:$0xff]
    %v323 = vld [vmem:[#allocation2 + $0x7a0] sm:$0xff]
    %v324 = vld [vmem:[#allocation2 + $0x7a8] sm:$0xff]
    %v325 = vld [vmem:[#allocation2 + $0x7b0] sm:$0xff]
    %v326 = vld [vmem:[#allocation2 + $0x7b8] sm:$0xff]
    %v327 = vld [vmem:[#allocation2 + $0x7c0] sm:$0xff]
    %v328 = vld [vmem:[#allocation2 + $0x7c8] sm:$0xff]
    %v329 = vld [vmem:[#allocation2 + $0x7d0] sm:$0xff]
    %v330 = vld [vmem:[#allocation2 + $0x7d8] sm:$0xff]
    %v331 = vld [vmem:[#allocation2 + $0x7e0] sm:$0xff]
    %v332 = vld [vmem:[#allocation2 + $0x7e8] sm:$0xff]
    %v333 = vld [vmem:[#allocation2 + $0x7f0] sm:$0xff]
    %v334 = vld [vmem:[#allocation2 + $0x7f8] sm:$0xff]
    %v335 = vld [vmem:[#allocation2 + $0x800] sm:$0xff]
    %v336 = vld [vmem:[#allocation2 + $0x808] sm:$0xff]
    %v337 = vld [vmem:[#allocation2 + $0x810] sm:$0xff]
    %v338 = vld [vmem:[#allocation2 + $0x818] sm:$0xff]
    %v339 = vld [vmem:[#allocation2 + $0x820] sm:$0xff]
    %v340 = vld [vmem:[#allocation2 + $0x828] sm:$0xff]
    %v341 = vld [vmem:[#allocation2 + $0x830] sm:$0xff]
    %v342 = vld [vmem:[#allocation2 + $0x838] sm:$0xff]
    %v343 = vld [vmem:[#allocation2 + $0x840] sm:$0xff]
    %v344 = vld [vmem:[#allocation2 + $0x848] sm:$0xff]
    %v345 = vld [vmem:[#allocation2 + $0x850] sm:$0xff]
    %v346 = vld [vmem:[#allocation2 + $0x858] sm:$0xff]
    %v347 = vld [vmem:[#allocation2 + $0x860] sm:$0xff]
    %v348 = vld [vmem:[#allocation2 + $0x868] sm:$0xff]
    %v349 = vld [vmem:[#allocation2 + $0x870] sm:$0xff]
    %v350 = vld [vmem:[#allocation2 + $0x878] sm:$0xff]
    %v351 = vld [vmem:[#allocation2 + $0x880] sm:$0xff]
    %v352 = vld [vmem:[#allocation2 + $0x888] sm:$0xff]
    %v353 = vld [vmem:[#allocation2 + $0x890] sm:$0xff]
    %v354 = vld [vmem:[#allocation2 + $0x898] sm:$0xff]
    %v355 = vld [vmem:[#allocation2 + $0x8a0] sm:$0xff]
    %v356 = vld [vmem:[#allocation2 + $0x8a8] sm:$0xff]
    %v357 = vld [vmem:[#allocation2 + $0x8b0] sm:$0xff]
    %v358 = vld [vmem:[#allocation2 + $0x8b8] sm:$0xff]
    %v359 = vld [vmem:[#allocation2 + $0x8c0] sm:$0xff]
    %v360 = vld [vmem:[#allocation2 + $0x8c8] sm:$0xff]
    %v361 = vld [vmem:[#allocation2 + $0x8d0] sm:$0xff]
    %v362 = vld [vmem:[#allocation2 + $0x8d8] sm:$0xff]
    %v363 = vld [vmem:[#allocation2 + $0x8e0] sm:$0xff]
    %v364 = vld [vmem:[#allocation2 + $0x8e8] sm:$0xff]
    %v365 = vld [vmem:[#allocation2 + $0x8f0] sm:$0xff]
    %v366 = vld [vmem:[#allocation2 + $0x8f8] sm:$0xff]
    %v367 = vld [vmem:[#allocation2 + $0x900] sm:$0xff]
    %v368 = vld [vmem:[#allocation2 + $0x908] sm:$0xff]
    %v369 = vld [vmem:[#allocation2 + $0x910] sm:$0xff]
    %v370 = vld [vmem:[#allocation2 + $0x918] sm:$0xff]
    %v371 = vld [vmem:[#allocation2 + $0x920] sm:$0xff]
    %v372 = vld [vmem:[#allocation2 + $0x928] sm:$0xff]
    %v373 = vld [vmem:[#allocation2 + $0x930] sm:$0xff]
    %v374 = vld [vmem:[#allocation2 + $0x938] sm:$0xff]
    %v375 = vld [vmem:[#allocation2 + $0x940] sm:$0xff]
    %v376 = vld [vmem:[#allocation2 + $0x948] sm:$0xff]
    %v377 = vld [vmem:[#allocation2 + $0x950] sm:$0xff]
    %v378 = vld [vmem:[#allocation2 + $0x958] sm:$0xff]
    %v379 = vld [vmem:[#allocation2 + $0x960] sm:$0xff]
    %v380 = vld [vmem:[#allocation2 + $0x968] sm:$0xff]
    %v381 = vld [vmem:[#allocation2 + $0x970] sm:$0xff]
    %v382 = vld [vmem:[#allocation2 + $0x978] sm:$0xff]
    %v383 = vld [vmem:[#allocation2 + $0x980] sm:$0xff]
    %v384 = vld [vmem:[#allocation2 + $0x988] sm:$0xff]
    %v385 = vld [vmem:[#allocation2 + $0x990] sm:$0xff]
    %v386 = vld [vmem:[#allocation2 + $0x998] sm:$0xff]
    %v387 = vld [vmem:[#allocation2 + $0x9a0] sm:$0xff]
    %v388 = vld [vmem:[#allocation2 + $0x9a8] sm:$0xff]
    %v389 = vld [vmem:[#allocation2 + $0x9b0] sm:$0xff]
    %v390 = vld [vmem:[#allocation2 + $0x9b8] sm:$0xff]
    %v391 = vld [vmem:[#allocation2 + $0x9c0] sm:$0xff]
    %v392 = vld [vmem:[#allocation2 + $0x9c8] sm:$0xff]
    %v393 = vld [vmem:[#allocation2 + $0x9d0] sm:$0xff]
    %v394 = vld [vmem:[#allocation2 + $0x9d8] sm:$0xff]
    %v395 = vld [vmem:[#allocation2 + $0x9e0] sm:$0xff]
    %v396 = vld [vmem:[#allocation2 + $0x9e8] sm:$0xff]
    %v397 = vld [vmem:[#allocation2 + $0x9f0] sm:$0xff]
    %v398 = vld [vmem:[#allocation2 + $0x9f8] sm:$0xff]
    %v399 = vld [vmem:[#allocation2 + $0xa00] sm:$0xff]
    %v400 = vld [vmem:[#allocation2 + $0xa08] sm:$0xff]
    %v401 = vld [vmem:[#allocation2 + $0xa10] sm:$0xff]
    %v402 = vld [vmem:[#allocation2 + $0xa18] sm:$0xff]
    %v403 = vld [vmem:[#allocation2 + $0xa20] sm:$0xff]
    %v404 = vld [vmem:[#allocation2 + $0xa28] sm:$0xff]
    %v405 = vld [vmem:[#allocation2 + $0xa30] sm:$0xff]
    %v406 = vld [vmem:[#allocation2 + $0xa38] sm:$0xff]
    %v407 = vld [vmem:[#allocation2 + $0xa40] sm:$0xff]
    %v408 = vld [vmem:[#allocation2 + $0xa48] sm:$0xff]
    %v409 = vld [vmem:[#allocation2 + $0xa50] sm:$0xff]
    %v410 = vld [vmem:[#allocation2 + $0xa58] sm:$0xff]
    %v411 = vld [vmem:[#allocation2 + $0xa60] sm:$0xff]
    %v412 = vld [vmem:[#allocation2 + $0xa68] sm:$0xff]
    %v413 = vld [vmem:[#allocation2 + $0xa70] sm:$0xff]
    %v414 = vld [vmem:[#allocation2 + $0xa78] sm:$0xff]
    %v415 = vld [vmem:[#allocation2 + $0xa80] sm:$0xff]
    %v416 = vld [vmem:[#allocation2 + $0xa88] sm:$0xff]
    %v417 = vld [vmem:[#allocation2 + $0xa90] sm:$0xff]
    %v418 = vld [vmem:[#allocation2 + $0xa98] sm:$0xff]
    %v419 = vld [vmem:[#allocation2 + $0xaa0] sm:$0xff]
    %v420 = vld [vmem:[#allocation2 + $0xaa8] sm:$0xff]
    %v421 = vld [vmem:[#allocation2 + $0xab0] sm:$0xff]
    %v422 = vld [vmem:[#allocation2 + $0xab8] sm:$0xff]
    %v423 = vld [vmem:[#allocation2 + $0xac0] sm:$0xff]
    %v424 = vld [vmem:[#allocation2 + $0xac8] sm:$0xff]
    %v425 = vld [vmem:[#allocation2 + $0xad0] sm:$0xff]
    %v426 = vld [vmem:[#allocation2 + $0xad8] sm:$0xff]
    %v427 = vld [vmem:[#allocation2 + $0xae0] sm:$0xff]
    %v428 = vld [vmem:[#allocation2 + $0xae8] sm:$0xff]
    %v429 = vld [vmem:[#allocation2 + $0xaf0] sm:$0xff]
    %v430 = vld [vmem:[#allocation2 + $0xaf8] sm:$0xff]
    %v431 = vld [vmem:[#allocation2 + $0xb00] sm:$0xff]
    %v432 = vld [vmem:[#allocation2 + $0xb08] sm:$0xff]
    %v433 = vld [vmem:[#allocation2 + $0xb10] sm:$0xff]
    %v434 = vld [vmem:[#allocation2 + $0xb18] sm:$0xff]
    %v435 = vld [vmem:[#allocation2 + $0xb20] sm:$0xff]
    %v436 = vld [vmem:[#allocation2 + $0xb28] sm:$0xff]
    %v437 = vld [vmem:[#allocation2 + $0xb30] sm:$0xff]
    %v438 = vld [vmem:[#allocation2 + $0xb38] sm:$0xff]
    %v439 = vld [vmem:[#allocation2 + $0xb40] sm:$0xff]
    %v440 = vld [vmem:[#allocation2 + $0xb48] sm:$0xff]
    %v441 = vld [vmem:[#allocation2 + $0xb50] sm:$0xff]
    %v442 = vld [vmem:[#allocation2 + $0xb58] sm:$0xff]
    %v443 = vld [vmem:[#allocation2 + $0xb60] sm:$0xff]
    %v444 = vld [vmem:[#allocation2 + $0xb68] sm:$0xff]
    %v445 = vld [vmem:[#allocation2 + $0xb70] sm:$0xff]
    %v446 = vld [vmem:[#allocation2 + $0xb78] sm:$0xff]
    %v447 = vld [vmem:[#allocation2 + $0xb80] sm:$0xff]
    %v448 = vld [vmem:[#allocation2 + $0xb88] sm:$0xff]
    %v449 = vld [vmem:[#allocation2 + $0xb90] sm:$0xff]
    %v450 = vld [vmem:[#allocation2 + $0xb98] sm:$0xff]
    %v451 = vld [vmem:[#allocation2 + $0xba0] sm:$0xff]
    %v452 = vld [vmem:[#allocation2 + $0xba8] sm:$0xff]
    %v453 = vld [vmem:[#allocation2 + $0xbb0] sm:$0xff]
    %v454 = vld [vmem:[#allocation2 + $0xbb8] sm:$0xff]
    %v455 = vld [vmem:[#allocation2 + $0xbc0] sm:$0xff]
    %v456 = vld [vmem:[#allocation2 + $0xbc8] sm:$0xff]
    %v457 = vld [vmem:[#allocation2 + $0xbd0] sm:$0xff]
    %v458 = vld [vmem:[#allocation2 + $0xbd8] sm:$0xff]
    %v459 = vld [vmem:[#allocation2 + $0xbe0] sm:$0xff]
    %v460 = vld [vmem:[#allocation2 + $0xbe8] sm:$0xff]
    %v461 = vld [vmem:[#allocation2 + $0xbf0] sm:$0xff]
    %v462 = vld [vmem:[#allocation2 + $0xbf8] sm:$0xff]
    %v463 = vld [vmem:[#allocation2 + $0xc00] sm:$0xff]
    %v464 = vld [vmem:[#allocation2 + $0xc08] sm:$0xff]
    %v465 = vld [vmem:[#allocation2 + $0xc10] sm:$0xff]
    %v466 = vld [vmem:[#allocation2 + $0xc18] sm:$0xff]
    %v467 = vld [vmem:[#allocation2 + $0xc20] sm:$0xff]
    %v468 = vld [vmem:[#allocation2 + $0xc28] sm:$0xff]
    %v469 = vld [vmem:[#allocation2 + $0xc30] sm:$0xff]
    %v470 = vld [vmem:[#allocation2 + $0xc38] sm:$0xff]
    %v471 = vld [vmem:[#allocation2 + $0xc40] sm:$0xff]
    %v472 = vld [vmem:[#allocation2 + $0xc48] sm:$0xff]
    %v473 = vld [vmem:[#allocation2 + $0xc50] sm:$0xff]
    %v474 = vld [vmem:[#allocation2 + $0xc58] sm:$0xff]
    %v475 = vld [vmem:[#allocation2 + $0xc60] sm:$0xff]
    %v476 = vld [vmem:[#allocation2 + $0xc68] sm:$0xff]
    %v477 = vld [vmem:[#allocation2 + $0xc70] sm:$0xff]
    %v478 = vld [vmem:[#allocation2 + $0xc78] sm:$0xff]
    %v479 = vld [vmem:[#allocation2 + $0xc80] sm:$0xff]
    %v480 = vld [vmem:[#allocation2 + $0xc88] sm:$0xff]
    %v481 = vld [vmem:[#allocation2 + $0xc90] sm:$0xff]
    %v482 = vld [vmem:[#allocation2 + $0xc98] sm:$0xff]
    %v483 = vld [vmem:[#allocation2 + $0xca0] sm:$0xff]
    %v484 = vld [vmem:[#allocation2 + $0xca8] sm:$0xff]
    %v485 = vld [vmem:[#allocation2 + $0xcb0] sm:$0xff]
    %v486 = vld [vmem:[#allocation2 + $0xcb8] sm:$0xff]
    %v487 = vld [vmem:[#allocation2 + $0xcc0] sm:$0xff]
    %v488 = vld [vmem:[#allocation2 + $0xcc8] sm:$0xff]
    %v489 = vld [vmem:[#allocation2 + $0xcd0] sm:$0xff]
    %v490 = vld [vmem:[#allocation2 + $0xcd8] sm:$0xff]
    %v491 = vld [vmem:[#allocation2 + $0xce0] sm:$0xff]
    %v492 = vld [vmem:[#allocation2 + $0xce8] sm:$0xff]
    %v493 = vld [vmem:[#allocation2 + $0xcf0] sm:$0xff]
    %v494 = vld [vmem:[#allocation2 + $0xcf8] sm:$0xff]
    %v495 = vld [vmem:[#allocation2 + $0xd00] sm:$0xff]
    %v496 = vld [vmem:[#allocation2 + $0xd08] sm:$0xff]
    %v497 = vld [vmem:[#allocation2 + $0xd10] sm:$0xff]
    %v498 = vld [vmem:[#allocation2 + $0xd18] sm:$0xff]
    %v499 = vld [vmem:[#allocation2 + $0xd20] sm:$0xff]
    %v500 = vld [vmem:[#allocation2 + $0xd28] sm:$0xff]
    %v501 = vld [vmem:[#allocation2 + $0xd30] sm:$0xff]
    %v502 = vld [vmem:[#allocation2 + $0xd38] sm:$0xff]
    %v503 = vld [vmem:[#allocation2 + $0xd40] sm:$0xff]
    %v504 = vld [vmem:[#allocation2 + $0xd48] sm:$0xff]
    %v505 = vld [vmem:[#allocation2 + $0xd50] sm:$0xff]
    %v506 = vld [vmem:[#allocation2 + $0xd58] sm:$0xff]
    %v507 = vld [vmem:[#allocation2 + $0xd60] sm:$0xff]
    %v508 = vld [vmem:[#allocation2 + $0xd68] sm:$0xff]
    %v509 = vld [vmem:[#allocation2 + $0xd70] sm:$0xff]
    %v510 = vld [vmem:[#allocation2 + $0xd78] sm:$0xff]
    %v511 = vld [vmem:[#allocation2 + $0xd80] sm:$0xff]
    %v512 = vld [vmem:[#allocation2 + $0xd88] sm:$0xff]
    %v513 = vld [vmem:[#allocation2 + $0xd90] sm:$0xff]
    %v514 = vld [vmem:[#allocation2 + $0xd98] sm:$0xff]
    %v515 = vld [vmem:[#allocation2 + $0xda0] sm:$0xff]
    %v516 = vld [vmem:[#allocation2 + $0xda8] sm:$0xff]
    %v517 = vld [vmem:[#allocation2 + $0xdb0] sm:$0xff]
    %v518 = vld [vmem:[#allocation2 + $0xdb8] sm:$0xff]
    %v519 = vld [vmem:[#allocation2 + $0xdc0] sm:$0xff]
    %v520 = vld [vmem:[#allocation2 + $0xdc8] sm:$0xff]
    %v521 = vld [vmem:[#allocation2 + $0xdd0] sm:$0xff]
    %v522 = vld [vmem:[#allocation2 + $0xdd8] sm:$0xff]
    %v523 = vld [vmem:[#allocation2 + $0xde0] sm:$0xff]
    %v524 = vld [vmem:[#allocation2 + $0xde8] sm:$0xff]
    %v525 = vld [vmem:[#allocation2 + $0xdf0] sm:$0xff]
    %v526 = vld [vmem:[#allocation2 + $0xdf8] sm:$0xff]
    %v527 = vld [vmem:[#allocation2 + $0xe00] sm:$0xff]
    %v528 = vld [vmem:[#allocation2 + $0xe08] sm:$0xff]
    %v529 = vld [vmem:[#allocation2 + $0xe10] sm:$0xff]
    %v530 = vld [vmem:[#allocation2 + $0xe18] sm:$0xff]
    %v531 = vld [vmem:[#allocation2 + $0xe20] sm:$0xff]
    %v532 = vld [vmem:[#allocation2 + $0xe28] sm:$0xff]
    %v533 = vld [vmem:[#allocation2 + $0xe30] sm:$0xff]
    %v534 = vld [vmem:[#allocation2 + $0xe38] sm:$0xff]
    %v535 = vld [vmem:[#allocation2 + $0xe40] sm:$0xff]
    %v536 = vld [vmem:[#allocation2 + $0xe48] sm:$0xff]
    %v537 = vld [vmem:[#allocation2 + $0xe50] sm:$0xff]
    %v538 = vld [vmem:[#allocation2 + $0xe58] sm:$0xff]
    %v539 = vld [vmem:[#allocation2 + $0xe60] sm:$0xff]
    %v540 = vld [vmem:[#allocation2 + $0xe68] sm:$0xff]
    %v541 = vld [vmem:[#allocation2 + $0xe70] sm:$0xff]
    %v542 = vld [vmem:[#allocation2 + $0xe78] sm:$0xff]
    %v543 = vld [vmem:[#allocation2 + $0xe80] sm:$0xff]
    %v544 = vld [vmem:[#allocation2 + $0xe88] sm:$0xff]
    %v545 = vld [vmem:[#allocation2 + $0xe90] sm:$0xff]
    %v546 = vld [vmem:[#allocation2 + $0xe98] sm:$0xff]
    %v547 = vld [vmem:[#allocation2 + $0xea0] sm:$0xff]
    %v548 = vld [vmem:[#allocation2 + $0xea8] sm:$0xff]
    %v549 = vld [vmem:[#allocation2 + $0xeb0] sm:$0xff]
    %v550 = vld [vmem:[#allocation2 + $0xeb8] sm:$0xff]
    %v551 = vld [vmem:[#allocation2 + $0xec0] sm:$0xff]
    %v552 = vld [vmem:[#allocation2 + $0xec8] sm:$0xff]
    %v553 = vld [vmem:[#allocation2 + $0xed0] sm:$0xff]
    %v554 = vld [vmem:[#allocation2 + $0xed8] sm:$0xff]
    %v555 = vld [vmem:[#allocation2 + $0xee0] sm:$0xff]
    %v556 = vld [vmem:[#allocation2 + $0xee8] sm:$0xff]
    %v557 = vld [vmem:[#allocation2 + $0xef0] sm:$0xff]
    %v558 = vld [vmem:[#allocation2 + $0xef8] sm:$0xff]
    %v559 = vld [vmem:[#allocation2 + $0xf00] sm:$0xff]
    %v560 = vld [vmem:[#allocation2 + $0xf08] sm:$0xff]
    %v561 = vld [vmem:[#allocation2 + $0xf10] sm:$0xff]
    %v562 = vld [vmem:[#allocation2 + $0xf18] sm:$0xff]
    %v563 = vld [vmem:[#allocation2 + $0xf20] sm:$0xff]
    %v564 = vld [vmem:[#allocation2 + $0xf28] sm:$0xff]
    %v565 = vld [vmem:[#allocation2 + $0xf30] sm:$0xff]
    %v566 = vld [vmem:[#allocation2 + $0xf38] sm:$0xff]
    %v567 = vld [vmem:[#allocation2 + $0xf40] sm:$0xff]
    %v568 = vld [vmem:[#allocation2 + $0xf48] sm:$0xff]
    %v569 = vld [vmem:[#allocation2 + $0xf50] sm:$0xff]
    %v570 = vld [vmem:[#allocation2 + $0xf58] sm:$0xff]
    %v571 = vld [vmem:[#allocation2 + $0xf60] sm:$0xff]
    %v572 = vld [vmem:[#allocation2 + $0xf68] sm:$0xff]
    %v573 = vld [vmem:[#allocation2 + $0xf70] sm:$0xff]
    %v574 = vld [vmem:[#allocation2 + $0xf78] sm:$0xff]
    %v575 = vld [vmem:[#allocation2 + $0xf80] sm:$0xff]
    %v576 = vld [vmem:[#allocation2 + $0xf88] sm:$0xff]
    %v577 = vld [vmem:[#allocation2 + $0xf90] sm:$0xff]
    %v578 = vld [vmem:[#allocation2 + $0xf98] sm:$0xff]
    %v579 = vld [vmem:[#allocation2 + $0xfa0] sm:$0xff]
    %v580 = vld [vmem:[#allocation2 + $0xfa8] sm:$0xff]
    %v581 = vld [vmem:[#allocation2 + $0xfb0] sm:$0xff]
    %v582 = vld [vmem:[#allocation2 + $0xfb8] sm:$0xff]
    %v583 = vld [vmem:[#allocation2 + $0xfc0] sm:$0xff]
    %v584 = vld [vmem:[#allocation2 + $0xfc8] sm:$0xff]
    %v585 = vld [vmem:[#allocation2 + $0xfd0] sm:$0xff]
    %v586 = vld [vmem:[#allocation2 + $0xfd8] sm:$0xff]
    %v587 = vld [vmem:[#allocation2 + $0xfe0] sm:$0xff]
    %v588 = vld [vmem:[#allocation2 + $0xfe8] sm:$0xff]
    %v589 = vld [vmem:[#allocation2 + $0xff0] sm:$0xff]
    %v590 = vld [vmem:[#allocation2 + $0xff8] sm:$0xff]
    %v591 = vld [vmem:[#allocation2 + $0x1000] sm:$0xff]
    %v592 = vld [vmem:[#allocation2 + $0x1008] sm:$0xff]
    %v593 = vld [vmem:[#allocation2 + $0x1010] sm:$0xff]
    %v594 = vld [vmem:[#allocation2 + $0x1018] sm:$0xff]
    %v595 = vld [vmem:[#allocation2 + $0x1020] sm:$0xff]
    %v596 = vld [vmem:[#allocation2 + $0x1028] sm:$0xff]
    %v597 = vld [vmem:[#allocation2 + $0x1030] sm:$0xff]
    %v598 = vld [vmem:[#allocation2 + $0x1038] sm:$0xff]
    %v599 = vld [vmem:[#allocation2 + $0x1040] sm:$0xff]
    %v600 = vld [vmem:[#allocation2 + $0x1048] sm:$0xff]
    %v601 = vld [vmem:[#allocation2 + $0x1050] sm:$0xff]
    %v602 = vld [vmem:[#allocation2 + $0x1058] sm:$0xff]
    %v603 = vld [vmem:[#allocation2 + $0x1060] sm:$0xff]
    %v604 = vld [vmem:[#allocation2 + $0x1068] sm:$0xff]
    %v605 = vld [vmem:[#allocation2 + $0x1070] sm:$0xff]
    %v606 = vld [vmem:[#allocation2 + $0x1078] sm:$0xff]
    %v607 = vld [vmem:[#allocation2 + $0x1080] sm:$0xff]
    %v608 = vld [vmem:[#allocation2 + $0x1088] sm:$0xff]
    %v609 = vld [vmem:[#allocation2 + $0x1090] sm:$0xff]
    %v610 = vld [vmem:[#allocation2 + $0x1098] sm:$0xff]
    %v611 = vld [vmem:[#allocation2 + $0x10a0] sm:$0xff]
    %v612 = vld [vmem:[#allocation2 + $0x10a8] sm:$0xff]
    %v613 = vld [vmem:[#allocation2 + $0x10b0] sm:$0xff]
    %v614 = vld [vmem:[#allocation2 + $0x10b8] sm:$0xff]
    %v615 = vld [vmem:[#allocation2 + $0x10c0] sm:$0xff]
    %v616 = vld [vmem:[#allocation2 + $0x10c8] sm:$0xff]
    %v617 = vld [vmem:[#allocation2 + $0x10d0] sm:$0xff]
    %v618 = vld [vmem:[#allocation2 + $0x10d8] sm:$0xff]
    %v619 = vld [vmem:[#allocation2 + $0x10e0] sm:$0xff]
    %v620 = vld [vmem:[#allocation2 + $0x10e8] sm:$0xff]
    %v621 = vld [vmem:[#allocation2 + $0x10f0] sm:$0xff]
    %v622 = vld [vmem:[#allocation2 + $0x10f8] sm:$0xff]
    %v623 = vld [vmem:[#allocation2 + $0x1100] sm:$0xff]
    %v624 = vld [vmem:[#allocation2 + $0x1108] sm:$0xff]
    %v625 = vld [vmem:[#allocation2 + $0x1110] sm:$0xff]
    %v626 = vld [vmem:[#allocation2 + $0x1118] sm:$0xff]
    %v627 = vld [vmem:[#allocation2 + $0x1120] sm:$0xff]
    %v628 = vld [vmem:[#allocation2 + $0x1128] sm:$0xff]
    %v629 = vld [vmem:[#allocation2 + $0x1130] sm:$0xff]
    %v630 = vld [vmem:[#allocation2 + $0x1138] sm:$0xff]
    %v631 = vld [vmem:[#allocation2 + $0x1140] sm:$0xff]
    %v632 = vld [vmem:[#allocation2 + $0x1148] sm:$0xff]
    %v633 = vld [vmem:[#allocation2 + $0x1150] sm:$0xff]
    %v634 = vld [vmem:[#allocation2 + $0x1158] sm:$0xff]
    %v635 = vld [vmem:[#allocation2 + $0x1160] sm:$0xff]
    %v636 = vld [vmem:[#allocation2 + $0x1168] sm:$0xff]
    %v637 = vld [vmem:[#allocation2 + $0x1170] sm:$0xff]
    %v638 = vld [vmem:[#allocation2 + $0x1178] sm:$0xff]
    %v639 = vld [vmem:[#allocation2 + $0x1180] sm:$0xff]
    %v640 = vld [vmem:[#allocation2 + $0x1188] sm:$0xff]
    %v641 = vld [vmem:[#allocation2 + $0x1190] sm:$0xff]
    %v642 = vld [vmem:[#allocation2 + $0x1198] sm:$0xff]
    %v643 = vld [vmem:[#allocation2 + $0x11a0] sm:$0xff]
    %v644 = vld [vmem:[#allocation2 + $0x11a8] sm:$0xff]
    %v645 = vld [vmem:[#allocation2 + $0x11b0] sm:$0xff]
    %v646 = vld [vmem:[#allocation2 + $0x11b8] sm:$0xff]
    %v647 = vld [vmem:[#allocation2 + $0x11c0] sm:$0xff]
    %v648 = vld [vmem:[#allocation2 + $0x11c8] sm:$0xff]
    %v649 = vld [vmem:[#allocation2 + $0x11d0] sm:$0xff]
    %v650 = vld [vmem:[#allocation2 + $0x11d8] sm:$0xff]
    %v651 = vld [vmem:[#allocation2 + $0x11e0] sm:$0xff]
    %v652 = vld [vmem:[#allocation2 + $0x11e8] sm:$0xff]
    %v653 = vld [vmem:[#allocation2 + $0x11f0] sm:$0xff]
    %v654 = vld [vmem:[#allocation2 + $0x11f8] sm:$0xff]
    %v655 = vld [vmem:[#allocation2 + $0x1200] sm:$0xff]
    %v656 = vld [vmem:[#allocation2 + $0x1208] sm:$0xff]
    %v657 = vld [vmem:[#allocation2 + $0x1210] sm:$0xff]
    %v658 = vld [vmem:[#allocation2 + $0x1218] sm:$0xff]
    %v659 = vld [vmem:[#allocation2 + $0x1220] sm:$0xff]
    %v660 = vld [vmem:[#allocation2 + $0x1228] sm:$0xff]
    %v661 = vld [vmem:[#allocation2 + $0x1230] sm:$0xff]
    %v662 = vld [vmem:[#allocation2 + $0x1238] sm:$0xff]
    %v663 = vld [vmem:[#allocation2 + $0x1240] sm:$0xff]
    %v664 = vld [vmem:[#allocation2 + $0x1248] sm:$0xff]
    %v665 = vld [vmem:[#allocation2 + $0x1250] sm:$0xff]
    %v666 = vld [vmem:[#allocation2 + $0x1258] sm:$0xff]
    %v667 = vld [vmem:[#allocation2 + $0x1260] sm:$0xff]
    %v668 = vld [vmem:[#allocation2 + $0x1268] sm:$0xff]
    %v669 = vld [vmem:[#allocation2 + $0x1270] sm:$0xff]
    %v670 = vld [vmem:[#allocation2 + $0x1278] sm:$0xff]
    %v671 = vld [vmem:[#allocation2 + $0x1280] sm:$0xff]
    %v672 = vld [vmem:[#allocation2 + $0x1288] sm:$0xff]
    %v673 = vld [vmem:[#allocation2 + $0x1290] sm:$0xff]
    %v674 = vld [vmem:[#allocation2 + $0x1298] sm:$0xff]
    %v675 = vld [vmem:[#allocation2 + $0x12a0] sm:$0xff]
    %v676 = vld [vmem:[#allocation2 + $0x12a8] sm:$0xff]
    %v677 = vld [vmem:[#allocation2 + $0x12b0] sm:$0xff]
    %v678 = vld [vmem:[#allocation2 + $0x12b8] sm:$0xff]
    %v679 = vld [vmem:[#allocation2 + $0x12c0] sm:$0xff]
    %v680 = vld [vmem:[#allocation2 + $0x12c8] sm:$0xff]
    %v681 = vld [vmem:[#allocation2 + $0x12d0] sm:$0xff]
    %v682 = vld [vmem:[#allocation2 + $0x12d8] sm:$0xff]
    %v683 = vld [vmem:[#allocation2 + $0x12e0] sm:$0xff]
    %v684 = vld [vmem:[#allocation2 + $0x12e8] sm:$0xff]
    %v685 = vld [vmem:[#allocation2 + $0x12f0] sm:$0xff]
    %v686 = vld [vmem:[#allocation2 + $0x12f8] sm:$0xff]
    %v687 = vld [vmem:[#allocation2 + $0x1300] sm:$0xff]
    %v688 = vld [vmem:[#allocation2 + $0x1308] sm:$0xff]
    %v689 = vld [vmem:[#allocation2 + $0x1310] sm:$0xff]
    %v690 = vld [vmem:[#allocation2 + $0x1318] sm:$0xff]
    %v691 = vld [vmem:[#allocation2 + $0x1320] sm:$0xff]
    %v692 = vld [vmem:[#allocation2 + $0x1328] sm:$0xff]
    %v693 = vld [vmem:[#allocation2 + $0x1330] sm:$0xff]
    %v694 = vld [vmem:[#allocation2 + $0x1338] sm:$0xff]
    %v695 = vld [vmem:[#allocation2 + $0x1340] sm:$0xff]
    %v696 = vld [vmem:[#allocation2 + $0x1348] sm:$0xff]
    %v697 = vld [vmem:[#allocation2 + $0x1350] sm:$0xff]
    %v698 = vld [vmem:[#allocation2 + $0x1358] sm:$0xff]
    %v699 = vld [vmem:[#allocation2 + $0x1360] sm:$0xff]
    %v700 = vld [vmem:[#allocation2 + $0x1368] sm:$0xff]
    %v701 = vld [vmem:[#allocation2 + $0x1370] sm:$0xff]
    %v702 = vld [vmem:[#allocation2 + $0x1378] sm:$0xff]
    %v703 = vld [vmem:[#allocation2 + $0x1380] sm:$0xff]
    %v704 = vld [vmem:[#allocation2 + $0x1388] sm:$0xff]
    %v705 = vld [vmem:[#allocation2 + $0x1390] sm:$0xff]
    %v706 = vld [vmem:[#allocation2 + $0x1398] sm:$0xff]
    %v707 = vld [vmem:[#allocation2 + $0x13a0] sm:$0xff]
    %v708 = vld [vmem:[#allocation2 + $0x13a8] sm:$0xff]
    %v709 = vld [vmem:[#allocation2 + $0x13b0] sm:$0xff]
    %v710 = vld [vmem:[#allocation2 + $0x13b8] sm:$0xff]
    %v711 = vld [vmem:[#allocation2 + $0x13c0] sm:$0xff]
    %v712 = vld [vmem:[#allocation2 + $0x13c8] sm:$0xff]
    %v713 = vld [vmem:[#allocation2 + $0x13d0] sm:$0xff]
    %v714 = vld [vmem:[#allocation2 + $0x13d8] sm:$0xff]
    %v715 = vld [vmem:[#allocation2 + $0x13e0] sm:$0xff]
    %v716 = vld [vmem:[#allocation2 + $0x13e8] sm:$0xff]
    %v717 = vld [vmem:[#allocation2 + $0x13f0] sm:$0xff]
    %v718 = vld [vmem:[#allocation2 + $0x13f8] sm:$0xff]
    %v719 = vld [vmem:[#allocation5] sm:$0xff]
    %v720 = vld [vmem:[#allocation5 + $0x8] sm:$0x3]
    %v723 = vlaneseq
    %v724 = vshrl.u32 %v723, 7
    %v725 = vsub.s32 0, %v724
    %v726 = vrot.slane %v719, %v725
    %v727 = vlaneseq
    %v728 = vshrl.u32 %v727, 7
    %v729 = vsub.s32 1, %v728
    %v730 = vrot.slane %v719, %v729
    %v731 = vlaneseq
    %v732 = vshrl.u32 %v731, 7
    %v733 = vsub.s32 2, %v732
    %v734 = vrot.slane %v719, %v733
    %v735 = vlaneseq
    %v736 = vshrl.u32 %v735, 7
    %v737 = vsub.s32 3, %v736
    %v738 = vrot.slane %v719, %v737
    %v739 = vlaneseq
    %v740 = vshrl.u32 %v739, 7
    %v741 = vsub.s32 4, %v740
    %v742 = vrot.slane %v719, %v741
    %v743 = vlaneseq
    %v744 = vshrl.u32 %v743, 7
    %v745 = vsub.s32 5, %v744
    %v746 = vrot.slane %v719, %v745
    %v747 = vlaneseq
    %v748 = vshrl.u32 %v747, 7
    %v749 = vsub.s32 6, %v748
    %v750 = vrot.slane %v719, %v749
    %v751 = vlaneseq
    %v752 = vshrl.u32 %v751, 7
    %v753 = vsub.s32 7, %v752
    %v754 = vrot.slane %v719, %v753
    %v755 = vlaneseq
    %v756 = vshrl.u32 %v755, 7
    %v757 = vsub.s32 0, %v756
    %v758 = vrot.slane %v720, %v757
    %v759 = vlaneseq
    %v760 = vshrl.u32 %v759, 7
    %v761 = vsub.s32 1, %v760
    %v762 = vrot.slane %v720, %v761
    %v777 = vunpack.c.l.b16 %v75
    %v778 = vunpack.c.h.b16 %v75
    %v779 = vunpack.c.l.b16 %v76
    %v780 = vunpack.c.h.b16 %v76
    %v781 = vunpack.c.l.b16 %v77
    %v782 = vunpack.c.h.b16 %v77
    %v783 = vunpack.c.l.b16 %v78
    %v784 = vunpack.c.h.b16 %v78
    %v785 = vpack.c.b16 %v777, %v777
    %v786 = vpack.c.b16 %v778, %v778
    %v787 = vpack.c.b16 %v779, %v779
    %v788 = vpack.c.b16 %v780, %v780
    %v789 = vpack.c.b16 %v781, %v781
    %v790 = vpack.c.b16 %v782, %v782
    %v791 = vpack.c.b16 %v783, %v783
    %v792 = vpack.c.b16 %v784, %v784
    %v1441 = vunpack.c.l.b16 %v79
    %v1442 = vunpack.c.h.b16 %v79
    %v1443 = vunpack.c.l.b16 %v80
    %v1444 = vunpack.c.h.b16 %v80
    %v1445 = vunpack.c.l.b16 %v81
    %v1446 = vunpack.c.h.b16 %v81
    %v1447 = vunpack.c.l.b16 %v82
    %v1448 = vunpack.c.h.b16 %v82
    %v1449 = vunpack.c.l.b16 %v83
    %v1450 = vunpack.c.h.b16 %v83
    %v1451 = vunpack.c.l.b16 %v84
    %v1452 = vunpack.c.h.b16 %v84
    %v1453 = vunpack.c.l.b16 %v85
    %v1454 = vunpack.c.h.b16 %v85
    %v1455 = vunpack.c.l.b16 %v86
    %v1456 = vunpack.c.h.b16 %v86
    %v1457 = vunpack.c.l.b16 %v87
    %v1458 = vunpack.c.h.b16 %v87
    %v1459 = vunpack.c.l.b16 %v88
    %v1460 = vunpack.c.h.b16 %v88
    %v1461 = vunpack.c.l.b16 %v89
    %v1462 = vunpack.c.h.b16 %v89
    %v1463 = vunpack.c.l.b16 %v90
    %v1464 = vunpack.c.h.b16 %v90
    %v1465 = vunpack.c.l.b16 %v91
    %v1466 = vunpack.c.h.b16 %v91
    %v1467 = vunpack.c.l.b16 %v92
    %v1468 = vunpack.c.h.b16 %v92
    %v1469 = vunpack.c.l.b16 %v93
    %v1470 = vunpack.c.h.b16 %v93
    %v1471 = vunpack.c.l.b16 %v94
    %v1472 = vunpack.c.h.b16 %v94
    %v1473 = vunpack.c.l.b16 %v95
    %v1474 = vunpack.c.h.b16 %v95
    %v1475 = vunpack.c.l.b16 %v96
    %v1476 = vunpack.c.h.b16 %v96
    %v1477 = vunpack.c.l.b16 %v97
    %v1478 = vunpack.c.h.b16 %v97
    %v1479 = vunpack.c.l.b16 %v98
    %v1480 = vunpack.c.h.b16 %v98
    %v1481 = vunpack.c.l.b16 %v99
    %v1482 = vunpack.c.h.b16 %v99
    %v1483 = vunpack.c.l.b16 %v100
    %v1484 = vunpack.c.h.b16 %v100
    %v1485 = vunpack.c.l.b16 %v101
    %v1486 = vunpack.c.h.b16 %v101
    %v1487 = vunpack.c.l.b16 %v102
    %v1488 = vunpack.c.h.b16 %v102
    %v1489 = vunpack.c.l.b16 %v103
    %v1490 = vunpack.c.h.b16 %v103
    %v1491 = vunpack.c.l.b16 %v104
    %v1492 = vunpack.c.h.b16 %v104
    %v1493 = vunpack.c.l.b16 %v105
    %v1494 = vunpack.c.h.b16 %v105
    %v1495 = vunpack.c.l.b16 %v106
    %v1496 = vunpack.c.h.b16 %v106
    %v1497 = vunpack.c.l.b16 %v107
    %v1498 = vunpack.c.h.b16 %v107
    %v1499 = vunpack.c.l.b16 %v108
    %v1500 = vunpack.c.h.b16 %v108
    %v1501 = vunpack.c.l.b16 %v109
    %v1502 = vunpack.c.h.b16 %v109
    %v1503 = vunpack.c.l.b16 %v110
    %v1504 = vunpack.c.h.b16 %v110
    %v1505 = vunpack.c.l.b16 %v111
    %v1506 = vunpack.c.h.b16 %v111
    %v1507 = vunpack.c.l.b16 %v112
    %v1508 = vunpack.c.h.b16 %v112
    %v1509 = vunpack.c.l.b16 %v113
    %v1510 = vunpack.c.h.b16 %v113
    %v1511 = vunpack.c.l.b16 %v114
    %v1512 = vunpack.c.h.b16 %v114
    %v1513 = vunpack.c.l.b16 %v115
    %v1514 = vunpack.c.h.b16 %v115
    %v1515 = vunpack.c.l.b16 %v116
    %v1516 = vunpack.c.h.b16 %v116
    %v1517 = vunpack.c.l.b16 %v117
    %v1518 = vunpack.c.h.b16 %v117
    %v1519 = vunpack.c.l.b16 %v118
    %v1520 = vunpack.c.h.b16 %v118
    %v1521 = vunpack.c.l.b16 %v119
    %v1522 = vunpack.c.h.b16 %v119
    %v1523 = vunpack.c.l.b16 %v120
    %v1524 = vunpack.c.h.b16 %v120
    %v1525 = vunpack.c.l.b16 %v121
    %v1526 = vunpack.c.h.b16 %v121
    %v1527 = vunpack.c.l.b16 %v122
    %v1528 = vunpack.c.h.b16 %v122
    %v1529 = vunpack.c.l.b16 %v123
    %v1530 = vunpack.c.h.b16 %v123
    %v1531 = vunpack.c.l.b16 %v124
    %v1532 = vunpack.c.h.b16 %v124
    %v1533 = vunpack.c.l.b16 %v125
    %v1534 = vunpack.c.h.b16 %v125
    %v1535 = vunpack.c.l.b16 %v126
    %v1536 = vunpack.c.h.b16 %v126
    %v1537 = vunpack.c.l.b16 %v127
    %v1538 = vunpack.c.h.b16 %v127
    %v1539 = vunpack.c.l.b16 %v128
    %v1540 = vunpack.c.h.b16 %v128
    %v1541 = vunpack.c.l.b16 %v129
    %v1542 = vunpack.c.h.b16 %v129
    %v1543 = vunpack.c.l.b16 %v130
    %v1544 = vunpack.c.h.b16 %v130
    %v1545 = vunpack.c.l.b16 %v131
    %v1546 = vunpack.c.h.b16 %v131
    %v1547 = vunpack.c.l.b16 %v132
    %v1548 = vunpack.c.h.b16 %v132
    %v1549 = vunpack.c.l.b16 %v133
    %v1550 = vunpack.c.h.b16 %v133
    %v1551 = vunpack.c.l.b16 %v134
    %v1552 = vunpack.c.h.b16 %v134
    %v1553 = vunpack.c.l.b16 %v135
    %v1554 = vunpack.c.h.b16 %v135
    %v1555 = vunpack.c.l.b16 %v136
    %v1556 = vunpack.c.h.b16 %v136
    %v1557 = vunpack.c.l.b16 %v137
    %v1558 = vunpack.c.h.b16 %v137
    %v1559 = vunpack.c.l.b16 %v138
    %v1560 = vunpack.c.h.b16 %v138
    %v1561 = vunpack.c.l.b16 %v139
    %v1562 = vunpack.c.h.b16 %v139
    %v1563 = vunpack.c.l.b16 %v140
    %v1564 = vunpack.c.h.b16 %v140
    %v1565 = vunpack.c.l.b16 %v141
    %v1566 = vunpack.c.h.b16 %v141
    %v1567 = vunpack.c.l.b16 %v142
    %v1568 = vunpack.c.h.b16 %v142
    %v1569 = vunpack.c.l.b16 %v143
    %v1570 = vunpack.c.h.b16 %v143
    %v1571 = vunpack.c.l.b16 %v144
    %v1572 = vunpack.c.h.b16 %v144
    %v1573 = vunpack.c.l.b16 %v145
    %v1574 = vunpack.c.h.b16 %v145
    %v1575 = vunpack.c.l.b16 %v146
    %v1576 = vunpack.c.h.b16 %v146
    %v1577 = vunpack.c.l.b16 %v147
    %v1578 = vunpack.c.h.b16 %v147
    %v1579 = vunpack.c.l.b16 %v148
    %v1580 = vunpack.c.h.b16 %v148
    %v1581 = vunpack.c.l.b16 %v149
    %v1582 = vunpack.c.h.b16 %v149
    %v1583 = vunpack.c.l.b16 %v150
    %v1584 = vunpack.c.h.b16 %v150
    %v1585 = vunpack.c.l.b16 %v151
    %v1586 = vunpack.c.h.b16 %v151
    %v1587 = vunpack.c.l.b16 %v152
    %v1588 = vunpack.c.h.b16 %v152
    %v1589 = vunpack.c.l.b16 %v153
    %v1590 = vunpack.c.h.b16 %v153
    %v1591 = vunpack.c.l.b16 %v154
    %v1592 = vunpack.c.h.b16 %v154
    %v1593 = vunpack.c.l.b16 %v155
    %v1594 = vunpack.c.h.b16 %v155
    %v1595 = vunpack.c.l.b16 %v156
    %v1596 = vunpack.c.h.b16 %v156
    %v1597 = vunpack.c.l.b16 %v157
    %v1598 = vunpack.c.h.b16 %v157
    %v1599 = vunpack.c.l.b16 %v158
    %v1600 = vunpack.c.h.b16 %v158
    %v1601 = vunpack.c.l.b16 %v159
    %v1602 = vunpack.c.h.b16 %v159
    %v1603 = vunpack.c.l.b16 %v160
    %v1604 = vunpack.c.h.b16 %v160
    %v1605 = vunpack.c.l.b16 %v161
    %v1606 = vunpack.c.h.b16 %v161
    %v1607 = vunpack.c.l.b16 %v162
    %v1608 = vunpack.c.h.b16 %v162
    %v1609 = vunpack.c.l.b16 %v163
    %v1610 = vunpack.c.h.b16 %v163
    %v1611 = vunpack.c.l.b16 %v164
    %v1612 = vunpack.c.h.b16 %v164
    %v1613 = vunpack.c.l.b16 %v165
    %v1614 = vunpack.c.h.b16 %v165
    %v1615 = vunpack.c.l.b16 %v166
    %v1616 = vunpack.c.h.b16 %v166
    %v1617 = vunpack.c.l.b16 %v167
    %v1618 = vunpack.c.h.b16 %v167
    %v1619 = vunpack.c.l.b16 %v168
    %v1620 = vunpack.c.h.b16 %v168
    %v1621 = vunpack.c.l.b16 %v169
    %v1622 = vunpack.c.h.b16 %v169
    %v1623 = vunpack.c.l.b16 %v170
    %v1624 = vunpack.c.h.b16 %v170
    %v1625 = vunpack.c.l.b16 %v171
    %v1626 = vunpack.c.h.b16 %v171
    %v1627 = vunpack.c.l.b16 %v172
    %v1628 = vunpack.c.h.b16 %v172
    %v1629 = vunpack.c.l.b16 %v173
    %v1630 = vunpack.c.h.b16 %v173
    %v1631 = vunpack.c.l.b16 %v174
    %v1632 = vunpack.c.h.b16 %v174
    %v1633 = vunpack.c.l.b16 %v175
    %v1634 = vunpack.c.h.b16 %v175
    %v1635 = vunpack.c.l.b16 %v176
    %v1636 = vunpack.c.h.b16 %v176
    %v1637 = vunpack.c.l.b16 %v177
    %v1638 = vunpack.c.h.b16 %v177
    %v1639 = vunpack.c.l.b16 %v178
    %v1640 = vunpack.c.h.b16 %v178
    %v1641 = vunpack.c.l.b16 %v179
    %v1642 = vunpack.c.h.b16 %v179
    %v1643 = vunpack.c.l.b16 %v180
    %v1644 = vunpack.c.h.b16 %v180
    %v1645 = vunpack.c.l.b16 %v181
    %v1646 = vunpack.c.h.b16 %v181
    %v1647 = vunpack.c.l.b16 %v182
    %v1648 = vunpack.c.h.b16 %v182
    %v1649 = vunpack.c.l.b16 %v183
    %v1650 = vunpack.c.h.b16 %v183
    %v1651 = vunpack.c.l.b16 %v184
    %v1652 = vunpack.c.h.b16 %v184
    %v1653 = vunpack.c.l.b16 %v185
    %v1654 = vunpack.c.h.b16 %v185
    %v1655 = vunpack.c.l.b16 %v186
    %v1656 = vunpack.c.h.b16 %v186
    %v1657 = vunpack.c.l.b16 %v187
    %v1658 = vunpack.c.h.b16 %v187
    %v1659 = vunpack.c.l.b16 %v188
    %v1660 = vunpack.c.h.b16 %v188
    %v1661 = vunpack.c.l.b16 %v189
    %v1662 = vunpack.c.h.b16 %v189
    %v1663 = vunpack.c.l.b16 %v190
    %v1664 = vunpack.c.h.b16 %v190
    %v1665 = vunpack.c.l.b16 %v191
    %v1666 = vunpack.c.h.b16 %v191
    %v1667 = vunpack.c.l.b16 %v192
    %v1668 = vunpack.c.h.b16 %v192
    %v1669 = vunpack.c.l.b16 %v193
    %v1670 = vunpack.c.h.b16 %v193
    %v1671 = vunpack.c.l.b16 %v194
    %v1672 = vunpack.c.h.b16 %v194
    %v1673 = vunpack.c.l.b16 %v195
    %v1674 = vunpack.c.h.b16 %v195
    %v1675 = vunpack.c.l.b16 %v196
    %v1676 = vunpack.c.h.b16 %v196
    %v1677 = vunpack.c.l.b16 %v197
    %v1678 = vunpack.c.h.b16 %v197
    %v1679 = vunpack.c.l.b16 %v198
    %v1680 = vunpack.c.h.b16 %v198
    %v1681 = vunpack.c.l.b16 %v199
    %v1682 = vunpack.c.h.b16 %v199
    %v1683 = vunpack.c.l.b16 %v200
    %v1684 = vunpack.c.h.b16 %v200
    %v1685 = vunpack.c.l.b16 %v201
    %v1686 = vunpack.c.h.b16 %v201
    %v1687 = vunpack.c.l.b16 %v202
    %v1688 = vunpack.c.h.b16 %v202
    %v1689 = vunpack.c.l.b16 %v203
    %v1690 = vunpack.c.h.b16 %v203
    %v1691 = vunpack.c.l.b16 %v204
    %v1692 = vunpack.c.h.b16 %v204
    %v1693 = vunpack.c.l.b16 %v205
    %v1694 = vunpack.c.h.b16 %v205
    %v1695 = vunpack.c.l.b16 %v206
    %v1696 = vunpack.c.h.b16 %v206
    %v1697 = vunpack.c.l.b16 %v207
    %v1698 = vunpack.c.h.b16 %v207
    %v1699 = vunpack.c.l.b16 %v208
    %v1700 = vunpack.c.h.b16 %v208
    %v1701 = vunpack.c.l.b16 %v209
    %v1702 = vunpack.c.h.b16 %v209
    %v1703 = vunpack.c.l.b16 %v210
    %v1704 = vunpack.c.h.b16 %v210
    %v1705 = vunpack.c.l.b16 %v211
    %v1706 = vunpack.c.h.b16 %v211
    %v1707 = vunpack.c.l.b16 %v212
    %v1708 = vunpack.c.h.b16 %v212
    %v1709 = vunpack.c.l.b16 %v213
    %v1710 = vunpack.c.h.b16 %v213
    %v1711 = vunpack.c.l.b16 %v214
    %v1712 = vunpack.c.h.b16 %v214
    %v1713 = vunpack.c.l.b16 %v215
    %v1714 = vunpack.c.h.b16 %v215
    %v1715 = vunpack.c.l.b16 %v216
    %v1716 = vunpack.c.h.b16 %v216
    %v1717 = vunpack.c.l.b16 %v217
    %v1718 = vunpack.c.h.b16 %v217
    %v1719 = vunpack.c.l.b16 %v218
    %v1720 = vunpack.c.h.b16 %v218
    %v1721 = vunpack.c.l.b16 %v219
    %v1722 = vunpack.c.h.b16 %v219
    %v1723 = vunpack.c.l.b16 %v220
    %v1724 = vunpack.c.h.b16 %v220
    %v1725 = vunpack.c.l.b16 %v221
    %v1726 = vunpack.c.h.b16 %v221
    %v1727 = vunpack.c.l.b16 %v222
    %v1728 = vunpack.c.h.b16 %v222
    %v1729 = vunpack.c.l.b16 %v223
    %v1730 = vunpack.c.h.b16 %v223
    %v1731 = vunpack.c.l.b16 %v224
    %v1732 = vunpack.c.h.b16 %v224
    %v1733 = vunpack.c.l.b16 %v225
    %v1734 = vunpack.c.h.b16 %v225
    %v1735 = vunpack.c.l.b16 %v226
    %v1736 = vunpack.c.h.b16 %v226
    %v1737 = vunpack.c.l.b16 %v227
    %v1738 = vunpack.c.h.b16 %v227
    %v1739 = vunpack.c.l.b16 %v228
    %v1740 = vunpack.c.h.b16 %v228
    %v1741 = vunpack.c.l.b16 %v229
    %v1742 = vunpack.c.h.b16 %v229
    %v1743 = vunpack.c.l.b16 %v230
    %v1744 = vunpack.c.h.b16 %v230
    %v1745 = vunpack.c.l.b16 %v231
    %v1746 = vunpack.c.h.b16 %v231
    %v1747 = vunpack.c.l.b16 %v232
    %v1748 = vunpack.c.h.b16 %v232
    %v1749 = vunpack.c.l.b16 %v233
    %v1750 = vunpack.c.h.b16 %v233
    %v1751 = vunpack.c.l.b16 %v234
    %v1752 = vunpack.c.h.b16 %v234
    %v1753 = vunpack.c.l.b16 %v235
    %v1754 = vunpack.c.h.b16 %v235
    %v1755 = vunpack.c.l.b16 %v236
    %v1756 = vunpack.c.h.b16 %v236
    %v1757 = vunpack.c.l.b16 %v237
    %v1758 = vunpack.c.h.b16 %v237
    %v1759 = vunpack.c.l.b16 %v238
    %v1760 = vunpack.c.h.b16 %v238
    %v1761 = vunpack.c.l.b16 %v239
    %v1762 = vunpack.c.h.b16 %v239
    %v1763 = vunpack.c.l.b16 %v240
    %v1764 = vunpack.c.h.b16 %v240
    %v1765 = vunpack.c.l.b16 %v241
    %v1766 = vunpack.c.h.b16 %v241
    %v1767 = vunpack.c.l.b16 %v242
    %v1768 = vunpack.c.h.b16 %v242
    %v1769 = vunpack.c.l.b16 %v243
    %v1770 = vunpack.c.h.b16 %v243
    %v1771 = vunpack.c.l.b16 %v244
    %v1772 = vunpack.c.h.b16 %v244
    %v1773 = vunpack.c.l.b16 %v245
    %v1774 = vunpack.c.h.b16 %v245
    %v1775 = vunpack.c.l.b16 %v246
    %v1776 = vunpack.c.h.b16 %v246
    %v1777 = vunpack.c.l.b16 %v247
    %v1778 = vunpack.c.h.b16 %v247
    %v1779 = vunpack.c.l.b16 %v248
    %v1780 = vunpack.c.h.b16 %v248
    %v1781 = vunpack.c.l.b16 %v249
    %v1782 = vunpack.c.h.b16 %v249
    %v1783 = vunpack.c.l.b16 %v250
    %v1784 = vunpack.c.h.b16 %v250
    %v1785 = vunpack.c.l.b16 %v251
    %v1786 = vunpack.c.h.b16 %v251
    %v1787 = vunpack.c.l.b16 %v252
    %v1788 = vunpack.c.h.b16 %v252
    %v1789 = vunpack.c.l.b16 %v253
    %v1790 = vunpack.c.h.b16 %v253
    %v1791 = vunpack.c.l.b16 %v254
    %v1792 = vunpack.c.h.b16 %v254
    %v1793 = vunpack.c.l.b16 %v255
    %v1794 = vunpack.c.h.b16 %v255
    %v1795 = vunpack.c.l.b16 %v256
    %v1796 = vunpack.c.h.b16 %v256
    %v1797 = vunpack.c.l.b16 %v257
    %v1798 = vunpack.c.h.b16 %v257
    %v1799 = vunpack.c.l.b16 %v258
    %v1800 = vunpack.c.h.b16 %v258
    %v1801 = vunpack.c.l.b16 %v259
    %v1802 = vunpack.c.h.b16 %v259
    %v1803 = vunpack.c.l.b16 %v260
    %v1804 = vunpack.c.h.b16 %v260
    %v1805 = vunpack.c.l.b16 %v261
    %v1806 = vunpack.c.h.b16 %v261
    %v1807 = vunpack.c.l.b16 %v262
    %v1808 = vunpack.c.h.b16 %v262
    %v1809 = vunpack.c.l.b16 %v263
    %v1810 = vunpack.c.h.b16 %v263
    %v1811 = vunpack.c.l.b16 %v264
    %v1812 = vunpack.c.h.b16 %v264
    %v1813 = vunpack.c.l.b16 %v265
    %v1814 = vunpack.c.h.b16 %v265
    %v1815 = vunpack.c.l.b16 %v266
    %v1816 = vunpack.c.h.b16 %v266
    %v1817 = vunpack.c.l.b16 %v267
    %v1818 = vunpack.c.h.b16 %v267
    %v1819 = vunpack.c.l.b16 %v268
    %v1820 = vunpack.c.h.b16 %v268
    %v1821 = vunpack.c.l.b16 %v269
    %v1822 = vunpack.c.h.b16 %v269
    %v1823 = vunpack.c.l.b16 %v270
    %v1824 = vunpack.c.h.b16 %v270
    %v1825 = vunpack.c.l.b16 %v271
    %v1826 = vunpack.c.h.b16 %v271
    %v1827 = vunpack.c.l.b16 %v272
    %v1828 = vunpack.c.h.b16 %v272
    %v1829 = vunpack.c.l.b16 %v273
    %v1830 = vunpack.c.h.b16 %v273
    %v1831 = vunpack.c.l.b16 %v274
    %v1832 = vunpack.c.h.b16 %v274
    %v1833 = vunpack.c.l.b16 %v275
    %v1834 = vunpack.c.h.b16 %v275
    %v1835 = vunpack.c.l.b16 %v276
    %v1836 = vunpack.c.h.b16 %v276
    %v1837 = vunpack.c.l.b16 %v277
    %v1838 = vunpack.c.h.b16 %v277
    %v1839 = vunpack.c.l.b16 %v278
    %v1840 = vunpack.c.h.b16 %v278
    %v1841 = vunpack.c.l.b16 %v279
    %v1842 = vunpack.c.h.b16 %v279
    %v1843 = vunpack.c.l.b16 %v280
    %v1844 = vunpack.c.h.b16 %v280
    %v1845 = vunpack.c.l.b16 %v281
    %v1846 = vunpack.c.h.b16 %v281
    %v1847 = vunpack.c.l.b16 %v282
    %v1848 = vunpack.c.h.b16 %v282
    %v1849 = vunpack.c.l.b16 %v283
    %v1850 = vunpack.c.h.b16 %v283
    %v1851 = vunpack.c.l.b16 %v284
    %v1852 = vunpack.c.h.b16 %v284
    %v1853 = vunpack.c.l.b16 %v285
    %v1854 = vunpack.c.h.b16 %v285
    %v1855 = vunpack.c.l.b16 %v286
    %v1856 = vunpack.c.h.b16 %v286
    %v1857 = vunpack.c.l.b16 %v287
    %v1858 = vunpack.c.h.b16 %v287
    %v1859 = vunpack.c.l.b16 %v288
    %v1860 = vunpack.c.h.b16 %v288
    %v1861 = vunpack.c.l.b16 %v289
    %v1862 = vunpack.c.h.b16 %v289
    %v1863 = vunpack.c.l.b16 %v290
    %v1864 = vunpack.c.h.b16 %v290
    %v1865 = vunpack.c.l.b16 %v291
    %v1866 = vunpack.c.h.b16 %v291
    %v1867 = vunpack.c.l.b16 %v292
    %v1868 = vunpack.c.h.b16 %v292
    %v1869 = vunpack.c.l.b16 %v293
    %v1870 = vunpack.c.h.b16 %v293
    %v1871 = vunpack.c.l.b16 %v294
    %v1872 = vunpack.c.h.b16 %v294
    %v1873 = vunpack.c.l.b16 %v295
    %v1874 = vunpack.c.h.b16 %v295
    %v1875 = vunpack.c.l.b16 %v296
    %v1876 = vunpack.c.h.b16 %v296
    %v1877 = vunpack.c.l.b16 %v297
    %v1878 = vunpack.c.h.b16 %v297
    %v1879 = vunpack.c.l.b16 %v298
    %v1880 = vunpack.c.h.b16 %v298
    %v1881 = vunpack.c.l.b16 %v299
    %v1882 = vunpack.c.h.b16 %v299
    %v1883 = vunpack.c.l.b16 %v300
    %v1884 = vunpack.c.h.b16 %v300
    %v1885 = vunpack.c.l.b16 %v301
    %v1886 = vunpack.c.h.b16 %v301
    %v1887 = vunpack.c.l.b16 %v302
    %v1888 = vunpack.c.h.b16 %v302
    %v1889 = vunpack.c.l.b16 %v303
    %v1890 = vunpack.c.h.b16 %v303
    %v1891 = vunpack.c.l.b16 %v304
    %v1892 = vunpack.c.h.b16 %v304
    %v1893 = vunpack.c.l.b16 %v305
    %v1894 = vunpack.c.h.b16 %v305
    %v1895 = vunpack.c.l.b16 %v306
    %v1896 = vunpack.c.h.b16 %v306
    %v1897 = vunpack.c.l.b16 %v307
    %v1898 = vunpack.c.h.b16 %v307
    %v1899 = vunpack.c.l.b16 %v308
    %v1900 = vunpack.c.h.b16 %v308
    %v1901 = vunpack.c.l.b16 %v309
    %v1902 = vunpack.c.h.b16 %v309
    %v1903 = vunpack.c.l.b16 %v310
    %v1904 = vunpack.c.h.b16 %v310
    %v1905 = vunpack.c.l.b16 %v311
    %v1906 = vunpack.c.h.b16 %v311
    %v1907 = vunpack.c.l.b16 %v312
    %v1908 = vunpack.c.h.b16 %v312
    %v1909 = vunpack.c.l.b16 %v313
    %v1910 = vunpack.c.h.b16 %v313
    %v1911 = vunpack.c.l.b16 %v314
    %v1912 = vunpack.c.h.b16 %v314
    %v1913 = vunpack.c.l.b16 %v315
    %v1914 = vunpack.c.h.b16 %v315
    %v1915 = vunpack.c.l.b16 %v316
    %v1916 = vunpack.c.h.b16 %v316
    %v1917 = vunpack.c.l.b16 %v317
    %v1918 = vunpack.c.h.b16 %v317
    %v1919 = vunpack.c.l.b16 %v318
    %v1920 = vunpack.c.h.b16 %v318
    %v1921 = vunpack.c.l.b16 %v319
    %v1922 = vunpack.c.h.b16 %v319
    %v1923 = vunpack.c.l.b16 %v320
    %v1924 = vunpack.c.h.b16 %v320
    %v1925 = vunpack.c.l.b16 %v321
    %v1926 = vunpack.c.h.b16 %v321
    %v1927 = vunpack.c.l.b16 %v322
    %v1928 = vunpack.c.h.b16 %v322
    %v1929 = vunpack.c.l.b16 %v323
    %v1930 = vunpack.c.h.b16 %v323
    %v1931 = vunpack.c.l.b16 %v324
    %v1932 = vunpack.c.h.b16 %v324
    %v1933 = vunpack.c.l.b16 %v325
    %v1934 = vunpack.c.h.b16 %v325
    %v1935 = vunpack.c.l.b16 %v326
    %v1936 = vunpack.c.h.b16 %v326
    %v1937 = vunpack.c.l.b16 %v327
    %v1938 = vunpack.c.h.b16 %v327
    %v1939 = vunpack.c.l.b16 %v328
    %v1940 = vunpack.c.h.b16 %v328
    %v1941 = vunpack.c.l.b16 %v329
    %v1942 = vunpack.c.h.b16 %v329
    %v1943 = vunpack.c.l.b16 %v330
    %v1944 = vunpack.c.h.b16 %v330
    %v1945 = vunpack.c.l.b16 %v331
    %v1946 = vunpack.c.h.b16 %v331
    %v1947 = vunpack.c.l.b16 %v332
    %v1948 = vunpack.c.h.b16 %v332
    %v1949 = vunpack.c.l.b16 %v333
    %v1950 = vunpack.c.h.b16 %v333
    %v1951 = vunpack.c.l.b16 %v334
    %v1952 = vunpack.c.h.b16 %v334
    %v1953 = vunpack.c.l.b16 %v335
    %v1954 = vunpack.c.h.b16 %v335
    %v1955 = vunpack.c.l.b16 %v336
    %v1956 = vunpack.c.h.b16 %v336
    %v1957 = vunpack.c.l.b16 %v337
    %v1958 = vunpack.c.h.b16 %v337
    %v1959 = vunpack.c.l.b16 %v338
    %v1960 = vunpack.c.h.b16 %v338
    %v1961 = vunpack.c.l.b16 %v339
    %v1962 = vunpack.c.h.b16 %v339
    %v1963 = vunpack.c.l.b16 %v340
    %v1964 = vunpack.c.h.b16 %v340
    %v1965 = vunpack.c.l.b16 %v341
    %v1966 = vunpack.c.h.b16 %v341
    %v1967 = vunpack.c.l.b16 %v342
    %v1968 = vunpack.c.h.b16 %v342
    %v1969 = vunpack.c.l.b16 %v343
    %v1970 = vunpack.c.h.b16 %v343
    %v1971 = vunpack.c.l.b16 %v344
    %v1972 = vunpack.c.h.b16 %v344
    %v1973 = vunpack.c.l.b16 %v345
    %v1974 = vunpack.c.h.b16 %v345
    %v1975 = vunpack.c.l.b16 %v346
    %v1976 = vunpack.c.h.b16 %v346
    %v1977 = vunpack.c.l.b16 %v347
    %v1978 = vunpack.c.h.b16 %v347
    %v1979 = vunpack.c.l.b16 %v348
    %v1980 = vunpack.c.h.b16 %v348
    %v1981 = vunpack.c.l.b16 %v349
    %v1982 = vunpack.c.h.b16 %v349
    %v1983 = vunpack.c.l.b16 %v350
    %v1984 = vunpack.c.h.b16 %v350
    %v1985 = vunpack.c.l.b16 %v351
    %v1986 = vunpack.c.h.b16 %v351
    %v1987 = vunpack.c.l.b16 %v352
    %v1988 = vunpack.c.h.b16 %v352
    %v1989 = vunpack.c.l.b16 %v353
    %v1990 = vunpack.c.h.b16 %v353
    %v1991 = vunpack.c.l.b16 %v354
    %v1992 = vunpack.c.h.b16 %v354
    %v1993 = vunpack.c.l.b16 %v355
    %v1994 = vunpack.c.h.b16 %v355
    %v1995 = vunpack.c.l.b16 %v356
    %v1996 = vunpack.c.h.b16 %v356
    %v1997 = vunpack.c.l.b16 %v357
    %v1998 = vunpack.c.h.b16 %v357
    %v1999 = vunpack.c.l.b16 %v358
    %v2000 = vunpack.c.h.b16 %v358
    %v2001 = vunpack.c.l.b16 %v359
    %v2002 = vunpack.c.h.b16 %v359
    %v2003 = vunpack.c.l.b16 %v360
    %v2004 = vunpack.c.h.b16 %v360
    %v2005 = vunpack.c.l.b16 %v361
    %v2006 = vunpack.c.h.b16 %v361
    %v2007 = vunpack.c.l.b16 %v362
    %v2008 = vunpack.c.h.b16 %v362
    %v2009 = vunpack.c.l.b16 %v363
    %v2010 = vunpack.c.h.b16 %v363
    %v2011 = vunpack.c.l.b16 %v364
    %v2012 = vunpack.c.h.b16 %v364
    %v2013 = vunpack.c.l.b16 %v365
    %v2014 = vunpack.c.h.b16 %v365
    %v2015 = vunpack.c.l.b16 %v366
    %v2016 = vunpack.c.h.b16 %v366
    %v2017 = vunpack.c.l.b16 %v367
    %v2018 = vunpack.c.h.b16 %v367
    %v2019 = vunpack.c.l.b16 %v368
    %v2020 = vunpack.c.h.b16 %v368
    %v2021 = vunpack.c.l.b16 %v369
    %v2022 = vunpack.c.h.b16 %v369
    %v2023 = vunpack.c.l.b16 %v370
    %v2024 = vunpack.c.h.b16 %v370
    %v2025 = vunpack.c.l.b16 %v371
    %v2026 = vunpack.c.h.b16 %v371
    %v2027 = vunpack.c.l.b16 %v372
    %v2028 = vunpack.c.h.b16 %v372
    %v2029 = vunpack.c.l.b16 %v373
    %v2030 = vunpack.c.h.b16 %v373
    %v2031 = vunpack.c.l.b16 %v374
    %v2032 = vunpack.c.h.b16 %v374
    %v2033 = vunpack.c.l.b16 %v375
    %v2034 = vunpack.c.h.b16 %v375
    %v2035 = vunpack.c.l.b16 %v376
    %v2036 = vunpack.c.h.b16 %v376
    %v2037 = vunpack.c.l.b16 %v377
    %v2038 = vunpack.c.h.b16 %v377
    %v2039 = vunpack.c.l.b16 %v378
    %v2040 = vunpack.c.h.b16 %v378
    %v2041 = vunpack.c.l.b16 %v379
    %v2042 = vunpack.c.h.b16 %v379
    %v2043 = vunpack.c.l.b16 %v380
    %v2044 = vunpack.c.h.b16 %v380
    %v2045 = vunpack.c.l.b16 %v381
    %v2046 = vunpack.c.h.b16 %v381
    %v2047 = vunpack.c.l.b16 %v382
    %v2048 = vunpack.c.h.b16 %v382
    %v2049 = vunpack.c.l.b16 %v383
    %v2050 = vunpack.c.h.b16 %v383
    %v2051 = vunpack.c.l.b16 %v384
    %v2052 = vunpack.c.h.b16 %v384
    %v2053 = vunpack.c.l.b16 %v385
    %v2054 = vunpack.c.h.b16 %v385
    %v2055 = vunpack.c.l.b16 %v386
    %v2056 = vunpack.c.h.b16 %v386
    %v2057 = vunpack.c.l.b16 %v387
    %v2058 = vunpack.c.h.b16 %v387
    %v2059 = vunpack.c.l.b16 %v388
    %v2060 = vunpack.c.h.b16 %v388
    %v2061 = vunpack.c.l.b16 %v389
    %v2062 = vunpack.c.h.b16 %v389
    %v2063 = vunpack.c.l.b16 %v390
    %v2064 = vunpack.c.h.b16 %v390
    %v2065 = vunpack.c.l.b16 %v391
    %v2066 = vunpack.c.h.b16 %v391
    %v2067 = vunpack.c.l.b16 %v392
    %v2068 = vunpack.c.h.b16 %v392
    %v2069 = vunpack.c.l.b16 %v393
    %v2070 = vunpack.c.h.b16 %v393
    %v2071 = vunpack.c.l.b16 %v394
    %v2072 = vunpack.c.h.b16 %v394
    %v2073 = vunpack.c.l.b16 %v395
    %v2074 = vunpack.c.h.b16 %v395
    %v2075 = vunpack.c.l.b16 %v396
    %v2076 = vunpack.c.h.b16 %v396
    %v2077 = vunpack.c.l.b16 %v397
    %v2078 = vunpack.c.h.b16 %v397
    %v2079 = vunpack.c.l.b16 %v398
    %v2080 = vunpack.c.h.b16 %v398
    %v2081 = vunpack.c.l.b16 %v399
    %v2082 = vunpack.c.h.b16 %v399
    %v2083 = vunpack.c.l.b16 %v400
    %v2084 = vunpack.c.h.b16 %v400
    %v2085 = vunpack.c.l.b16 %v401
    %v2086 = vunpack.c.h.b16 %v401
    %v2087 = vunpack.c.l.b16 %v402
    %v2088 = vunpack.c.h.b16 %v402
    %v2089 = vunpack.c.l.b16 %v403
    %v2090 = vunpack.c.h.b16 %v403
    %v2091 = vunpack.c.l.b16 %v404
    %v2092 = vunpack.c.h.b16 %v404
    %v2093 = vunpack.c.l.b16 %v405
    %v2094 = vunpack.c.h.b16 %v405
    %v2095 = vunpack.c.l.b16 %v406
    %v2096 = vunpack.c.h.b16 %v406
    %v2097 = vunpack.c.l.b16 %v407
    %v2098 = vunpack.c.h.b16 %v407
    %v2099 = vunpack.c.l.b16 %v408
    %v2100 = vunpack.c.h.b16 %v408
    %v2101 = vunpack.c.l.b16 %v409
    %v2102 = vunpack.c.h.b16 %v409
    %v2103 = vunpack.c.l.b16 %v410
    %v2104 = vunpack.c.h.b16 %v410
    %v2105 = vunpack.c.l.b16 %v411
    %v2106 = vunpack.c.h.b16 %v411
    %v2107 = vunpack.c.l.b16 %v412
    %v2108 = vunpack.c.h.b16 %v412
    %v2109 = vunpack.c.l.b16 %v413
    %v2110 = vunpack.c.h.b16 %v413
    %v2111 = vunpack.c.l.b16 %v414
    %v2112 = vunpack.c.h.b16 %v414
    %v2113 = vunpack.c.l.b16 %v415
    %v2114 = vunpack.c.h.b16 %v415
    %v2115 = vunpack.c.l.b16 %v416
    %v2116 = vunpack.c.h.b16 %v416
    %v2117 = vunpack.c.l.b16 %v417
    %v2118 = vunpack.c.h.b16 %v417
    %v2119 = vunpack.c.l.b16 %v418
    %v2120 = vunpack.c.h.b16 %v418
    %v2121 = vunpack.c.l.b16 %v419
    %v2122 = vunpack.c.h.b16 %v419
    %v2123 = vunpack.c.l.b16 %v420
    %v2124 = vunpack.c.h.b16 %v420
    %v2125 = vunpack.c.l.b16 %v421
    %v2126 = vunpack.c.h.b16 %v421
    %v2127 = vunpack.c.l.b16 %v422
    %v2128 = vunpack.c.h.b16 %v422
    %v2129 = vunpack.c.l.b16 %v423
    %v2130 = vunpack.c.h.b16 %v423
    %v2131 = vunpack.c.l.b16 %v424
    %v2132 = vunpack.c.h.b16 %v424
    %v2133 = vunpack.c.l.b16 %v425
    %v2134 = vunpack.c.h.b16 %v425
    %v2135 = vunpack.c.l.b16 %v426
    %v2136 = vunpack.c.h.b16 %v426
    %v2137 = vunpack.c.l.b16 %v427
    %v2138 = vunpack.c.h.b16 %v427
    %v2139 = vunpack.c.l.b16 %v428
    %v2140 = vunpack.c.h.b16 %v428
    %v2141 = vunpack.c.l.b16 %v429
    %v2142 = vunpack.c.h.b16 %v429
    %v2143 = vunpack.c.l.b16 %v430
    %v2144 = vunpack.c.h.b16 %v430
    %v2145 = vunpack.c.l.b16 %v431
    %v2146 = vunpack.c.h.b16 %v431
    %v2147 = vunpack.c.l.b16 %v432
    %v2148 = vunpack.c.h.b16 %v432
    %v2149 = vunpack.c.l.b16 %v433
    %v2150 = vunpack.c.h.b16 %v433
    %v2151 = vunpack.c.l.b16 %v434
    %v2152 = vunpack.c.h.b16 %v434
    %v2153 = vunpack.c.l.b16 %v435
    %v2154 = vunpack.c.h.b16 %v435
    %v2155 = vunpack.c.l.b16 %v436
    %v2156 = vunpack.c.h.b16 %v436
    %v2157 = vunpack.c.l.b16 %v437
    %v2158 = vunpack.c.h.b16 %v437
    %v2159 = vunpack.c.l.b16 %v438
    %v2160 = vunpack.c.h.b16 %v438
    %v2161 = vunpack.c.l.b16 %v439
    %v2162 = vunpack.c.h.b16 %v439
    %v2163 = vunpack.c.l.b16 %v440
    %v2164 = vunpack.c.h.b16 %v440
    %v2165 = vunpack.c.l.b16 %v441
    %v2166 = vunpack.c.h.b16 %v441
    %v2167 = vunpack.c.l.b16 %v442
    %v2168 = vunpack.c.h.b16 %v442
    %v2169 = vunpack.c.l.b16 %v443
    %v2170 = vunpack.c.h.b16 %v443
    %v2171 = vunpack.c.l.b16 %v444
    %v2172 = vunpack.c.h.b16 %v444
    %v2173 = vunpack.c.l.b16 %v445
    %v2174 = vunpack.c.h.b16 %v445
    %v2175 = vunpack.c.l.b16 %v446
    %v2176 = vunpack.c.h.b16 %v446
    %v2177 = vunpack.c.l.b16 %v447
    %v2178 = vunpack.c.h.b16 %v447
    %v2179 = vunpack.c.l.b16 %v448
    %v2180 = vunpack.c.h.b16 %v448
    %v2181 = vunpack.c.l.b16 %v449
    %v2182 = vunpack.c.h.b16 %v449
    %v2183 = vunpack.c.l.b16 %v450
    %v2184 = vunpack.c.h.b16 %v450
    %v2185 = vunpack.c.l.b16 %v451
    %v2186 = vunpack.c.h.b16 %v451
    %v2187 = vunpack.c.l.b16 %v452
    %v2188 = vunpack.c.h.b16 %v452
    %v2189 = vunpack.c.l.b16 %v453
    %v2190 = vunpack.c.h.b16 %v453
    %v2191 = vunpack.c.l.b16 %v454
    %v2192 = vunpack.c.h.b16 %v454
    %v2193 = vunpack.c.l.b16 %v455
    %v2194 = vunpack.c.h.b16 %v455
    %v2195 = vunpack.c.l.b16 %v456
    %v2196 = vunpack.c.h.b16 %v456
    %v2197 = vunpack.c.l.b16 %v457
    %v2198 = vunpack.c.h.b16 %v457
    %v2199 = vunpack.c.l.b16 %v458
    %v2200 = vunpack.c.h.b16 %v458
    %v2201 = vunpack.c.l.b16 %v459
    %v2202 = vunpack.c.h.b16 %v459
    %v2203 = vunpack.c.l.b16 %v460
    %v2204 = vunpack.c.h.b16 %v460
    %v2205 = vunpack.c.l.b16 %v461
    %v2206 = vunpack.c.h.b16 %v461
    %v2207 = vunpack.c.l.b16 %v462
    %v2208 = vunpack.c.h.b16 %v462
    %v2209 = vunpack.c.l.b16 %v463
    %v2210 = vunpack.c.h.b16 %v463
    %v2211 = vunpack.c.l.b16 %v464
    %v2212 = vunpack.c.h.b16 %v464
    %v2213 = vunpack.c.l.b16 %v465
    %v2214 = vunpack.c.h.b16 %v465
    %v2215 = vunpack.c.l.b16 %v466
    %v2216 = vunpack.c.h.b16 %v466
    %v2217 = vunpack.c.l.b16 %v467
    %v2218 = vunpack.c.h.b16 %v467
    %v2219 = vunpack.c.l.b16 %v468
    %v2220 = vunpack.c.h.b16 %v468
    %v2221 = vunpack.c.l.b16 %v469
    %v2222 = vunpack.c.h.b16 %v469
    %v2223 = vunpack.c.l.b16 %v470
    %v2224 = vunpack.c.h.b16 %v470
    %v2225 = vunpack.c.l.b16 %v471
    %v2226 = vunpack.c.h.b16 %v471
    %v2227 = vunpack.c.l.b16 %v472
    %v2228 = vunpack.c.h.b16 %v472
    %v2229 = vunpack.c.l.b16 %v473
    %v2230 = vunpack.c.h.b16 %v473
    %v2231 = vunpack.c.l.b16 %v474
    %v2232 = vunpack.c.h.b16 %v474
    %v2233 = vunpack.c.l.b16 %v475
    %v2234 = vunpack.c.h.b16 %v475
    %v2235 = vunpack.c.l.b16 %v476
    %v2236 = vunpack.c.h.b16 %v476
    %v2237 = vunpack.c.l.b16 %v477
    %v2238 = vunpack.c.h.b16 %v477
    %v2239 = vunpack.c.l.b16 %v478
    %v2240 = vunpack.c.h.b16 %v478
    %v2241 = vunpack.c.l.b16 %v479
    %v2242 = vunpack.c.h.b16 %v479
    %v2243 = vunpack.c.l.b16 %v480
    %v2244 = vunpack.c.h.b16 %v480
    %v2245 = vunpack.c.l.b16 %v481
    %v2246 = vunpack.c.h.b16 %v481
    %v2247 = vunpack.c.l.b16 %v482
    %v2248 = vunpack.c.h.b16 %v482
    %v2249 = vunpack.c.l.b16 %v483
    %v2250 = vunpack.c.h.b16 %v483
    %v2251 = vunpack.c.l.b16 %v484
    %v2252 = vunpack.c.h.b16 %v484
    %v2253 = vunpack.c.l.b16 %v485
    %v2254 = vunpack.c.h.b16 %v485
    %v2255 = vunpack.c.l.b16 %v486
    %v2256 = vunpack.c.h.b16 %v486
    %v2257 = vunpack.c.l.b16 %v487
    %v2258 = vunpack.c.h.b16 %v487
    %v2259 = vunpack.c.l.b16 %v488
    %v2260 = vunpack.c.h.b16 %v488
    %v2261 = vunpack.c.l.b16 %v489
    %v2262 = vunpack.c.h.b16 %v489
    %v2263 = vunpack.c.l.b16 %v490
    %v2264 = vunpack.c.h.b16 %v490
    %v2265 = vunpack.c.l.b16 %v491
    %v2266 = vunpack.c.h.b16 %v491
    %v2267 = vunpack.c.l.b16 %v492
    %v2268 = vunpack.c.h.b16 %v492
    %v2269 = vunpack.c.l.b16 %v493
    %v2270 = vunpack.c.h.b16 %v493
    %v2271 = vunpack.c.l.b16 %v494
    %v2272 = vunpack.c.h.b16 %v494
    %v2273 = vunpack.c.l.b16 %v495
    %v2274 = vunpack.c.h.b16 %v495
    %v2275 = vunpack.c.l.b16 %v496
    %v2276 = vunpack.c.h.b16 %v496
    %v2277 = vunpack.c.l.b16 %v497
    %v2278 = vunpack.c.h.b16 %v497
    %v2279 = vunpack.c.l.b16 %v498
    %v2280 = vunpack.c.h.b16 %v498
    %v2281 = vunpack.c.l.b16 %v499
    %v2282 = vunpack.c.h.b16 %v499
    %v2283 = vunpack.c.l.b16 %v500
    %v2284 = vunpack.c.h.b16 %v500
    %v2285 = vunpack.c.l.b16 %v501
    %v2286 = vunpack.c.h.b16 %v501
    %v2287 = vunpack.c.l.b16 %v502
    %v2288 = vunpack.c.h.b16 %v502
    %v2289 = vunpack.c.l.b16 %v503
    %v2290 = vunpack.c.h.b16 %v503
    %v2291 = vunpack.c.l.b16 %v504
    %v2292 = vunpack.c.h.b16 %v504
    %v2293 = vunpack.c.l.b16 %v505
    %v2294 = vunpack.c.h.b16 %v505
    %v2295 = vunpack.c.l.b16 %v506
    %v2296 = vunpack.c.h.b16 %v506
    %v2297 = vunpack.c.l.b16 %v507
    %v2298 = vunpack.c.h.b16 %v507
    %v2299 = vunpack.c.l.b16 %v508
    %v2300 = vunpack.c.h.b16 %v508
    %v2301 = vunpack.c.l.b16 %v509
    %v2302 = vunpack.c.h.b16 %v509
    %v2303 = vunpack.c.l.b16 %v510
    %v2304 = vunpack.c.h.b16 %v510
    %v2305 = vunpack.c.l.b16 %v511
    %v2306 = vunpack.c.h.b16 %v511
    %v2307 = vunpack.c.l.b16 %v512
    %v2308 = vunpack.c.h.b16 %v512
    %v2309 = vunpack.c.l.b16 %v513
    %v2310 = vunpack.c.h.b16 %v513
    %v2311 = vunpack.c.l.b16 %v514
    %v2312 = vunpack.c.h.b16 %v514
    %v2313 = vunpack.c.l.b16 %v515
    %v2314 = vunpack.c.h.b16 %v515
    %v2315 = vunpack.c.l.b16 %v516
    %v2316 = vunpack.c.h.b16 %v516
    %v2317 = vunpack.c.l.b16 %v517
    %v2318 = vunpack.c.h.b16 %v517
    %v2319 = vunpack.c.l.b16 %v518
    %v2320 = vunpack.c.h.b16 %v518
    %v2321 = vunpack.c.l.b16 %v519
    %v2322 = vunpack.c.h.b16 %v519
    %v2323 = vunpack.c.l.b16 %v520
    %v2324 = vunpack.c.h.b16 %v520
    %v2325 = vunpack.c.l.b16 %v521
    %v2326 = vunpack.c.h.b16 %v521
    %v2327 = vunpack.c.l.b16 %v522
    %v2328 = vunpack.c.h.b16 %v522
    %v2329 = vunpack.c.l.b16 %v523
    %v2330 = vunpack.c.h.b16 %v523
    %v2331 = vunpack.c.l.b16 %v524
    %v2332 = vunpack.c.h.b16 %v524
    %v2333 = vunpack.c.l.b16 %v525
    %v2334 = vunpack.c.h.b16 %v525
    %v2335 = vunpack.c.l.b16 %v526
    %v2336 = vunpack.c.h.b16 %v526
    %v2337 = vunpack.c.l.b16 %v527
    %v2338 = vunpack.c.h.b16 %v527
    %v2339 = vunpack.c.l.b16 %v528
    %v2340 = vunpack.c.h.b16 %v528
    %v2341 = vunpack.c.l.b16 %v529
    %v2342 = vunpack.c.h.b16 %v529
    %v2343 = vunpack.c.l.b16 %v530
    %v2344 = vunpack.c.h.b16 %v530
    %v2345 = vunpack.c.l.b16 %v531
    %v2346 = vunpack.c.h.b16 %v531
    %v2347 = vunpack.c.l.b16 %v532
    %v2348 = vunpack.c.h.b16 %v532
    %v2349 = vunpack.c.l.b16 %v533
    %v2350 = vunpack.c.h.b16 %v533
    %v2351 = vunpack.c.l.b16 %v534
    %v2352 = vunpack.c.h.b16 %v534
    %v2353 = vunpack.c.l.b16 %v535
    %v2354 = vunpack.c.h.b16 %v535
    %v2355 = vunpack.c.l.b16 %v536
    %v2356 = vunpack.c.h.b16 %v536
    %v2357 = vunpack.c.l.b16 %v537
    %v2358 = vunpack.c.h.b16 %v537
    %v2359 = vunpack.c.l.b16 %v538
    %v2360 = vunpack.c.h.b16 %v538
    %v2361 = vunpack.c.l.b16 %v539
    %v2362 = vunpack.c.h.b16 %v539
    %v2363 = vunpack.c.l.b16 %v540
    %v2364 = vunpack.c.h.b16 %v540
    %v2365 = vunpack.c.l.b16 %v541
    %v2366 = vunpack.c.h.b16 %v541
    %v2367 = vunpack.c.l.b16 %v542
    %v2368 = vunpack.c.h.b16 %v542
    %v2369 = vunpack.c.l.b16 %v543
    %v2370 = vunpack.c.h.b16 %v543
    %v2371 = vunpack.c.l.b16 %v544
    %v2372 = vunpack.c.h.b16 %v544
    %v2373 = vunpack.c.l.b16 %v545
    %v2374 = vunpack.c.h.b16 %v545
    %v2375 = vunpack.c.l.b16 %v546
    %v2376 = vunpack.c.h.b16 %v546
    %v2377 = vunpack.c.l.b16 %v547
    %v2378 = vunpack.c.h.b16 %v547
    %v2379 = vunpack.c.l.b16 %v548
    %v2380 = vunpack.c.h.b16 %v548
    %v2381 = vunpack.c.l.b16 %v549
    %v2382 = vunpack.c.h.b16 %v549
    %v2383 = vunpack.c.l.b16 %v550
    %v2384 = vunpack.c.h.b16 %v550
    %v2385 = vunpack.c.l.b16 %v551
    %v2386 = vunpack.c.h.b16 %v551
    %v2387 = vunpack.c.l.b16 %v552
    %v2388 = vunpack.c.h.b16 %v552
    %v2389 = vunpack.c.l.b16 %v553
    %v2390 = vunpack.c.h.b16 %v553
    %v2391 = vunpack.c.l.b16 %v554
    %v2392 = vunpack.c.h.b16 %v554
    %v2393 = vunpack.c.l.b16 %v555
    %v2394 = vunpack.c.h.b16 %v555
    %v2395 = vunpack.c.l.b16 %v556
    %v2396 = vunpack.c.h.b16 %v556
    %v2397 = vunpack.c.l.b16 %v557
    %v2398 = vunpack.c.h.b16 %v557
    %v2399 = vunpack.c.l.b16 %v558
    %v2400 = vunpack.c.h.b16 %v558
    %v2401 = vunpack.c.l.b16 %v559
    %v2402 = vunpack.c.h.b16 %v559
    %v2403 = vunpack.c.l.b16 %v560
    %v2404 = vunpack.c.h.b16 %v560
    %v2405 = vunpack.c.l.b16 %v561
    %v2406 = vunpack.c.h.b16 %v561
    %v2407 = vunpack.c.l.b16 %v562
    %v2408 = vunpack.c.h.b16 %v562
    %v2409 = vunpack.c.l.b16 %v563
    %v2410 = vunpack.c.h.b16 %v563
    %v2411 = vunpack.c.l.b16 %v564
    %v2412 = vunpack.c.h.b16 %v564
    %v2413 = vunpack.c.l.b16 %v565
    %v2414 = vunpack.c.h.b16 %v565
    %v2415 = vunpack.c.l.b16 %v566
    %v2416 = vunpack.c.h.b16 %v566
    %v2417 = vunpack.c.l.b16 %v567
    %v2418 = vunpack.c.h.b16 %v567
    %v2419 = vunpack.c.l.b16 %v568
    %v2420 = vunpack.c.h.b16 %v568
    %v2421 = vunpack.c.l.b16 %v569
    %v2422 = vunpack.c.h.b16 %v569
    %v2423 = vunpack.c.l.b16 %v570
    %v2424 = vunpack.c.h.b16 %v570
    %v2425 = vunpack.c.l.b16 %v571
    %v2426 = vunpack.c.h.b16 %v571
    %v2427 = vunpack.c.l.b16 %v572
    %v2428 = vunpack.c.h.b16 %v572
    %v2429 = vunpack.c.l.b16 %v573
    %v2430 = vunpack.c.h.b16 %v573
    %v2431 = vunpack.c.l.b16 %v574
    %v2432 = vunpack.c.h.b16 %v574
    %v2433 = vunpack.c.l.b16 %v575
    %v2434 = vunpack.c.h.b16 %v575
    %v2435 = vunpack.c.l.b16 %v576
    %v2436 = vunpack.c.h.b16 %v576
    %v2437 = vunpack.c.l.b16 %v577
    %v2438 = vunpack.c.h.b16 %v577
    %v2439 = vunpack.c.l.b16 %v578
    %v2440 = vunpack.c.h.b16 %v578
    %v2441 = vunpack.c.l.b16 %v579
    %v2442 = vunpack.c.h.b16 %v579
    %v2443 = vunpack.c.l.b16 %v580
    %v2444 = vunpack.c.h.b16 %v580
    %v2445 = vunpack.c.l.b16 %v581
    %v2446 = vunpack.c.h.b16 %v581
    %v2447 = vunpack.c.l.b16 %v582
    %v2448 = vunpack.c.h.b16 %v582
    %v2449 = vunpack.c.l.b16 %v583
    %v2450 = vunpack.c.h.b16 %v583
    %v2451 = vunpack.c.l.b16 %v584
    %v2452 = vunpack.c.h.b16 %v584
    %v2453 = vunpack.c.l.b16 %v585
    %v2454 = vunpack.c.h.b16 %v585
    %v2455 = vunpack.c.l.b16 %v586
    %v2456 = vunpack.c.h.b16 %v586
    %v2457 = vunpack.c.l.b16 %v587
    %v2458 = vunpack.c.h.b16 %v587
    %v2459 = vunpack.c.l.b16 %v588
    %v2460 = vunpack.c.h.b16 %v588
    %v2461 = vunpack.c.l.b16 %v589
    %v2462 = vunpack.c.h.b16 %v589
    %v2463 = vunpack.c.l.b16 %v590
    %v2464 = vunpack.c.h.b16 %v590
    %v2465 = vunpack.c.l.b16 %v591
    %v2466 = vunpack.c.h.b16 %v591
    %v2467 = vunpack.c.l.b16 %v592
    %v2468 = vunpack.c.h.b16 %v592
    %v2469 = vunpack.c.l.b16 %v593
    %v2470 = vunpack.c.h.b16 %v593
    %v2471 = vunpack.c.l.b16 %v594
    %v2472 = vunpack.c.h.b16 %v594
    %v2473 = vunpack.c.l.b16 %v595
    %v2474 = vunpack.c.h.b16 %v595
    %v2475 = vunpack.c.l.b16 %v596
    %v2476 = vunpack.c.h.b16 %v596
    %v2477 = vunpack.c.l.b16 %v597
    %v2478 = vunpack.c.h.b16 %v597
    %v2479 = vunpack.c.l.b16 %v598
    %v2480 = vunpack.c.h.b16 %v598
    %v2481 = vunpack.c.l.b16 %v599
    %v2482 = vunpack.c.h.b16 %v599
    %v2483 = vunpack.c.l.b16 %v600
    %v2484 = vunpack.c.h.b16 %v600
    %v2485 = vunpack.c.l.b16 %v601
    %v2486 = vunpack.c.h.b16 %v601
    %v2487 = vunpack.c.l.b16 %v602
    %v2488 = vunpack.c.h.b16 %v602
    %v2489 = vunpack.c.l.b16 %v603
    %v2490 = vunpack.c.h.b16 %v603
    %v2491 = vunpack.c.l.b16 %v604
    %v2492 = vunpack.c.h.b16 %v604
    %v2493 = vunpack.c.l.b16 %v605
    %v2494 = vunpack.c.h.b16 %v605
    %v2495 = vunpack.c.l.b16 %v606
    %v2496 = vunpack.c.h.b16 %v606
    %v2497 = vunpack.c.l.b16 %v607
    %v2498 = vunpack.c.h.b16 %v607
    %v2499 = vunpack.c.l.b16 %v608
    %v2500 = vunpack.c.h.b16 %v608
    %v2501 = vunpack.c.l.b16 %v609
    %v2502 = vunpack.c.h.b16 %v609
    %v2503 = vunpack.c.l.b16 %v610
    %v2504 = vunpack.c.h.b16 %v610
    %v2505 = vunpack.c.l.b16 %v611
    %v2506 = vunpack.c.h.b16 %v611
    %v2507 = vunpack.c.l.b16 %v612
    %v2508 = vunpack.c.h.b16 %v612
    %v2509 = vunpack.c.l.b16 %v613
    %v2510 = vunpack.c.h.b16 %v613
    %v2511 = vunpack.c.l.b16 %v614
    %v2512 = vunpack.c.h.b16 %v614
    %v2513 = vunpack.c.l.b16 %v615
    %v2514 = vunpack.c.h.b16 %v615
    %v2515 = vunpack.c.l.b16 %v616
    %v2516 = vunpack.c.h.b16 %v616
    %v2517 = vunpack.c.l.b16 %v617
    %v2518 = vunpack.c.h.b16 %v617
    %v2519 = vunpack.c.l.b16 %v618
    %v2520 = vunpack.c.h.b16 %v618
    %v2521 = vunpack.c.l.b16 %v619
    %v2522 = vunpack.c.h.b16 %v619
    %v2523 = vunpack.c.l.b16 %v620
    %v2524 = vunpack.c.h.b16 %v620
    %v2525 = vunpack.c.l.b16 %v621
    %v2526 = vunpack.c.h.b16 %v621
    %v2527 = vunpack.c.l.b16 %v622
    %v2528 = vunpack.c.h.b16 %v622
    %v2529 = vunpack.c.l.b16 %v623
    %v2530 = vunpack.c.h.b16 %v623
    %v2531 = vunpack.c.l.b16 %v624
    %v2532 = vunpack.c.h.b16 %v624
    %v2533 = vunpack.c.l.b16 %v625
    %v2534 = vunpack.c.h.b16 %v625
    %v2535 = vunpack.c.l.b16 %v626
    %v2536 = vunpack.c.h.b16 %v626
    %v2537 = vunpack.c.l.b16 %v627
    %v2538 = vunpack.c.h.b16 %v627
    %v2539 = vunpack.c.l.b16 %v628
    %v2540 = vunpack.c.h.b16 %v628
    %v2541 = vunpack.c.l.b16 %v629
    %v2542 = vunpack.c.h.b16 %v629
    %v2543 = vunpack.c.l.b16 %v630
    %v2544 = vunpack.c.h.b16 %v630
    %v2545 = vunpack.c.l.b16 %v631
    %v2546 = vunpack.c.h.b16 %v631
    %v2547 = vunpack.c.l.b16 %v632
    %v2548 = vunpack.c.h.b16 %v632
    %v2549 = vunpack.c.l.b16 %v633
    %v2550 = vunpack.c.h.b16 %v633
    %v2551 = vunpack.c.l.b16 %v634
    %v2552 = vunpack.c.h.b16 %v634
    %v2553 = vunpack.c.l.b16 %v635
    %v2554 = vunpack.c.h.b16 %v635
    %v2555 = vunpack.c.l.b16 %v636
    %v2556 = vunpack.c.h.b16 %v636
    %v2557 = vunpack.c.l.b16 %v637
    %v2558 = vunpack.c.h.b16 %v637
    %v2559 = vunpack.c.l.b16 %v638
    %v2560 = vunpack.c.h.b16 %v638
    %v2561 = vunpack.c.l.b16 %v639
    %v2562 = vunpack.c.h.b16 %v639
    %v2563 = vunpack.c.l.b16 %v640
    %v2564 = vunpack.c.h.b16 %v640
    %v2565 = vunpack.c.l.b16 %v641
    %v2566 = vunpack.c.h.b16 %v641
    %v2567 = vunpack.c.l.b16 %v642
    %v2568 = vunpack.c.h.b16 %v642
    %v2569 = vunpack.c.l.b16 %v643
    %v2570 = vunpack.c.h.b16 %v643
    %v2571 = vunpack.c.l.b16 %v644
    %v2572 = vunpack.c.h.b16 %v644
    %v2573 = vunpack.c.l.b16 %v645
    %v2574 = vunpack.c.h.b16 %v645
    %v2575 = vunpack.c.l.b16 %v646
    %v2576 = vunpack.c.h.b16 %v646
    %v2577 = vunpack.c.l.b16 %v647
    %v2578 = vunpack.c.h.b16 %v647
    %v2579 = vunpack.c.l.b16 %v648
    %v2580 = vunpack.c.h.b16 %v648
    %v2581 = vunpack.c.l.b16 %v649
    %v2582 = vunpack.c.h.b16 %v649
    %v2583 = vunpack.c.l.b16 %v650
    %v2584 = vunpack.c.h.b16 %v650
    %v2585 = vunpack.c.l.b16 %v651
    %v2586 = vunpack.c.h.b16 %v651
    %v2587 = vunpack.c.l.b16 %v652
    %v2588 = vunpack.c.h.b16 %v652
    %v2589 = vunpack.c.l.b16 %v653
    %v2590 = vunpack.c.h.b16 %v653
    %v2591 = vunpack.c.l.b16 %v654
    %v2592 = vunpack.c.h.b16 %v654
    %v2593 = vunpack.c.l.b16 %v655
    %v2594 = vunpack.c.h.b16 %v655
    %v2595 = vunpack.c.l.b16 %v656
    %v2596 = vunpack.c.h.b16 %v656
    %v2597 = vunpack.c.l.b16 %v657
    %v2598 = vunpack.c.h.b16 %v657
    %v2599 = vunpack.c.l.b16 %v658
    %v2600 = vunpack.c.h.b16 %v658
    %v2601 = vunpack.c.l.b16 %v659
    %v2602 = vunpack.c.h.b16 %v659
    %v2603 = vunpack.c.l.b16 %v660
    %v2604 = vunpack.c.h.b16 %v660
    %v2605 = vunpack.c.l.b16 %v661
    %v2606 = vunpack.c.h.b16 %v661
    %v2607 = vunpack.c.l.b16 %v662
    %v2608 = vunpack.c.h.b16 %v662
    %v2609 = vunpack.c.l.b16 %v663
    %v2610 = vunpack.c.h.b16 %v663
    %v2611 = vunpack.c.l.b16 %v664
    %v2612 = vunpack.c.h.b16 %v664
    %v2613 = vunpack.c.l.b16 %v665
    %v2614 = vunpack.c.h.b16 %v665
    %v2615 = vunpack.c.l.b16 %v666
    %v2616 = vunpack.c.h.b16 %v666
    %v2617 = vunpack.c.l.b16 %v667
    %v2618 = vunpack.c.h.b16 %v667
    %v2619 = vunpack.c.l.b16 %v668
    %v2620 = vunpack.c.h.b16 %v668
    %v2621 = vunpack.c.l.b16 %v669
    %v2622 = vunpack.c.h.b16 %v669
    %v2623 = vunpack.c.l.b16 %v670
    %v2624 = vunpack.c.h.b16 %v670
    %v2625 = vunpack.c.l.b16 %v671
    %v2626 = vunpack.c.h.b16 %v671
    %v2627 = vunpack.c.l.b16 %v672
    %v2628 = vunpack.c.h.b16 %v672
    %v2629 = vunpack.c.l.b16 %v673
    %v2630 = vunpack.c.h.b16 %v673
    %v2631 = vunpack.c.l.b16 %v674
    %v2632 = vunpack.c.h.b16 %v674
    %v2633 = vunpack.c.l.b16 %v675
    %v2634 = vunpack.c.h.b16 %v675
    %v2635 = vunpack.c.l.b16 %v676
    %v2636 = vunpack.c.h.b16 %v676
    %v2637 = vunpack.c.l.b16 %v677
    %v2638 = vunpack.c.h.b16 %v677
    %v2639 = vunpack.c.l.b16 %v678
    %v2640 = vunpack.c.h.b16 %v678
    %v2641 = vunpack.c.l.b16 %v679
    %v2642 = vunpack.c.h.b16 %v679
    %v2643 = vunpack.c.l.b16 %v680
    %v2644 = vunpack.c.h.b16 %v680
    %v2645 = vunpack.c.l.b16 %v681
    %v2646 = vunpack.c.h.b16 %v681
    %v2647 = vunpack.c.l.b16 %v682
    %v2648 = vunpack.c.h.b16 %v682
    %v2649 = vunpack.c.l.b16 %v683
    %v2650 = vunpack.c.h.b16 %v683
    %v2651 = vunpack.c.l.b16 %v684
    %v2652 = vunpack.c.h.b16 %v684
    %v2653 = vunpack.c.l.b16 %v685
    %v2654 = vunpack.c.h.b16 %v685
    %v2655 = vunpack.c.l.b16 %v686
    %v2656 = vunpack.c.h.b16 %v686
    %v2657 = vunpack.c.l.b16 %v687
    %v2658 = vunpack.c.h.b16 %v687
    %v2659 = vunpack.c.l.b16 %v688
    %v2660 = vunpack.c.h.b16 %v688
    %v2661 = vunpack.c.l.b16 %v689
    %v2662 = vunpack.c.h.b16 %v689
    %v2663 = vunpack.c.l.b16 %v690
    %v2664 = vunpack.c.h.b16 %v690
    %v2665 = vunpack.c.l.b16 %v691
    %v2666 = vunpack.c.h.b16 %v691
    %v2667 = vunpack.c.l.b16 %v692
    %v2668 = vunpack.c.h.b16 %v692
    %v2669 = vunpack.c.l.b16 %v693
    %v2670 = vunpack.c.h.b16 %v693
    %v2671 = vunpack.c.l.b16 %v694
    %v2672 = vunpack.c.h.b16 %v694
    %v2673 = vunpack.c.l.b16 %v695
    %v2674 = vunpack.c.h.b16 %v695
    %v2675 = vunpack.c.l.b16 %v696
    %v2676 = vunpack.c.h.b16 %v696
    %v2677 = vunpack.c.l.b16 %v697
    %v2678 = vunpack.c.h.b16 %v697
    %v2679 = vunpack.c.l.b16 %v698
    %v2680 = vunpack.c.h.b16 %v698
    %v2681 = vunpack.c.l.b16 %v699
    %v2682 = vunpack.c.h.b16 %v699
    %v2683 = vunpack.c.l.b16 %v700
    %v2684 = vunpack.c.h.b16 %v700
    %v2685 = vunpack.c.l.b16 %v701
    %v2686 = vunpack.c.h.b16 %v701
    %v2687 = vunpack.c.l.b16 %v702
    %v2688 = vunpack.c.h.b16 %v702
    %v2689 = vunpack.c.l.b16 %v703
    %v2690 = vunpack.c.h.b16 %v703
    %v2691 = vunpack.c.l.b16 %v704
    %v2692 = vunpack.c.h.b16 %v704
    %v2693 = vunpack.c.l.b16 %v705
    %v2694 = vunpack.c.h.b16 %v705
    %v2695 = vunpack.c.l.b16 %v706
    %v2696 = vunpack.c.h.b16 %v706
    %v2697 = vunpack.c.l.b16 %v707
    %v2698 = vunpack.c.h.b16 %v707
    %v2699 = vunpack.c.l.b16 %v708
    %v2700 = vunpack.c.h.b16 %v708
    %v2701 = vunpack.c.l.b16 %v709
    %v2702 = vunpack.c.h.b16 %v709
    %v2703 = vunpack.c.l.b16 %v710
    %v2704 = vunpack.c.h.b16 %v710
    %v2705 = vunpack.c.l.b16 %v711
    %v2706 = vunpack.c.h.b16 %v711
    %v2707 = vunpack.c.l.b16 %v712
    %v2708 = vunpack.c.h.b16 %v712
    %v2709 = vunpack.c.l.b16 %v713
    %v2710 = vunpack.c.h.b16 %v713
    %v2711 = vunpack.c.l.b16 %v714
    %v2712 = vunpack.c.h.b16 %v714
    %v2713 = vunpack.c.l.b16 %v715
    %v2714 = vunpack.c.h.b16 %v715
    %v2715 = vunpack.c.l.b16 %v716
    %v2716 = vunpack.c.h.b16 %v716
    %v2717 = vunpack.c.l.b16 %v717
    %v2718 = vunpack.c.h.b16 %v717
    %v2719 = vunpack.c.l.b16 %v718
    %v2720 = vunpack.c.h.b16 %v718
    %v2721 = vpack.c.b16 %v1451, %v1441
    %v2722 = vpack.c.b16 %v1452, %v1442
    %v2723 = vpack.c.b16 %v1453, %v1443
    %v2724 = vpack.c.b16 %v1454, %v1444
    %v2725 = vpack.c.b16 %v1455, %v1445
    %v2726 = vpack.c.b16 %v1456, %v1446
    %v2727 = vpack.c.b16 %v1457, %v1447
    %v2728 = vpack.c.b16 %v1458, %v1448
    %v2729 = vpack.c.b16 %v1459, %v1449
    %v2730 = vpack.c.b16 %v1460, %v1450
    %v2731 = vpack.c.b16 %v1471, %v1461
    %v2732 = vpack.c.b16 %v1472, %v1462
    %v2733 = vpack.c.b16 %v1473, %v1463
    %v2734 = vpack.c.b16 %v1474, %v1464
    %v2735 = vpack.c.b16 %v1475, %v1465
    %v2736 = vpack.c.b16 %v1476, %v1466
    %v2737 = vpack.c.b16 %v1477, %v1467
    %v2738 = vpack.c.b16 %v1478, %v1468
    %v2739 = vpack.c.b16 %v1479, %v1469
    %v2740 = vpack.c.b16 %v1480, %v1470
    %v2741 = vpack.c.b16 %v1491, %v1481
    %v2742 = vpack.c.b16 %v1492, %v1482
    %v2743 = vpack.c.b16 %v1493, %v1483
    %v2744 = vpack.c.b16 %v1494, %v1484
    %v2745 = vpack.c.b16 %v1495, %v1485
    %v2746 = vpack.c.b16 %v1496, %v1486
    %v2747 = vpack.c.b16 %v1497, %v1487
    %v2748 = vpack.c.b16 %v1498, %v1488
    %v2749 = vpack.c.b16 %v1499, %v1489
    %v2750 = vpack.c.b16 %v1500, %v1490
    %v2751 = vpack.c.b16 %v1511, %v1501
    %v2752 = vpack.c.b16 %v1512, %v1502
    %v2753 = vpack.c.b16 %v1513, %v1503
    %v2754 = vpack.c.b16 %v1514, %v1504
    %v2755 = vpack.c.b16 %v1515, %v1505
    %v2756 = vpack.c.b16 %v1516, %v1506
    %v2757 = vpack.c.b16 %v1517, %v1507
    %v2758 = vpack.c.b16 %v1518, %v1508
    %v2759 = vpack.c.b16 %v1519, %v1509
    %v2760 = vpack.c.b16 %v1520, %v1510
    %v2761 = vpack.c.b16 %v1531, %v1521
    %v2762 = vpack.c.b16 %v1532, %v1522
    %v2763 = vpack.c.b16 %v1533, %v1523
    %v2764 = vpack.c.b16 %v1534, %v1524
    %v2765 = vpack.c.b16 %v1535, %v1525
    %v2766 = vpack.c.b16 %v1536, %v1526
    %v2767 = vpack.c.b16 %v1537, %v1527
    %v2768 = vpack.c.b16 %v1538, %v1528
    %v2769 = vpack.c.b16 %v1539, %v1529
    %v2770 = vpack.c.b16 %v1540, %v1530
    %v2771 = vpack.c.b16 %v1551, %v1541
    %v2772 = vpack.c.b16 %v1552, %v1542
    %v2773 = vpack.c.b16 %v1553, %v1543
    %v2774 = vpack.c.b16 %v1554, %v1544
    %v2775 = vpack.c.b16 %v1555, %v1545
    %v2776 = vpack.c.b16 %v1556, %v1546
    %v2777 = vpack.c.b16 %v1557, %v1547
    %v2778 = vpack.c.b16 %v1558, %v1548
    %v2779 = vpack.c.b16 %v1559, %v1549
    %v2780 = vpack.c.b16 %v1560, %v1550
    %v2781 = vpack.c.b16 %v1571, %v1561
    %v2782 = vpack.c.b16 %v1572, %v1562
    %v2783 = vpack.c.b16 %v1573, %v1563
    %v2784 = vpack.c.b16 %v1574, %v1564
    %v2785 = vpack.c.b16 %v1575, %v1565
    %v2786 = vpack.c.b16 %v1576, %v1566
    %v2787 = vpack.c.b16 %v1577, %v1567
    %v2788 = vpack.c.b16 %v1578, %v1568
    %v2789 = vpack.c.b16 %v1579, %v1569
    %v2790 = vpack.c.b16 %v1580, %v1570
    %v2791 = vpack.c.b16 %v1591, %v1581
    %v2792 = vpack.c.b16 %v1592, %v1582
    %v2793 = vpack.c.b16 %v1593, %v1583
    %v2794 = vpack.c.b16 %v1594, %v1584
    %v2795 = vpack.c.b16 %v1595, %v1585
    %v2796 = vpack.c.b16 %v1596, %v1586
    %v2797 = vpack.c.b16 %v1597, %v1587
    %v2798 = vpack.c.b16 %v1598, %v1588
    %v2799 = vpack.c.b16 %v1599, %v1589
    %v2800 = vpack.c.b16 %v1600, %v1590
    %v2801 = vpack.c.b16 %v1611, %v1601
    %v2802 = vpack.c.b16 %v1612, %v1602
    %v2803 = vpack.c.b16 %v1613, %v1603
    %v2804 = vpack.c.b16 %v1614, %v1604
    %v2805 = vpack.c.b16 %v1615, %v1605
    %v2806 = vpack.c.b16 %v1616, %v1606
    %v2807 = vpack.c.b16 %v1617, %v1607
    %v2808 = vpack.c.b16 %v1618, %v1608
    %v2809 = vpack.c.b16 %v1619, %v1609
    %v2810 = vpack.c.b16 %v1620, %v1610
    %v2811 = vpack.c.b16 %v1631, %v1621
    %v2812 = vpack.c.b16 %v1632, %v1622
    %v2813 = vpack.c.b16 %v1633, %v1623
    %v2814 = vpack.c.b16 %v1634, %v1624
    %v2815 = vpack.c.b16 %v1635, %v1625
    %v2816 = vpack.c.b16 %v1636, %v1626
    %v2817 = vpack.c.b16 %v1637, %v1627
    %v2818 = vpack.c.b16 %v1638, %v1628
    %v2819 = vpack.c.b16 %v1639, %v1629
    %v2820 = vpack.c.b16 %v1640, %v1630
    %v2821 = vpack.c.b16 %v1651, %v1641
    %v2822 = vpack.c.b16 %v1652, %v1642
    %v2823 = vpack.c.b16 %v1653, %v1643
    %v2824 = vpack.c.b16 %v1654, %v1644
    %v2825 = vpack.c.b16 %v1655, %v1645
    %v2826 = vpack.c.b16 %v1656, %v1646
    %v2827 = vpack.c.b16 %v1657, %v1647
    %v2828 = vpack.c.b16 %v1658, %v1648
    %v2829 = vpack.c.b16 %v1659, %v1649
    %v2830 = vpack.c.b16 %v1660, %v1650
    %v2831 = vpack.c.b16 %v1671, %v1661
    %v2832 = vpack.c.b16 %v1672, %v1662
    %v2833 = vpack.c.b16 %v1673, %v1663
    %v2834 = vpack.c.b16 %v1674, %v1664
    %v2835 = vpack.c.b16 %v1675, %v1665
    %v2836 = vpack.c.b16 %v1676, %v1666
    %v2837 = vpack.c.b16 %v1677, %v1667
    %v2838 = vpack.c.b16 %v1678, %v1668
    %v2839 = vpack.c.b16 %v1679, %v1669
    %v2840 = vpack.c.b16 %v1680, %v1670
    %v2841 = vpack.c.b16 %v1691, %v1681
    %v2842 = vpack.c.b16 %v1692, %v1682
    %v2843 = vpack.c.b16 %v1693, %v1683
    %v2844 = vpack.c.b16 %v1694, %v1684
    %v2845 = vpack.c.b16 %v1695, %v1685
    %v2846 = vpack.c.b16 %v1696, %v1686
    %v2847 = vpack.c.b16 %v1697, %v1687
    %v2848 = vpack.c.b16 %v1698, %v1688
    %v2849 = vpack.c.b16 %v1699, %v1689
    %v2850 = vpack.c.b16 %v1700, %v1690
    %v2851 = vpack.c.b16 %v1711, %v1701
    %v2852 = vpack.c.b16 %v1712, %v1702
    %v2853 = vpack.c.b16 %v1713, %v1703
    %v2854 = vpack.c.b16 %v1714, %v1704
    %v2855 = vpack.c.b16 %v1715, %v1705
    %v2856 = vpack.c.b16 %v1716, %v1706
    %v2857 = vpack.c.b16 %v1717, %v1707
    %v2858 = vpack.c.b16 %v1718, %v1708
    %v2859 = vpack.c.b16 %v1719, %v1709
    %v2860 = vpack.c.b16 %v1720, %v1710
    %v2861 = vpack.c.b16 %v1731, %v1721
    %v2862 = vpack.c.b16 %v1732, %v1722
    %v2863 = vpack.c.b16 %v1733, %v1723
    %v2864 = vpack.c.b16 %v1734, %v1724
    %v2865 = vpack.c.b16 %v1735, %v1725
    %v2866 = vpack.c.b16 %v1736, %v1726
    %v2867 = vpack.c.b16 %v1737, %v1727
    %v2868 = vpack.c.b16 %v1738, %v1728
    %v2869 = vpack.c.b16 %v1739, %v1729
    %v2870 = vpack.c.b16 %v1740, %v1730
    %v2871 = vpack.c.b16 %v1751, %v1741
    %v2872 = vpack.c.b16 %v1752, %v1742
    %v2873 = vpack.c.b16 %v1753, %v1743
    %v2874 = vpack.c.b16 %v1754, %v1744
    %v2875 = vpack.c.b16 %v1755, %v1745
    %v2876 = vpack.c.b16 %v1756, %v1746
    %v2877 = vpack.c.b16 %v1757, %v1747
    %v2878 = vpack.c.b16 %v1758, %v1748
    %v2879 = vpack.c.b16 %v1759, %v1749
    %v2880 = vpack.c.b16 %v1760, %v1750
    %v2881 = vpack.c.b16 %v1771, %v1761
    %v2882 = vpack.c.b16 %v1772, %v1762
    %v2883 = vpack.c.b16 %v1773, %v1763
    %v2884 = vpack.c.b16 %v1774, %v1764
    %v2885 = vpack.c.b16 %v1775, %v1765
    %v2886 = vpack.c.b16 %v1776, %v1766
    %v2887 = vpack.c.b16 %v1777, %v1767
    %v2888 = vpack.c.b16 %v1778, %v1768
    %v2889 = vpack.c.b16 %v1779, %v1769
    %v2890 = vpack.c.b16 %v1780, %v1770
    %v2891 = vpack.c.b16 %v1791, %v1781
    %v2892 = vpack.c.b16 %v1792, %v1782
    %v2893 = vpack.c.b16 %v1793, %v1783
    %v2894 = vpack.c.b16 %v1794, %v1784
    %v2895 = vpack.c.b16 %v1795, %v1785
    %v2896 = vpack.c.b16 %v1796, %v1786
    %v2897 = vpack.c.b16 %v1797, %v1787
    %v2898 = vpack.c.b16 %v1798, %v1788
    %v2899 = vpack.c.b16 %v1799, %v1789
    %v2900 = vpack.c.b16 %v1800, %v1790
    %v2901 = vpack.c.b16 %v1811, %v1801
    %v2902 = vpack.c.b16 %v1812, %v1802
    %v2903 = vpack.c.b16 %v1813, %v1803
    %v2904 = vpack.c.b16 %v1814, %v1804
    %v2905 = vpack.c.b16 %v1815, %v1805
    %v2906 = vpack.c.b16 %v1816, %v1806
    %v2907 = vpack.c.b16 %v1817, %v1807
    %v2908 = vpack.c.b16 %v1818, %v1808
    %v2909 = vpack.c.b16 %v1819, %v1809
    %v2910 = vpack.c.b16 %v1820, %v1810
    %v2911 = vpack.c.b16 %v1831, %v1821
    %v2912 = vpack.c.b16 %v1832, %v1822
    %v2913 = vpack.c.b16 %v1833, %v1823
    %v2914 = vpack.c.b16 %v1834, %v1824
    %v2915 = vpack.c.b16 %v1835, %v1825
    %v2916 = vpack.c.b16 %v1836, %v1826
    %v2917 = vpack.c.b16 %v1837, %v1827
    %v2918 = vpack.c.b16 %v1838, %v1828
    %v2919 = vpack.c.b16 %v1839, %v1829
    %v2920 = vpack.c.b16 %v1840, %v1830
    %v2921 = vpack.c.b16 %v1851, %v1841
    %v2922 = vpack.c.b16 %v1852, %v1842
    %v2923 = vpack.c.b16 %v1853, %v1843
    %v2924 = vpack.c.b16 %v1854, %v1844
    %v2925 = vpack.c.b16 %v1855, %v1845
    %v2926 = vpack.c.b16 %v1856, %v1846
    %v2927 = vpack.c.b16 %v1857, %v1847
    %v2928 = vpack.c.b16 %v1858, %v1848
    %v2929 = vpack.c.b16 %v1859, %v1849
    %v2930 = vpack.c.b16 %v1860, %v1850
    %v2931 = vpack.c.b16 %v1871, %v1861
    %v2932 = vpack.c.b16 %v1872, %v1862
    %v2933 = vpack.c.b16 %v1873, %v1863
    %v2934 = vpack.c.b16 %v1874, %v1864
    %v2935 = vpack.c.b16 %v1875, %v1865
    %v2936 = vpack.c.b16 %v1876, %v1866
    %v2937 = vpack.c.b16 %v1877, %v1867
    %v2938 = vpack.c.b16 %v1878, %v1868
    %v2939 = vpack.c.b16 %v1879, %v1869
    %v2940 = vpack.c.b16 %v1880, %v1870
    %v2941 = vpack.c.b16 %v1891, %v1881
    %v2942 = vpack.c.b16 %v1892, %v1882
    %v2943 = vpack.c.b16 %v1893, %v1883
    %v2944 = vpack.c.b16 %v1894, %v1884
    %v2945 = vpack.c.b16 %v1895, %v1885
    %v2946 = vpack.c.b16 %v1896, %v1886
    %v2947 = vpack.c.b16 %v1897, %v1887
    %v2948 = vpack.c.b16 %v1898, %v1888
    %v2949 = vpack.c.b16 %v1899, %v1889
    %v2950 = vpack.c.b16 %v1900, %v1890
    %v2951 = vpack.c.b16 %v1911, %v1901
    %v2952 = vpack.c.b16 %v1912, %v1902
    %v2953 = vpack.c.b16 %v1913, %v1903
    %v2954 = vpack.c.b16 %v1914, %v1904
    %v2955 = vpack.c.b16 %v1915, %v1905
    %v2956 = vpack.c.b16 %v1916, %v1906
    %v2957 = vpack.c.b16 %v1917, %v1907
    %v2958 = vpack.c.b16 %v1918, %v1908
    %v2959 = vpack.c.b16 %v1919, %v1909
    %v2960 = vpack.c.b16 %v1920, %v1910
    %v2961 = vpack.c.b16 %v1931, %v1921
    %v2962 = vpack.c.b16 %v1932, %v1922
    %v2963 = vpack.c.b16 %v1933, %v1923
    %v2964 = vpack.c.b16 %v1934, %v1924
    %v2965 = vpack.c.b16 %v1935, %v1925
    %v2966 = vpack.c.b16 %v1936, %v1926
    %v2967 = vpack.c.b16 %v1937, %v1927
    %v2968 = vpack.c.b16 %v1938, %v1928
    %v2969 = vpack.c.b16 %v1939, %v1929
    %v2970 = vpack.c.b16 %v1940, %v1930
    %v2971 = vpack.c.b16 %v1951, %v1941
    %v2972 = vpack.c.b16 %v1952, %v1942
    %v2973 = vpack.c.b16 %v1953, %v1943
    %v2974 = vpack.c.b16 %v1954, %v1944
    %v2975 = vpack.c.b16 %v1955, %v1945
    %v2976 = vpack.c.b16 %v1956, %v1946
    %v2977 = vpack.c.b16 %v1957, %v1947
    %v2978 = vpack.c.b16 %v1958, %v1948
    %v2979 = vpack.c.b16 %v1959, %v1949
    %v2980 = vpack.c.b16 %v1960, %v1950
    %v2981 = vpack.c.b16 %v1971, %v1961
    %v2982 = vpack.c.b16 %v1972, %v1962
    %v2983 = vpack.c.b16 %v1973, %v1963
    %v2984 = vpack.c.b16 %v1974, %v1964
    %v2985 = vpack.c.b16 %v1975, %v1965
    %v2986 = vpack.c.b16 %v1976, %v1966
    %v2987 = vpack.c.b16 %v1977, %v1967
    %v2988 = vpack.c.b16 %v1978, %v1968
    %v2989 = vpack.c.b16 %v1979, %v1969
    %v2990 = vpack.c.b16 %v1980, %v1970
    %v2991 = vpack.c.b16 %v1991, %v1981
    %v2992 = vpack.c.b16 %v1992, %v1982
    %v2993 = vpack.c.b16 %v1993, %v1983
    %v2994 = vpack.c.b16 %v1994, %v1984
    %v2995 = vpack.c.b16 %v1995, %v1985
    %v2996 = vpack.c.b16 %v1996, %v1986
    %v2997 = vpack.c.b16 %v1997, %v1987
    %v2998 = vpack.c.b16 %v1998, %v1988
    %v2999 = vpack.c.b16 %v1999, %v1989
    %v3000 = vpack.c.b16 %v2000, %v1990
    %v3001 = vpack.c.b16 %v2011, %v2001
    %v3002 = vpack.c.b16 %v2012, %v2002
    %v3003 = vpack.c.b16 %v2013, %v2003
    %v3004 = vpack.c.b16 %v2014, %v2004
    %v3005 = vpack.c.b16 %v2015, %v2005
    %v3006 = vpack.c.b16 %v2016, %v2006
    %v3007 = vpack.c.b16 %v2017, %v2007
    %v3008 = vpack.c.b16 %v2018, %v2008
    %v3009 = vpack.c.b16 %v2019, %v2009
    %v3010 = vpack.c.b16 %v2020, %v2010
    %v3011 = vpack.c.b16 %v2031, %v2021
    %v3012 = vpack.c.b16 %v2032, %v2022
    %v3013 = vpack.c.b16 %v2033, %v2023
    %v3014 = vpack.c.b16 %v2034, %v2024
    %v3015 = vpack.c.b16 %v2035, %v2025
    %v3016 = vpack.c.b16 %v2036, %v2026
    %v3017 = vpack.c.b16 %v2037, %v2027
    %v3018 = vpack.c.b16 %v2038, %v2028
    %v3019 = vpack.c.b16 %v2039, %v2029
    %v3020 = vpack.c.b16 %v2040, %v2030
    %v3021 = vpack.c.b16 %v2051, %v2041
    %v3022 = vpack.c.b16 %v2052, %v2042
    %v3023 = vpack.c.b16 %v2053, %v2043
    %v3024 = vpack.c.b16 %v2054, %v2044
    %v3025 = vpack.c.b16 %v2055, %v2045
    %v3026 = vpack.c.b16 %v2056, %v2046
    %v3027 = vpack.c.b16 %v2057, %v2047
    %v3028 = vpack.c.b16 %v2058, %v2048
    %v3029 = vpack.c.b16 %v2059, %v2049
    %v3030 = vpack.c.b16 %v2060, %v2050
    %v3031 = vpack.c.b16 %v2071, %v2061
    %v3032 = vpack.c.b16 %v2072, %v2062
    %v3033 = vpack.c.b16 %v2073, %v2063
    %v3034 = vpack.c.b16 %v2074, %v2064
    %v3035 = vpack.c.b16 %v2075, %v2065
    %v3036 = vpack.c.b16 %v2076, %v2066
    %v3037 = vpack.c.b16 %v2077, %v2067
    %v3038 = vpack.c.b16 %v2078, %v2068
    %v3039 = vpack.c.b16 %v2079, %v2069
    %v3040 = vpack.c.b16 %v2080, %v2070
    %v3041 = vpack.c.b16 %v2091, %v2081
    %v3042 = vpack.c.b16 %v2092, %v2082
    %v3043 = vpack.c.b16 %v2093, %v2083
    %v3044 = vpack.c.b16 %v2094, %v2084
    %v3045 = vpack.c.b16 %v2095, %v2085
    %v3046 = vpack.c.b16 %v2096, %v2086
    %v3047 = vpack.c.b16 %v2097, %v2087
    %v3048 = vpack.c.b16 %v2098, %v2088
    %v3049 = vpack.c.b16 %v2099, %v2089
    %v3050 = vpack.c.b16 %v2100, %v2090
    %v3051 = vpack.c.b16 %v2111, %v2101
    %v3052 = vpack.c.b16 %v2112, %v2102
    %v3053 = vpack.c.b16 %v2113, %v2103
    %v3054 = vpack.c.b16 %v2114, %v2104
    %v3055 = vpack.c.b16 %v2115, %v2105
    %v3056 = vpack.c.b16 %v2116, %v2106
    %v3057 = vpack.c.b16 %v2117, %v2107
    %v3058 = vpack.c.b16 %v2118, %v2108
    %v3059 = vpack.c.b16 %v2119, %v2109
    %v3060 = vpack.c.b16 %v2120, %v2110
    %v3061 = vpack.c.b16 %v2131, %v2121
    %v3062 = vpack.c.b16 %v2132, %v2122
    %v3063 = vpack.c.b16 %v2133, %v2123
    %v3064 = vpack.c.b16 %v2134, %v2124
    %v3065 = vpack.c.b16 %v2135, %v2125
    %v3066 = vpack.c.b16 %v2136, %v2126
    %v3067 = vpack.c.b16 %v2137, %v2127
    %v3068 = vpack.c.b16 %v2138, %v2128
    %v3069 = vpack.c.b16 %v2139, %v2129
    %v3070 = vpack.c.b16 %v2140, %v2130
    %v3071 = vpack.c.b16 %v2151, %v2141
    %v3072 = vpack.c.b16 %v2152, %v2142
    %v3073 = vpack.c.b16 %v2153, %v2143
    %v3074 = vpack.c.b16 %v2154, %v2144
    %v3075 = vpack.c.b16 %v2155, %v2145
    %v3076 = vpack.c.b16 %v2156, %v2146
    %v3077 = vpack.c.b16 %v2157, %v2147
    %v3078 = vpack.c.b16 %v2158, %v2148
    %v3079 = vpack.c.b16 %v2159, %v2149
    %v3080 = vpack.c.b16 %v2160, %v2150
    %v3081 = vpack.c.b16 %v2171, %v2161
    %v3082 = vpack.c.b16 %v2172, %v2162
    %v3083 = vpack.c.b16 %v2173, %v2163
    %v3084 = vpack.c.b16 %v2174, %v2164
    %v3085 = vpack.c.b16 %v2175, %v2165
    %v3086 = vpack.c.b16 %v2176, %v2166
    %v3087 = vpack.c.b16 %v2177, %v2167
    %v3088 = vpack.c.b16 %v2178, %v2168
    %v3089 = vpack.c.b16 %v2179, %v2169
    %v3090 = vpack.c.b16 %v2180, %v2170
    %v3091 = vpack.c.b16 %v2191, %v2181
    %v3092 = vpack.c.b16 %v2192, %v2182
    %v3093 = vpack.c.b16 %v2193, %v2183
    %v3094 = vpack.c.b16 %v2194, %v2184
    %v3095 = vpack.c.b16 %v2195, %v2185
    %v3096 = vpack.c.b16 %v2196, %v2186
    %v3097 = vpack.c.b16 %v2197, %v2187
    %v3098 = vpack.c.b16 %v2198, %v2188
    %v3099 = vpack.c.b16 %v2199, %v2189
    %v3100 = vpack.c.b16 %v2200, %v2190
    %v3101 = vpack.c.b16 %v2211, %v2201
    %v3102 = vpack.c.b16 %v2212, %v2202
    %v3103 = vpack.c.b16 %v2213, %v2203
    %v3104 = vpack.c.b16 %v2214, %v2204
    %v3105 = vpack.c.b16 %v2215, %v2205
    %v3106 = vpack.c.b16 %v2216, %v2206
    %v3107 = vpack.c.b16 %v2217, %v2207
    %v3108 = vpack.c.b16 %v2218, %v2208
    %v3109 = vpack.c.b16 %v2219, %v2209
    %v3110 = vpack.c.b16 %v2220, %v2210
    %v3111 = vpack.c.b16 %v2231, %v2221
    %v3112 = vpack.c.b16 %v2232, %v2222
    %v3113 = vpack.c.b16 %v2233, %v2223
    %v3114 = vpack.c.b16 %v2234, %v2224
    %v3115 = vpack.c.b16 %v2235, %v2225
    %v3116 = vpack.c.b16 %v2236, %v2226
    %v3117 = vpack.c.b16 %v2237, %v2227
    %v3118 = vpack.c.b16 %v2238, %v2228
    %v3119 = vpack.c.b16 %v2239, %v2229
    %v3120 = vpack.c.b16 %v2240, %v2230
    %v3121 = vpack.c.b16 %v2251, %v2241
    %v3122 = vpack.c.b16 %v2252, %v2242
    %v3123 = vpack.c.b16 %v2253, %v2243
    %v3124 = vpack.c.b16 %v2254, %v2244
    %v3125 = vpack.c.b16 %v2255, %v2245
    %v3126 = vpack.c.b16 %v2256, %v2246
    %v3127 = vpack.c.b16 %v2257, %v2247
    %v3128 = vpack.c.b16 %v2258, %v2248
    %v3129 = vpack.c.b16 %v2259, %v2249
    %v3130 = vpack.c.b16 %v2260, %v2250
    %v3131 = vpack.c.b16 %v2271, %v2261
    %v3132 = vpack.c.b16 %v2272, %v2262
    %v3133 = vpack.c.b16 %v2273, %v2263
    %v3134 = vpack.c.b16 %v2274, %v2264
    %v3135 = vpack.c.b16 %v2275, %v2265
    %v3136 = vpack.c.b16 %v2276, %v2266
    %v3137 = vpack.c.b16 %v2277, %v2267
    %v3138 = vpack.c.b16 %v2278, %v2268
    %v3139 = vpack.c.b16 %v2279, %v2269
    %v3140 = vpack.c.b16 %v2280, %v2270
    %v3141 = vpack.c.b16 %v2291, %v2281
    %v3142 = vpack.c.b16 %v2292, %v2282
    %v3143 = vpack.c.b16 %v2293, %v2283
    %v3144 = vpack.c.b16 %v2294, %v2284
    %v3145 = vpack.c.b16 %v2295, %v2285
    %v3146 = vpack.c.b16 %v2296, %v2286
    %v3147 = vpack.c.b16 %v2297, %v2287
    %v3148 = vpack.c.b16 %v2298, %v2288
    %v3149 = vpack.c.b16 %v2299, %v2289
    %v3150 = vpack.c.b16 %v2300, %v2290
    %v3151 = vpack.c.b16 %v2311, %v2301
    %v3152 = vpack.c.b16 %v2312, %v2302
    %v3153 = vpack.c.b16 %v2313, %v2303
    %v3154 = vpack.c.b16 %v2314, %v2304
    %v3155 = vpack.c.b16 %v2315, %v2305
    %v3156 = vpack.c.b16 %v2316, %v2306
    %v3157 = vpack.c.b16 %v2317, %v2307
    %v3158 = vpack.c.b16 %v2318, %v2308
    %v3159 = vpack.c.b16 %v2319, %v2309
    %v3160 = vpack.c.b16 %v2320, %v2310
    %v3161 = vpack.c.b16 %v2331, %v2321
    %v3162 = vpack.c.b16 %v2332, %v2322
    %v3163 = vpack.c.b16 %v2333, %v2323
    %v3164 = vpack.c.b16 %v2334, %v2324
    %v3165 = vpack.c.b16 %v2335, %v2325
    %v3166 = vpack.c.b16 %v2336, %v2326
    %v3167 = vpack.c.b16 %v2337, %v2327
    %v3168 = vpack.c.b16 %v2338, %v2328
    %v3169 = vpack.c.b16 %v2339, %v2329
    %v3170 = vpack.c.b16 %v2340, %v2330
    %v3171 = vpack.c.b16 %v2351, %v2341
    %v3172 = vpack.c.b16 %v2352, %v2342
    %v3173 = vpack.c.b16 %v2353, %v2343
    %v3174 = vpack.c.b16 %v2354, %v2344
    %v3175 = vpack.c.b16 %v2355, %v2345
    %v3176 = vpack.c.b16 %v2356, %v2346
    %v3177 = vpack.c.b16 %v2357, %v2347
    %v3178 = vpack.c.b16 %v2358, %v2348
    %v3179 = vpack.c.b16 %v2359, %v2349
    %v3180 = vpack.c.b16 %v2360, %v2350
    %v3181 = vpack.c.b16 %v2371, %v2361
    %v3182 = vpack.c.b16 %v2372, %v2362
    %v3183 = vpack.c.b16 %v2373, %v2363
    %v3184 = vpack.c.b16 %v2374, %v2364
    %v3185 = vpack.c.b16 %v2375, %v2365
    %v3186 = vpack.c.b16 %v2376, %v2366
    %v3187 = vpack.c.b16 %v2377, %v2367
    %v3188 = vpack.c.b16 %v2378, %v2368
    %v3189 = vpack.c.b16 %v2379, %v2369
    %v3190 = vpack.c.b16 %v2380, %v2370
    %v3191 = vpack.c.b16 %v2391, %v2381
    %v3192 = vpack.c.b16 %v2392, %v2382
    %v3193 = vpack.c.b16 %v2393, %v2383
    %v3194 = vpack.c.b16 %v2394, %v2384
    %v3195 = vpack.c.b16 %v2395, %v2385
    %v3196 = vpack.c.b16 %v2396, %v2386
    %v3197 = vpack.c.b16 %v2397, %v2387
    %v3198 = vpack.c.b16 %v2398, %v2388
    %v3199 = vpack.c.b16 %v2399, %v2389
    %v3200 = vpack.c.b16 %v2400, %v2390
    %v3201 = vpack.c.b16 %v2411, %v2401
    %v3202 = vpack.c.b16 %v2412, %v2402
    %v3203 = vpack.c.b16 %v2413, %v2403
    %v3204 = vpack.c.b16 %v2414, %v2404
    %v3205 = vpack.c.b16 %v2415, %v2405
    %v3206 = vpack.c.b16 %v2416, %v2406
    %v3207 = vpack.c.b16 %v2417, %v2407
    %v3208 = vpack.c.b16 %v2418, %v2408
    %v3209 = vpack.c.b16 %v2419, %v2409
    %v3210 = vpack.c.b16 %v2420, %v2410
    %v3211 = vpack.c.b16 %v2431, %v2421
    %v3212 = vpack.c.b16 %v2432, %v2422
    %v3213 = vpack.c.b16 %v2433, %v2423
    %v3214 = vpack.c.b16 %v2434, %v2424
    %v3215 = vpack.c.b16 %v2435, %v2425
    %v3216 = vpack.c.b16 %v2436, %v2426
    %v3217 = vpack.c.b16 %v2437, %v2427
    %v3218 = vpack.c.b16 %v2438, %v2428
    %v3219 = vpack.c.b16 %v2439, %v2429
    %v3220 = vpack.c.b16 %v2440, %v2430
    %v3221 = vpack.c.b16 %v2451, %v2441
    %v3222 = vpack.c.b16 %v2452, %v2442
    %v3223 = vpack.c.b16 %v2453, %v2443
    %v3224 = vpack.c.b16 %v2454, %v2444
    %v3225 = vpack.c.b16 %v2455, %v2445
    %v3226 = vpack.c.b16 %v2456, %v2446
    %v3227 = vpack.c.b16 %v2457, %v2447
    %v3228 = vpack.c.b16 %v2458, %v2448
    %v3229 = vpack.c.b16 %v2459, %v2449
    %v3230 = vpack.c.b16 %v2460, %v2450
    %v3231 = vpack.c.b16 %v2471, %v2461
    %v3232 = vpack.c.b16 %v2472, %v2462
    %v3233 = vpack.c.b16 %v2473, %v2463
    %v3234 = vpack.c.b16 %v2474, %v2464
    %v3235 = vpack.c.b16 %v2475, %v2465
    %v3236 = vpack.c.b16 %v2476, %v2466
    %v3237 = vpack.c.b16 %v2477, %v2467
    %v3238 = vpack.c.b16 %v2478, %v2468
    %v3239 = vpack.c.b16 %v2479, %v2469
    %v3240 = vpack.c.b16 %v2480, %v2470
    %v3241 = vpack.c.b16 %v2491, %v2481
    %v3242 = vpack.c.b16 %v2492, %v2482
    %v3243 = vpack.c.b16 %v2493, %v2483
    %v3244 = vpack.c.b16 %v2494, %v2484
    %v3245 = vpack.c.b16 %v2495, %v2485
    %v3246 = vpack.c.b16 %v2496, %v2486
    %v3247 = vpack.c.b16 %v2497, %v2487
    %v3248 = vpack.c.b16 %v2498, %v2488
    %v3249 = vpack.c.b16 %v2499, %v2489
    %v3250 = vpack.c.b16 %v2500, %v2490
    %v3251 = vpack.c.b16 %v2511, %v2501
    %v3252 = vpack.c.b16 %v2512, %v2502
    %v3253 = vpack.c.b16 %v2513, %v2503
    %v3254 = vpack.c.b16 %v2514, %v2504
    %v3255 = vpack.c.b16 %v2515, %v2505
    %v3256 = vpack.c.b16 %v2516, %v2506
    %v3257 = vpack.c.b16 %v2517, %v2507
    %v3258 = vpack.c.b16 %v2518, %v2508
    %v3259 = vpack.c.b16 %v2519, %v2509
    %v3260 = vpack.c.b16 %v2520, %v2510
    %v3261 = vpack.c.b16 %v2531, %v2521
    %v3262 = vpack.c.b16 %v2532, %v2522
    %v3263 = vpack.c.b16 %v2533, %v2523
    %v3264 = vpack.c.b16 %v2534, %v2524
    %v3265 = vpack.c.b16 %v2535, %v2525
    %v3266 = vpack.c.b16 %v2536, %v2526
    %v3267 = vpack.c.b16 %v2537, %v2527
    %v3268 = vpack.c.b16 %v2538, %v2528
    %v3269 = vpack.c.b16 %v2539, %v2529
    %v3270 = vpack.c.b16 %v2540, %v2530
    %v3271 = vpack.c.b16 %v2551, %v2541
    %v3272 = vpack.c.b16 %v2552, %v2542
    %v3273 = vpack.c.b16 %v2553, %v2543
    %v3274 = vpack.c.b16 %v2554, %v2544
    %v3275 = vpack.c.b16 %v2555, %v2545
    %v3276 = vpack.c.b16 %v2556, %v2546
    %v3277 = vpack.c.b16 %v2557, %v2547
    %v3278 = vpack.c.b16 %v2558, %v2548
    %v3279 = vpack.c.b16 %v2559, %v2549
    %v3280 = vpack.c.b16 %v2560, %v2550
    %v3281 = vpack.c.b16 %v2571, %v2561
    %v3282 = vpack.c.b16 %v2572, %v2562
    %v3283 = vpack.c.b16 %v2573, %v2563
    %v3284 = vpack.c.b16 %v2574, %v2564
    %v3285 = vpack.c.b16 %v2575, %v2565
    %v3286 = vpack.c.b16 %v2576, %v2566
    %v3287 = vpack.c.b16 %v2577, %v2567
    %v3288 = vpack.c.b16 %v2578, %v2568
    %v3289 = vpack.c.b16 %v2579, %v2569
    %v3290 = vpack.c.b16 %v2580, %v2570
    %v3291 = vpack.c.b16 %v2591, %v2581
    %v3292 = vpack.c.b16 %v2592, %v2582
    %v3293 = vpack.c.b16 %v2593, %v2583
    %v3294 = vpack.c.b16 %v2594, %v2584
    %v3295 = vpack.c.b16 %v2595, %v2585
    %v3296 = vpack.c.b16 %v2596, %v2586
    %v3297 = vpack.c.b16 %v2597, %v2587
    %v3298 = vpack.c.b16 %v2598, %v2588
    %v3299 = vpack.c.b16 %v2599, %v2589
    %v3300 = vpack.c.b16 %v2600, %v2590
    %v3301 = vpack.c.b16 %v2611, %v2601
    %v3302 = vpack.c.b16 %v2612, %v2602
    %v3303 = vpack.c.b16 %v2613, %v2603
    %v3304 = vpack.c.b16 %v2614, %v2604
    %v3305 = vpack.c.b16 %v2615, %v2605
    %v3306 = vpack.c.b16 %v2616, %v2606
    %v3307 = vpack.c.b16 %v2617, %v2607
    %v3308 = vpack.c.b16 %v2618, %v2608
    %v3309 = vpack.c.b16 %v2619, %v2609
    %v3310 = vpack.c.b16 %v2620, %v2610
    %v3311 = vpack.c.b16 %v2631, %v2621
    %v3312 = vpack.c.b16 %v2632, %v2622
    %v3313 = vpack.c.b16 %v2633, %v2623
    %v3314 = vpack.c.b16 %v2634, %v2624
    %v3315 = vpack.c.b16 %v2635, %v2625
    %v3316 = vpack.c.b16 %v2636, %v2626
    %v3317 = vpack.c.b16 %v2637, %v2627
    %v3318 = vpack.c.b16 %v2638, %v2628
    %v3319 = vpack.c.b16 %v2639, %v2629
    %v3320 = vpack.c.b16 %v2640, %v2630
    %v3321 = vpack.c.b16 %v2651, %v2641
    %v3322 = vpack.c.b16 %v2652, %v2642
    %v3323 = vpack.c.b16 %v2653, %v2643
    %v3324 = vpack.c.b16 %v2654, %v2644
    %v3325 = vpack.c.b16 %v2655, %v2645
    %v3326 = vpack.c.b16 %v2656, %v2646
    %v3327 = vpack.c.b16 %v2657, %v2647
    %v3328 = vpack.c.b16 %v2658, %v2648
    %v3329 = vpack.c.b16 %v2659, %v2649
    %v3330 = vpack.c.b16 %v2660, %v2650
    %v3331 = vpack.c.b16 %v2671, %v2661
    %v3332 = vpack.c.b16 %v2672, %v2662
    %v3333 = vpack.c.b16 %v2673, %v2663
    %v3334 = vpack.c.b16 %v2674, %v2664
    %v3335 = vpack.c.b16 %v2675, %v2665
    %v3336 = vpack.c.b16 %v2676, %v2666
    %v3337 = vpack.c.b16 %v2677, %v2667
    %v3338 = vpack.c.b16 %v2678, %v2668
    %v3339 = vpack.c.b16 %v2679, %v2669
    %v3340 = vpack.c.b16 %v2680, %v2670
    %v3341 = vpack.c.b16 %v2691, %v2681
    %v3342 = vpack.c.b16 %v2692, %v2682
    %v3343 = vpack.c.b16 %v2693, %v2683
    %v3344 = vpack.c.b16 %v2694, %v2684
    %v3345 = vpack.c.b16 %v2695, %v2685
    %v3346 = vpack.c.b16 %v2696, %v2686
    %v3347 = vpack.c.b16 %v2697, %v2687
    %v3348 = vpack.c.b16 %v2698, %v2688
    %v3349 = vpack.c.b16 %v2699, %v2689
    %v3350 = vpack.c.b16 %v2700, %v2690
    %v3351 = vpack.c.b16 %v2711, %v2701
    %v3352 = vpack.c.b16 %v2712, %v2702
    %v3353 = vpack.c.b16 %v2713, %v2703
    %v3354 = vpack.c.b16 %v2714, %v2704
    %v3355 = vpack.c.b16 %v2715, %v2705
    %v3356 = vpack.c.b16 %v2716, %v2706
    %v3357 = vpack.c.b16 %v2717, %v2707
    %v3358 = vpack.c.b16 %v2718, %v2708
    %v3359 = vpack.c.b16 %v2719, %v2709
    %v3360 = vpack.c.b16 %v2720, %v2710
    %4001 = vmatprep.subr.bf16.mxu0 %v2722
    %4002 = vmatpush1.bf16.msra.mxu0 %v2721
    %4003 = vmatprep.subr.bf16.mxu0 %v2732
    %4004 = vmatpush1.bf16.msra.mxu0 %v2731
    %4005 = vmatprep.subr.bf16.mxu0 %v2742
    %4006 = vmatpush1.bf16.msra.mxu0 %v2741
    %4007 = vmatprep.subr.bf16.mxu0 %v2752
    %4008 = vmatpush1.bf16.msra.mxu0 %v2751
    %4009 = vmatprep.subr.bf16.mxu0 %v2762
    %4010 = vmatpush1.bf16.msra.mxu0 %v2761
    %4011 = vmatprep.subr.bf16.mxu0 %v2772
    %4012 = vmatpush1.bf16.msra.mxu0 %v2771
    %4013 = vmatprep.subr.bf16.mxu0 %v2782
    %4014 = vmatpush1.bf16.msra.mxu0 %v2781
    %4015 = vmatprep.subr.bf16.mxu0 %v2792
    %4016 = vmatpush1.bf16.msra.mxu0 %v2791
    %4017 = vmatprep.subr.bf16.mxu0 %v2802
    %4018 = vmatpush1.bf16.msra.mxu0 %v2801
    %4019 = vmatprep.subr.bf16.mxu0 %v2812
    %4020 = vmatpush1.bf16.msra.mxu0 %v2811
    %4021 = vmatprep.subr.bf16.mxu0 %v2822
    %4022 = vmatpush1.bf16.msra.mxu0 %v2821
    %4023 = vmatprep.subr.bf16.mxu0 %v2832
    %4024 = vmatpush1.bf16.msra.mxu0 %v2831
    %4025 = vmatprep.subr.bf16.mxu0 %v2842
    %4026 = vmatpush1.bf16.msra.mxu0 %v2841
    %4027 = vmatprep.subr.bf16.mxu0 %v2852
    %4028 = vmatpush1.bf16.msra.mxu0 %v2851
    %4029 = vmatprep.subr.bf16.mxu0 %v2862
    %4030 = vmatpush1.bf16.msra.mxu0 %v2861
    %4031 = vmatprep.subr.bf16.mxu0 %v2872
    %4032 = vmatpush1.bf16.msra.mxu0 %v2871
    %4033 = vmatprep.mubr.bf16.mxu0 %v786
    %4034 = vmatmul.mubr.bf16.gmra.mrb[0].mxu0 %v785
    %v4035 = vpop.f32.mrb[0].mxu0
    %v4036 = vadd.f32 %v726, %v4035
    %v4037 = vpop.f32.mrb[0].mxu0
    %v4038 = vadd.f32 %v730, %v4037
    %v4039 = vpop.f32.mrb[0].mxu0
    %v4040 = vpop.f32.mrb[0].mxu0
    %4041 = vdwg.mxu0
    %4042 = vmatprep.subr.bf16.mxu0 %v2882
    %4043 = vmatpush1.bf16.msra.mxu0 %v2881
    %4044 = vmatprep.subr.bf16.mxu0 %v2892
    %4045 = vmatpush1.bf16.msra.mxu0 %v2891
    %4046 = vmatprep.subr.bf16.mxu0 %v2902
    %4047 = vmatpush1.bf16.msra.mxu0 %v2901
    %4048 = vmatprep.subr.bf16.mxu0 %v2912
    %4049 = vmatpush1.bf16.msra.mxu0 %v2911
    %4050 = vmatprep.subr.bf16.mxu0 %v2922
    %4051 = vmatpush1.bf16.msra.mxu0 %v2921
    %4052 = vmatprep.subr.bf16.mxu0 %v2932
    %4053 = vmatpush1.bf16.msra.mxu0 %v2931
    %4054 = vmatprep.subr.bf16.mxu0 %v2942
    %4055 = vmatpush1.bf16.msra.mxu0 %v2941
    %4056 = vmatprep.subr.bf16.mxu0 %v2952
    %4057 = vmatpush1.bf16.msra.mxu0 %v2951
    %4058 = vmatprep.subr.bf16.mxu0 %v2962
    %4059 = vmatpush1.bf16.msra.mxu0 %v2961
    %4060 = vmatprep.subr.bf16.mxu0 %v2972
    %4061 = vmatpush1.bf16.msra.mxu0 %v2971
    %4062 = vmatprep.subr.bf16.mxu0 %v2982
    %4063 = vmatpush1.bf16.msra.mxu0 %v2981
    %4064 = vmatprep.subr.bf16.mxu0 %v2992
    %4065 = vmatpush1.bf16.msra.mxu0 %v2991
    %4066 = vmatprep.subr.bf16.mxu0 %v3002
    %4067 = vmatpush1.bf16.msra.mxu0 %v3001
    %4068 = vmatprep.subr.bf16.mxu0 %v3012
    %4069 = vmatpush1.bf16.msra.mxu0 %v3011
    %4070 = vmatprep.subr.bf16.mxu0 %v3022
    %4071 = vmatpush1.bf16.msra.mxu0 %v3021
    %4072 = vmatprep.subr.bf16.mxu0 %v3032
    %4073 = vmatpush1.bf16.msra.mxu0 %v3031
    %4074 = vmatprep.mubr.bf16.mxu0 %v788
    %4075 = vmatmul.mubr.bf16.gmra.mrb[0].mxu0 %v787
    %v4076 = vpop.f32.mrb[0].mxu0
    %v4077 = vadd.f32 %v4036, %v4076
    %v4078 = vpop.f32.mrb[0].mxu0
    %v4079 = vadd.f32 %v4038, %v4078
    %v4080 = vpop.f32.mrb[0].mxu0
    %v4081 = vpop.f32.mrb[0].mxu0
    %4082 = vdwg.mxu0
    %4083 = vmatprep.subr.bf16.mxu0 %v3042
    %4084 = vmatpush1.bf16.msra.mxu0 %v3041
    %4085 = vmatprep.subr.bf16.mxu0 %v3052
    %4086 = vmatpush1.bf16.msra.mxu0 %v3051
    %4087 = vmatprep.subr.bf16.mxu0 %v3062
    %4088 = vmatpush1.bf16.msra.mxu0 %v3061
    %4089 = vmatprep.subr.bf16.mxu0 %v3072
    %4090 = vmatpush1.bf16.msra.mxu0 %v3071
    %4091 = vmatprep.subr.bf16.mxu0 %v3082
    %4092 = vmatpush1.bf16.msra.mxu0 %v3081
    %4093 = vmatprep.subr.bf16.mxu0 %v3092
    %4094 = vmatpush1.bf16.msra.mxu0 %v3091
    %4095 = vmatprep.subr.bf16.mxu0 %v3102
    %4096 = vmatpush1.bf16.msra.mxu0 %v3101
    %4097 = vmatprep.subr.bf16.mxu0 %v3112
    %4098 = vmatpush1.bf16.msra.mxu0 %v3111
    %4099 = vmatprep.subr.bf16.mxu0 %v3122
    %4100 = vmatpush1.bf16.msra.mxu0 %v3121
    %4101 = vmatprep.subr.bf16.mxu0 %v3132
    %4102 = vmatpush1.bf16.msra.mxu0 %v3131
    %4103 = vmatprep.subr.bf16.mxu0 %v3142
    %4104 = vmatpush1.bf16.msra.mxu0 %v3141
    %4105 = vmatprep.subr.bf16.mxu0 %v3152
    %4106 = vmatpush1.bf16.msra.mxu0 %v3151
    %4107 = vmatprep.subr.bf16.mxu0 %v3162
    %4108 = vmatpush1.bf16.msra.mxu0 %v3161
    %4109 = vmatprep.subr.bf16.mxu0 %v3172
    %4110 = vmatpush1.bf16.msra.mxu0 %v3171
    %4111 = vmatprep.subr.bf16.mxu0 %v3182
    %4112 = vmatpush1.bf16.msra.mxu0 %v3181
    %4113 = vmatprep.subr.bf16.mxu0 %v3192
    %4114 = vmatpush1.bf16.msra.mxu0 %v3191
    %4115 = vmatprep.mubr.bf16.mxu0 %v790
    %4116 = vmatmul.mubr.bf16.gmra.mrb[0].mxu0 %v789
    %v4117 = vpop.f32.mrb[0].mxu0
    %v4118 = vadd.f32 %v4077, %v4117
    %v4119 = vpop.f32.mrb[0].mxu0
    %v4120 = vadd.f32 %v4079, %v4119
    %v4121 = vpop.f32.mrb[0].mxu0
    %v4122 = vpop.f32.mrb[0].mxu0
    %4123 = vdwg.mxu0
    %4124 = vmatprep.subr.bf16.mxu0 %v3202
    %4125 = vmatpush1.bf16.msra.mxu0 %v3201
    %4126 = vmatprep.subr.bf16.mxu0 %v3212
    %4127 = vmatpush1.bf16.msra.mxu0 %v3211
    %4128 = vmatprep.subr.bf16.mxu0 %v3222
    %4129 = vmatpush1.bf16.msra.mxu0 %v3221
    %4130 = vmatprep.subr.bf16.mxu0 %v3232
    %4131 = vmatpush1.bf16.msra.mxu0 %v3231
    %4132 = vmatprep.subr.bf16.mxu0 %v3242
    %4133 = vmatpush1.bf16.msra.mxu0 %v3241
    %4134 = vmatprep.subr.bf16.mxu0 %v3252
    %4135 = vmatpush1.bf16.msra.mxu0 %v3251
    %4136 = vmatprep.subr.bf16.mxu0 %v3262
    %4137 = vmatpush1.bf16.msra.mxu0 %v3261
    %4138 = vmatprep.subr.bf16.mxu0 %v3272
    %4139 = vmatpush1.bf16.msra.mxu0 %v3271
    %4140 = vmatprep.subr.bf16.mxu0 %v3282
    %4141 = vmatpush1.bf16.msra.mxu0 %v3281
    %4142 = vmatprep.subr.bf16.mxu0 %v3292
    %4143 = vmatpush1.bf16.msra.mxu0 %v3291
    %4144 = vmatprep.subr.bf16.mxu0 %v3302
    %4145 = vmatpush1.bf16.msra.mxu0 %v3301
    %4146 = vmatprep.subr.bf16.mxu0 %v3312
    %4147 = vmatpush1.bf16.msra.mxu0 %v3311
    %4148 = vmatprep.subr.bf16.mxu0 %v3322
    %4149 = vmatpush1.bf16.msra.mxu0 %v3321
    %4150 = vmatprep.subr.bf16.mxu0 %v3332
    %4151 = vmatpush1.bf16.msra.mxu0 %v3331
    %4152 = vmatprep.subr.bf16.mxu0 %v3342
    %4153 = vmatpush1.bf16.msra.mxu0 %v3341
    %4154 = vmatprep.subr.bf16.mxu0 %v3352
    %4155 = vmatpush1.bf16.msra.mxu0 %v3351
    %4156 = vmatprep.mubr.bf16.mxu0 %v792
    %4157 = vmatmul.mubr.bf16.gmra.mrb[0].mxu0 %v791
    %v4158 = vpop.f32.mrb[0].mxu0
    %v4159 = vadd.f32 %v4118, %v4158
    %v4160 = vpop.f32.mrb[0].mxu0
    %v4161 = vadd.f32 %v4120, %v4160
    %v4162 = vpop.f32.mrb[0].mxu0
    %v4163 = vpop.f32.mrb[0].mxu0
    %4164 = vdwg.mxu0
    %4165 = vmatprep.subr.bf16.mxu0 %v2724
    %4166 = vmatpush1.bf16.msra.mxu0 %v2723
    %4167 = vmatprep.subr.bf16.mxu0 %v2734
    %4168 = vmatpush1.bf16.msra.mxu0 %v2733
    %4169 = vmatprep.subr.bf16.mxu0 %v2744
    %4170 = vmatpush1.bf16.msra.mxu0 %v2743
    %4171 = vmatprep.subr.bf16.mxu0 %v2754
    %4172 = vmatpush1.bf16.msra.mxu0 %v2753
    %4173 = vmatprep.subr.bf16.mxu0 %v2764
    %4174 = vmatpush1.bf16.msra.mxu0 %v2763
    %4175 = vmatprep.subr.bf16.mxu0 %v2774
    %4176 = vmatpush1.bf16.msra.mxu0 %v2773
    %4177 = vmatprep.subr.bf16.mxu0 %v2784
    %4178 = vmatpush1.bf16.msra.mxu0 %v2783
    %4179 = vmatprep.subr.bf16.mxu0 %v2794
    %4180 = vmatpush1.bf16.msra.mxu0 %v2793
    %4181 = vmatprep.subr.bf16.mxu0 %v2804
    %4182 = vmatpush1.bf16.msra.mxu0 %v2803
    %4183 = vmatprep.subr.bf16.mxu0 %v2814
    %4184 = vmatpush1.bf16.msra.mxu0 %v2813
    %4185 = vmatprep.subr.bf16.mxu0 %v2824
    %4186 = vmatpush1.bf16.msra.mxu0 %v2823
    %4187 = vmatprep.subr.bf16.mxu0 %v2834
    %4188 = vmatpush1.bf16.msra.mxu0 %v2833
    %4189 = vmatprep.subr.bf16.mxu0 %v2844
    %4190 = vmatpush1.bf16.msra.mxu0 %v2843
    %4191 = vmatprep.subr.bf16.mxu0 %v2854
    %4192 = vmatpush1.bf16.msra.mxu0 %v2853
    %4193 = vmatprep.subr.bf16.mxu0 %v2864
    %4194 = vmatpush1.bf16.msra.mxu0 %v2863
    %4195 = vmatprep.subr.bf16.mxu0 %v2874
    %4196 = vmatpush1.bf16.msra.mxu0 %v2873
    %4197 = vmatprep.mubr.bf16.mxu0 %v786
    %4198 = vmatmul.mubr.bf16.gmra.mrb[0].mxu0 %v785
    %v4199 = vpop.f32.mrb[0].mxu0
    %v4200 = vadd.f32 %v734, %v4199
    %v4201 = vpop.f32.mrb[0].mxu0
    %v4202 = vadd.f32 %v738, %v4201
    %v4203 = vpop.f32.mrb[0].mxu0
    %v4204 = vpop.f32.mrb[0].mxu0
    %4205 = vdwg.mxu0
    %4206 = vmatprep.subr.bf16.mxu0 %v2884
    %4207 = vmatpush1.bf16.msra.mxu0 %v2883
    %4208 = vmatprep.subr.bf16.mxu0 %v2894
    %4209 = vmatpush1.bf16.msra.mxu0 %v2893
    %4210 = vmatprep.subr.bf16.mxu0 %v2904
    %4211 = vmatpush1.bf16.msra.mxu0 %v2903
    %4212 = vmatprep.subr.bf16.mxu0 %v2914
    %4213 = vmatpush1.bf16.msra.mxu0 %v2913
    %4214 = vmatprep.subr.bf16.mxu0 %v2924
    %4215 = vmatpush1.bf16.msra.mxu0 %v2923
    %4216 = vmatprep.subr.bf16.mxu0 %v2934
    %4217 = vmatpush1.bf16.msra.mxu0 %v2933
    %4218 = vmatprep.subr.bf16.mxu0 %v2944
    %4219 = vmatpush1.bf16.msra.mxu0 %v2943
    %4220 = vmatprep.subr.bf16.mxu0 %v2954
    %4221 = vmatpush1.bf16.msra.mxu0 %v2953
    %4222 = vmatprep.subr.bf16.mxu0 %v2964
    %4223 = vmatpush1.bf16.msra.mxu0 %v2963
    %4224 = vmatprep.subr.bf16.mxu0 %v2974
    %4225 = vmatpush1.bf16.msra.mxu0 %v2973
    %4226 = vmatprep.subr.bf16.mxu0 %v2984
    %4227 = vmatpush1.bf16.msra.mxu0 %v2983
    %4228 = vmatprep.subr.bf16.mxu0 %v2994
    %4229 = vmatpush1.bf16.msra.mxu0 %v2993
    %4230 = vmatprep.subr.bf16.mxu0 %v3004
    %4231 = vmatpush1.bf16.msra.mxu0 %v3003
    %4232 = vmatprep.subr.bf16.mxu0 %v3014
    %4233 = vmatpush1.bf16.msra.mxu0 %v3013
    %4234 = vmatprep.subr.bf16.mxu0 %v3024
    %4235 = vmatpush1.bf16.msra.mxu0 %v3023
    %4236 = vmatprep.subr.bf16.mxu0 %v3034
    %4237 = vmatpush1.bf16.msra.mxu0 %v3033
    %4238 = vmatprep.mubr.bf16.mxu0 %v788
    %4239 = vmatmul.mubr.bf16.gmra.mrb[0].mxu0 %v787
    %v4240 = vpop.f32.mrb[0].mxu0
    %v4241 = vadd.f32 %v4200, %v4240
    %v4242 = vpop.f32.mrb[0].mxu0
    %v4243 = vadd.f32 %v4202, %v4242
    %v4244 = vpop.f32.mrb[0].mxu0
    %v4245 = vpop.f32.mrb[0].mxu0
    %4246 = vdwg.mxu0
    %4247 = vmatprep.subr.bf16.mxu0 %v3044
    %4248 = vmatpush1.bf16.msra.mxu0 %v3043
    %4249 = vmatprep.subr.bf16.mxu0 %v3054
    %4250 = vmatpush1.bf16.msra.mxu0 %v3053
    %4251 = vmatprep.subr.bf16.mxu0 %v3064
    %4252 = vmatpush1.bf16.msra.mxu0 %v3063
    %4253 = vmatprep.subr.bf16.mxu0 %v3074
    %4254 = vmatpush1.bf16.msra.mxu0 %v3073
    %4255 = vmatprep.subr.bf16.mxu0 %v3084
    %4256 = vmatpush1.bf16.msra.mxu0 %v3083
    %4257 = vmatprep.subr.bf16.mxu0 %v3094
    %4258 = vmatpush1.bf16.msra.mxu0 %v3093
    %4259 = vmatprep.subr.bf16.mxu0 %v3104
    %4260 = vmatpush1.bf16.msra.mxu0 %v3103
    %4261 = vmatprep.subr.bf16.mxu0 %v3114
    %4262 = vmatpush1.bf16.msra.mxu0 %v3113
    %4263 = vmatprep.subr.bf16.mxu0 %v3124
    %4264 = vmatpush1.bf16.msra.mxu0 %v3123
    %4265 = vmatprep.subr.bf16.mxu0 %v3134
    %4266 = vmatpush1.bf16.msra.mxu0 %v3133
    %4267 = vmatprep.subr.bf16.mxu0 %v3144
    %4268 = vmatpush1.bf16.msra.mxu0 %v3143
    %4269 = vmatprep.subr.bf16.mxu0 %v3154
    %4270 = vmatpush1.bf16.msra.mxu0 %v3153
    %4271 = vmatprep.subr.bf16.mxu0 %v3164
    %4272 = vmatpush1.bf16.msra.mxu0 %v3163
    %4273 = vmatprep.subr.bf16.mxu0 %v3174
    %4274 = vmatpush1.bf16.msra.mxu0 %v3173
    %4275 = vmatprep.subr.bf16.mxu0 %v3184
    %4276 = vmatpush1.bf16.msra.mxu0 %v3183
    %4277 = vmatprep.subr.bf16.mxu0 %v3194
    %4278 = vmatpush1.bf16.msra.mxu0 %v3193
    %4279 = vmatprep.mubr.bf16.mxu0 %v790
    %4280 = vmatmul.mubr.bf16.gmra.mrb[0].mxu0 %v789
    %v4281 = vpop.f32.mrb[0].mxu0
    %v4282 = vadd.f32 %v4241, %v4281
    %v4283 = vpop.f32.mrb[0].mxu0
    %v4284 = vadd.f32 %v4243, %v4283
    %v4285 = vpop.f32.mrb[0].mxu0
    %v4286 = vpop.f32.mrb[0].mxu0
    %4287 = vdwg.mxu0
    %4288 = vmatprep.subr.bf16.mxu0 %v3204
    %4289 = vmatpush1.bf16.msra.mxu0 %v3203
    %4290 = vmatprep.subr.bf16.mxu0 %v3214
    %4291 = vmatpush1.bf16.msra.mxu0 %v3213
    %4292 = vmatprep.subr.bf16.mxu0 %v3224
    %4293 = vmatpush1.bf16.msra.mxu0 %v3223
    %4294 = vmatprep.subr.bf16.mxu0 %v3234
    %4295 = vmatpush1.bf16.msra.mxu0 %v3233
    %4296 = vmatprep.subr.bf16.mxu0 %v3244
    %4297 = vmatpush1.bf16.msra.mxu0 %v3243
    %4298 = vmatprep.subr.bf16.mxu0 %v3254
    %4299 = vmatpush1.bf16.msra.mxu0 %v3253
    %4300 = vmatprep.subr.bf16.mxu0 %v3264
    %4301 = vmatpush1.bf16.msra.mxu0 %v3263
    %4302 = vmatprep.subr.bf16.mxu0 %v3274
    %4303 = vmatpush1.bf16.msra.mxu0 %v3273
    %4304 = vmatprep.subr.bf16.mxu0 %v3284
    %4305 = vmatpush1.bf16.msra.mxu0 %v3283
    %4306 = vmatprep.subr.bf16.mxu0 %v3294
    %4307 = vmatpush1.bf16.msra.mxu0 %v3293
    %4308 = vmatprep.subr.bf16.mxu0 %v3304
    %4309 = vmatpush1.bf16.msra.mxu0 %v3303
    %4310 = vmatprep.subr.bf16.mxu0 %v3314
    %4311 = vmatpush1.bf16.msra.mxu0 %v3313
    %4312 = vmatprep.subr.bf16.mxu0 %v3324
    %4313 = vmatpush1.bf16.msra.mxu0 %v3323
    %4314 = vmatprep.subr.bf16.mxu0 %v3334
    %4315 = vmatpush1.bf16.msra.mxu0 %v3333
    %4316 = vmatprep.subr.bf16.mxu0 %v3344
    %4317 = vmatpush1.bf16.msra.mxu0 %v3343
    %4318 = vmatprep.subr.bf16.mxu0 %v3354
    %4319 = vmatpush1.bf16.msra.mxu0 %v3353
    %4320 = vmatprep.mubr.bf16.mxu0 %v792
    %4321 = vmatmul.mubr.bf16.gmra.mrb[0].mxu0 %v791
    %v4322 = vpop.f32.mrb[0].mxu0
    %v4323 = vadd.f32 %v4282, %v4322
    %v4324 = vpop.f32.mrb[0].mxu0
    %v4325 = vadd.f32 %v4284, %v4324
    %v4326 = vpop.f32.mrb[0].mxu0
    %v4327 = vpop.f32.mrb[0].mxu0
    %4328 = vdwg.mxu0
    %4329 = vmatprep.subr.bf16.mxu0 %v2726
    %4330 = vmatpush1.bf16.msra.mxu0 %v2725
    %4331 = vmatprep.subr.bf16.mxu0 %v2736
    %4332 = vmatpush1.bf16.msra.mxu0 %v2735
    %4333 = vmatprep.subr.bf16.mxu0 %v2746
    %4334 = vmatpush1.bf16.msra.mxu0 %v2745
    %4335 = vmatprep.subr.bf16.mxu0 %v2756
    %4336 = vmatpush1.bf16.msra.mxu0 %v2755
    %4337 = vmatprep.subr.bf16.mxu0 %v2766
    %4338 = vmatpush1.bf16.msra.mxu0 %v2765
    %4339 = vmatprep.subr.bf16.mxu0 %v2776
    %4340 = vmatpush1.bf16.msra.mxu0 %v2775
    %4341 = vmatprep.subr.bf16.mxu0 %v2786
    %4342 = vmatpush1.bf16.msra.mxu0 %v2785
    %4343 = vmatprep.subr.bf16.mxu0 %v2796
    %4344 = vmatpush1.bf16.msra.mxu0 %v2795
    %4345 = vmatprep.subr.bf16.mxu0 %v2806
    %4346 = vmatpush1.bf16.msra.mxu0 %v2805
    %4347 = vmatprep.subr.bf16.mxu0 %v2816
    %4348 = vmatpush1.bf16.msra.mxu0 %v2815
    %4349 = vmatprep.subr.bf16.mxu0 %v2826
    %4350 = vmatpush1.bf16.msra.mxu0 %v2825
    %4351 = vmatprep.subr.bf16.mxu0 %v2836
    %4352 = vmatpush1.bf16.msra.mxu0 %v2835
    %4353 = vmatprep.subr.bf16.mxu0 %v2846
    %4354 = vmatpush1.bf16.msra.mxu0 %v2845
    %4355 = vmatprep.subr.bf16.mxu0 %v2856
    %4356 = vmatpush1.bf16.msra.mxu0 %v2855
    %4357 = vmatprep.subr.bf16.mxu0 %v2866
    %4358 = vmatpush1.bf16.msra.mxu0 %v2865
    %4359 = vmatprep.subr.bf16.mxu0 %v2876
    %4360 = vmatpush1.bf16.msra.mxu0 %v2875
    %4361 = vmatprep.mubr.bf16.mxu0 %v786
    %4362 = vmatmul.mubr.bf16.gmra.mrb[0].mxu0 %v785
    %v4363 = vpop.f32.mrb[0].mxu0
    %v4364 = vadd.f32 %v742, %v4363
    %v4365 = vpop.f32.mrb[0].mxu0
    %v4366 = vadd.f32 %v746, %v4365
    %v4367 = vpop.f32.mrb[0].mxu0
    %v4368 = vpop.f32.mrb[0].mxu0
    %4369 = vdwg.mxu0
    %4370 = vmatprep.subr.bf16.mxu0 %v2886
    %4371 = vmatpush1.bf16.msra.mxu0 %v2885
    %4372 = vmatprep.subr.bf16.mxu0 %v2896
    %4373 = vmatpush1.bf16.msra.mxu0 %v2895
    %4374 = vmatprep.subr.bf16.mxu0 %v2906
    %4375 = vmatpush1.bf16.msra.mxu0 %v2905
    %4376 = vmatprep.subr.bf16.mxu0 %v2916
    %4377 = vmatpush1.bf16.msra.mxu0 %v2915
    %4378 = vmatprep.subr.bf16.mxu0 %v2926
    %4379 = vmatpush1.bf16.msra.mxu0 %v2925
    %4380 = vmatprep.subr.bf16.mxu0 %v2936
    %4381 = vmatpush1.bf16.msra.mxu0 %v2935
    %4382 = vmatprep.subr.bf16.mxu0 %v2946
    %4383 = vmatpush1.bf16.msra.mxu0 %v2945
    %4384 = vmatprep.subr.bf16.mxu0 %v2956
    %4385 = vmatpush1.bf16.msra.mxu0 %v2955
    %4386 = vmatprep.subr.bf16.mxu0 %v2966
    %4387 = vmatpush1.bf16.msra.mxu0 %v2965
    %4388 = vmatprep.subr.bf16.mxu0 %v2976
    %4389 = vmatpush1.bf16.msra.mxu0 %v2975
    %4390 = vmatprep.subr.bf16.mxu0 %v2986
    %4391 = vmatpush1.bf16.msra.mxu0 %v2985
    %4392 = vmatprep.subr.bf16.mxu0 %v2996
    %4393 = vmatpush1.bf16.msra.mxu0 %v2995
    %4394 = vmatprep.subr.bf16.mxu0 %v3006
    %4395 = vmatpush1.bf16.msra.mxu0 %v3005
    %4396 = vmatprep.subr.bf16.mxu0 %v3016
    %4397 = vmatpush1.bf16.msra.mxu0 %v3015
    %4398 = vmatprep.subr.bf16.mxu0 %v3026
    %4399 = vmatpush1.bf16.msra.mxu0 %v3025
    %4400 = vmatprep.subr.bf16.mxu0 %v3036
    %4401 = vmatpush1.bf16.msra.mxu0 %v3035
    %4402 = vmatprep.mubr.bf16.mxu0 %v788
    %4403 = vmatmul.mubr.bf16.gmra.mrb[0].mxu0 %v787
    %v4404 = vpop.f32.mrb[0].mxu0
    %v4405 = vadd.f32 %v4364, %v4404
    %v4406 = vpop.f32.mrb[0].mxu0
    %v4407 = vadd.f32 %v4366, %v4406
    %v4408 = vpop.f32.mrb[0].mxu0
    %v4409 = vpop.f32.mrb[0].mxu0
    %4410 = vdwg.mxu0
    %4411 = vmatprep.subr.bf16.mxu0 %v3046
    %4412 = vmatpush1.bf16.msra.mxu0 %v3045
    %4413 = vmatprep.subr.bf16.mxu0 %v3056
    %4414 = vmatpush1.bf16.msra.mxu0 %v3055
    %4415 = vmatprep.subr.bf16.mxu0 %v3066
    %4416 = vmatpush1.bf16.msra.mxu0 %v3065
    %4417 = vmatprep.subr.bf16.mxu0 %v3076
    %4418 = vmatpush1.bf16.msra.mxu0 %v3075
    %4419 = vmatprep.subr.bf16.mxu0 %v3086
    %4420 = vmatpush1.bf16.msra.mxu0 %v3085
    %4421 = vmatprep.subr.bf16.mxu0 %v3096
    %4422 = vmatpush1.bf16.msra.mxu0 %v3095
    %4423 = vmatprep.subr.bf16.mxu0 %v3106
    %4424 = vmatpush1.bf16.msra.mxu0 %v3105
    %4425 = vmatprep.subr.bf16.mxu0 %v3116
    %4426 = vmatpush1.bf16.msra.mxu0 %v3115
    %4427 = vmatprep.subr.bf16.mxu0 %v3126
    %4428 = vmatpush1.bf16.msra.mxu0 %v3125
    %4429 = vmatprep.subr.bf16.mxu0 %v3136
    %4430 = vmatpush1.bf16.msra.mxu0 %v3135
    %4431 = vmatprep.subr.bf16.mxu0 %v3146
    %4432 = vmatpush1.bf16.msra.mxu0 %v3145
    %4433 = vmatprep.subr.bf16.mxu0 %v3156
    %4434 = vmatpush1.bf16.msra.mxu0 %v3155
    %4435 = vmatprep.subr.bf16.mxu0 %v3166
    %4436 = vmatpush1.bf16.msra.mxu0 %v3165
    %4437 = vmatprep.subr.bf16.mxu0 %v3176
    %4438 = vmatpush1.bf16.msra.mxu0 %v3175
    %4439 = vmatprep.subr.bf16.mxu0 %v3186
    %4440 = vmatpush1.bf16.msra.mxu0 %v3185
    %4441 = vmatprep.subr.bf16.mxu0 %v3196
    %4442 = vmatpush1.bf16.msra.mxu0 %v3195
    %4443 = vmatprep.mubr.bf16.mxu0 %v790
    %4444 = vmatmul.mubr.bf16.gmra.mrb[0].mxu0 %v789
    %v4445 = vpop.f32.mrb[0].mxu0
    %v4446 = vadd.f32 %v4405, %v4445
    %v4447 = vpop.f32.mrb[0].mxu0
    %v4448 = vadd.f32 %v4407, %v4447
    %v4449 = vpop.f32.mrb[0].mxu0
    %v4450 = vpop.f32.mrb[0].mxu0
    %4451 = vdwg.mxu0
    %4452 = vmatprep.subr.bf16.mxu0 %v3206
    %4453 = vmatpush1.bf16.msra.mxu0 %v3205
    %4454 = vmatprep.subr.bf16.mxu0 %v3216
    %4455 = vmatpush1.bf16.msra.mxu0 %v3215
    %4456 = vmatprep.subr.bf16.mxu0 %v3226
    %4457 = vmatpush1.bf16.msra.mxu0 %v3225
    %4458 = vmatprep.subr.bf16.mxu0 %v3236
    %4459 = vmatpush1.bf16.msra.mxu0 %v3235
    %4460 = vmatprep.subr.bf16.mxu0 %v3246
    %4461 = vmatpush1.bf16.msra.mxu0 %v3245
    %4462 = vmatprep.subr.bf16.mxu0 %v3256
    %4463 = vmatpush1.bf16.msra.mxu0 %v3255
    %4464 = vmatprep.subr.bf16.mxu0 %v3266
    %4465 = vmatpush1.bf16.msra.mxu0 %v3265
    %4466 = vmatprep.subr.bf16.mxu0 %v3276
    %4467 = vmatpush1.bf16.msra.mxu0 %v3275
    %4468 = vmatprep.subr.bf16.mxu0 %v3286
    %4469 = vmatpush1.bf16.msra.mxu0 %v3285
    %4470 = vmatprep.subr.bf16.mxu0 %v3296
    %4471 = vmatpush1.bf16.msra.mxu0 %v3295
    %4472 = vmatprep.subr.bf16.mxu0 %v3306
    %4473 = vmatpush1.bf16.msra.mxu0 %v3305
    %4474 = vmatprep.subr.bf16.mxu0 %v3316
    %4475 = vmatpush1.bf16.msra.mxu0 %v3315
    %4476 = vmatprep.subr.bf16.mxu0 %v3326
    %4477 = vmatpush1.bf16.msra.mxu0 %v3325
    %4478 = vmatprep.subr.bf16.mxu0 %v3336
    %4479 = vmatpush1.bf16.msra.mxu0 %v3335
    %4480 = vmatprep.subr.bf16.mxu0 %v3346
    %4481 = vmatpush1.bf16.msra.mxu0 %v3345
    %4482 = vmatprep.subr.bf16.mxu0 %v3356
    %4483 = vmatpush1.bf16.msra.mxu0 %v3355
    %4484 = vmatprep.mubr.bf16.mxu0 %v792
    %4485 = vmatmul.mubr.bf16.gmra.mrb[0].mxu0 %v791
    %v4486 = vpop.f32.mrb[0].mxu0
    %v4487 = vadd.f32 %v4446, %v4486
    %v4488 = vpop.f32.mrb[0].mxu0
    %v4489 = vadd.f32 %v4448, %v4488
    %v4490 = vpop.f32.mrb[0].mxu0
    %v4491 = vpop.f32.mrb[0].mxu0
    %4492 = vdwg.mxu0
    %4493 = vmatprep.subr.bf16.mxu0 %v2728
    %4494 = vmatpush1.bf16.msra.mxu0 %v2727
    %4495 = vmatprep.subr.bf16.mxu0 %v2738
    %4496 = vmatpush1.bf16.msra.mxu0 %v2737
    %4497 = vmatprep.subr.bf16.mxu0 %v2748
    %4498 = vmatpush1.bf16.msra.mxu0 %v2747
    %4499 = vmatprep.subr.bf16.mxu0 %v2758
    %4500 = vmatpush1.bf16.msra.mxu0 %v2757
    %4501 = vmatprep.subr.bf16.mxu0 %v2768
    %4502 = vmatpush1.bf16.msra.mxu0 %v2767
    %4503 = vmatprep.subr.bf16.mxu0 %v2778
    %4504 = vmatpush1.bf16.msra.mxu0 %v2777
    %4505 = vmatprep.subr.bf16.mxu0 %v2788
    %4506 = vmatpush1.bf16.msra.mxu0 %v2787
    %4507 = vmatprep.subr.bf16.mxu0 %v2798
    %4508 = vmatpush1.bf16.msra.mxu0 %v2797
    %4509 = vmatprep.subr.bf16.mxu0 %v2808
    %4510 = vmatpush1.bf16.msra.mxu0 %v2807
    %4511 = vmatprep.subr.bf16.mxu0 %v2818
    %4512 = vmatpush1.bf16.msra.mxu0 %v2817
    %4513 = vmatprep.subr.bf16.mxu0 %v2828
    %4514 = vmatpush1.bf16.msra.mxu0 %v2827
    %4515 = vmatprep.subr.bf16.mxu0 %v2838
    %4516 = vmatpush1.bf16.msra.mxu0 %v2837
    %4517 = vmatprep.subr.bf16.mxu0 %v2848
    %4518 = vmatpush1.bf16.msra.mxu0 %v2847
    %4519 = vmatprep.subr.bf16.mxu0 %v2858
    %4520 = vmatpush1.bf16.msra.mxu0 %v2857
    %4521 = vmatprep.subr.bf16.mxu0 %v2868
    %4522 = vmatpush1.bf16.msra.mxu0 %v2867
    %4523 = vmatprep.subr.bf16.mxu0 %v2878
    %4524 = vmatpush1.bf16.msra.mxu0 %v2877
    %4525 = vmatprep.mubr.bf16.mxu0 %v786
    %4526 = vmatmul.mubr.bf16.gmra.mrb[0].mxu0 %v785
    %v4527 = vpop.f32.mrb[0].mxu0
    %v4528 = vadd.f32 %v750, %v4527
    %v4529 = vpop.f32.mrb[0].mxu0
    %v4530 = vadd.f32 %v754, %v4529
    %v4531 = vpop.f32.mrb[0].mxu0
    %v4532 = vpop.f32.mrb[0].mxu0
    %4533 = vdwg.mxu0
    %4534 = vmatprep.subr.bf16.mxu0 %v2888
    %4535 = vmatpush1.bf16.msra.mxu0 %v2887
    %4536 = vmatprep.subr.bf16.mxu0 %v2898
    %4537 = vmatpush1.bf16.msra.mxu0 %v2897
    %4538 = vmatprep.subr.bf16.mxu0 %v2908
    %4539 = vmatpush1.bf16.msra.mxu0 %v2907
    %4540 = vmatprep.subr.bf16.mxu0 %v2918
    %4541 = vmatpush1.bf16.msra.mxu0 %v2917
    %4542 = vmatprep.subr.bf16.mxu0 %v2928
    %4543 = vmatpush1.bf16.msra.mxu0 %v2927
    %4544 = vmatprep.subr.bf16.mxu0 %v2938
    %4545 = vmatpush1.bf16.msra.mxu0 %v2937
    %4546 = vmatprep.subr.bf16.mxu0 %v2948
    %4547 = vmatpush1.bf16.msra.mxu0 %v2947
    %4548 = vmatprep.subr.bf16.mxu0 %v2958
    %4549 = vmatpush1.bf16.msra.mxu0 %v2957
    %4550 = vmatprep.subr.bf16.mxu0 %v2968
    %4551 = vmatpush1.bf16.msra.mxu0 %v2967
    %4552 = vmatprep.subr.bf16.mxu0 %v2978
    %4553 = vmatpush1.bf16.msra.mxu0 %v2977
    %4554 = vmatprep.subr.bf16.mxu0 %v2988
    %4555 = vmatpush1.bf16.msra.mxu0 %v2987
    %4556 = vmatprep.subr.bf16.mxu0 %v2998
    %4557 = vmatpush1.bf16.msra.mxu0 %v2997
    %4558 = vmatprep.subr.bf16.mxu0 %v3008
    %4559 = vmatpush1.bf16.msra.mxu0 %v3007
    %4560 = vmatprep.subr.bf16.mxu0 %v3018
    %4561 = vmatpush1.bf16.msra.mxu0 %v3017
    %4562 = vmatprep.subr.bf16.mxu0 %v3028
    %4563 = vmatpush1.bf16.msra.mxu0 %v3027
    %4564 = vmatprep.subr.bf16.mxu0 %v3038
    %4565 = vmatpush1.bf16.msra.mxu0 %v3037
    %4566 = vmatprep.mubr.bf16.mxu0 %v788
    %4567 = vmatmul.mubr.bf16.gmra.mrb[0].mxu0 %v787
    %v4568 = vpop.f32.mrb[0].mxu0
    %v4569 = vadd.f32 %v4528, %v4568
    %v4570 = vpop.f32.mrb[0].mxu0
    %v4571 = vadd.f32 %v4530, %v4570
    %v4572 = vpop.f32.mrb[0].mxu0
    %v4573 = vpop.f32.mrb[0].mxu0
    %4574 = vdwg.mxu0
    %4575 = vmatprep.subr.bf16.mxu0 %v3048
    %4576 = vmatpush1.bf16.msra.mxu0 %v3047
    %4577 = vmatprep.subr.bf16.mxu0 %v3058
    %4578 = vmatpush1.bf16.msra.mxu0 %v3057
    %4579 = vmatprep.subr.bf16.mxu0 %v3068
    %4580 = vmatpush1.bf16.msra.mxu0 %v3067
    %4581 = vmatprep.subr.bf16.mxu0 %v3078
    %4582 = vmatpush1.bf16.msra.mxu0 %v3077
    %4583 = vmatprep.subr.bf16.mxu0 %v3088
    %4584 = vmatpush1.bf16.msra.mxu0 %v3087
    %4585 = vmatprep.subr.bf16.mxu0 %v3098
    %4586 = vmatpush1.bf16.msra.mxu0 %v3097
    %4587 = vmatprep.subr.bf16.mxu0 %v3108
    %4588 = vmatpush1.bf16.msra.mxu0 %v3107
    %4589 = vmatprep.subr.bf16.mxu0 %v3118
    %4590 = vmatpush1.bf16.msra.mxu0 %v3117
    %4591 = vmatprep.subr.bf16.mxu0 %v3128
    %4592 = vmatpush1.bf16.msra.mxu0 %v3127
    %4593 = vmatprep.subr.bf16.mxu0 %v3138
    %4594 = vmatpush1.bf16.msra.mxu0 %v3137
    %4595 = vmatprep.subr.bf16.mxu0 %v3148
    %4596 = vmatpush1.bf16.msra.mxu0 %v3147
    %4597 = vmatprep.subr.bf16.mxu0 %v3158
    %4598 = vmatpush1.bf16.msra.mxu0 %v3157
    %4599 = vmatprep.subr.bf16.mxu0 %v3168
    %4600 = vmatpush1.bf16.msra.mxu0 %v3167
    %4601 = vmatprep.subr.bf16.mxu0 %v3178
    %4602 = vmatpush1.bf16.msra.mxu0 %v3177
    %4603 = vmatprep.subr.bf16.mxu0 %v3188
    %4604 = vmatpush1.bf16.msra.mxu0 %v3187
    %4605 = vmatprep.subr.bf16.mxu0 %v3198
    %4606 = vmatpush1.bf16.msra.mxu0 %v3197
    %4607 = vmatprep.mubr.bf16.mxu0 %v790
    %4608 = vmatmul.mubr.bf16.gmra.mrb[0].mxu0 %v789
    %v4609 = vpop.f32.mrb[0].mxu0
    %v4610 = vadd.f32 %v4569, %v4609
    %v4611 = vpop.f32.mrb[0].mxu0
    %v4612 = vadd.f32 %v4571, %v4611
    %v4613 = vpop.f32.mrb[0].mxu0
    %v4614 = vpop.f32.mrb[0].mxu0
    %4615 = vdwg.mxu0
    %4616 = vmatprep.subr.bf16.mxu0 %v3208
    %4617 = vmatpush1.bf16.msra.mxu0 %v3207
    %4618 = vmatprep.subr.bf16.mxu0 %v3218
    %4619 = vmatpush1.bf16.msra.mxu0 %v3217
    %4620 = vmatprep.subr.bf16.mxu0 %v3228
    %4621 = vmatpush1.bf16.msra.mxu0 %v3227
    %4622 = vmatprep.subr.bf16.mxu0 %v3238
    %4623 = vmatpush1.bf16.msra.mxu0 %v3237
    %4624 = vmatprep.subr.bf16.mxu0 %v3248
    %4625 = vmatpush1.bf16.msra.mxu0 %v3247
    %4626 = vmatprep.subr.bf16.mxu0 %v3258
    %4627 = vmatpush1.bf16.msra.mxu0 %v3257
    %4628 = vmatprep.subr.bf16.mxu0 %v3268
    %4629 = vmatpush1.bf16.msra.mxu0 %v3267
    %4630 = vmatprep.subr.bf16.mxu0 %v3278
    %4631 = vmatpush1.bf16.msra.mxu0 %v3277
    %4632 = vmatprep.subr.bf16.mxu0 %v3288
    %4633 = vmatpush1.bf16.msra.mxu0 %v3287
    %4634 = vmatprep.subr.bf16.mxu0 %v3298
    %4635 = vmatpush1.bf16.msra.mxu0 %v3297
    %4636 = vmatprep.subr.bf16.mxu0 %v3308
    %4637 = vmatpush1.bf16.msra.mxu0 %v3307
    %4638 = vmatprep.subr.bf16.mxu0 %v3318
    %4639 = vmatpush1.bf16.msra.mxu0 %v3317
    %4640 = vmatprep.subr.bf16.mxu0 %v3328
    %4641 = vmatpush1.bf16.msra.mxu0 %v3327
    %4642 = vmatprep.subr.bf16.mxu0 %v3338
    %4643 = vmatpush1.bf16.msra.mxu0 %v3337
    %4644 = vmatprep.subr.bf16.mxu0 %v3348
    %4645 = vmatpush1.bf16.msra.mxu0 %v3347
    %4646 = vmatprep.subr.bf16.mxu0 %v3358
    %4647 = vmatpush1.bf16.msra.mxu0 %v3357
    %4648 = vmatprep.mubr.bf16.mxu0 %v792
    %4649 = vmatmul.mubr.bf16.gmra.mrb[0].mxu0 %v791
    %v4650 = vpop.f32.mrb[0].mxu0
    %v4651 = vadd.f32 %v4610, %v4650
    %v4652 = vpop.f32.mrb[0].mxu0
    %v4653 = vadd.f32 %v4612, %v4652
    %v4654 = vpop.f32.mrb[0].mxu0
    %v4655 = vpop.f32.mrb[0].mxu0
    %4656 = vdwg.mxu0
    %4657 = vmatprep.subr.bf16.mxu0 %v2730
    %4658 = vmatpush1.bf16.msra.mxu0 %v2729
    %4659 = vmatprep.subr.bf16.mxu0 %v2740
    %4660 = vmatpush1.bf16.msra.mxu0 %v2739
    %4661 = vmatprep.subr.bf16.mxu0 %v2750
    %4662 = vmatpush1.bf16.msra.mxu0 %v2749
    %4663 = vmatprep.subr.bf16.mxu0 %v2760
    %4664 = vmatpush1.bf16.msra.mxu0 %v2759
    %4665 = vmatprep.subr.bf16.mxu0 %v2770
    %4666 = vmatpush1.bf16.msra.mxu0 %v2769
    %4667 = vmatprep.subr.bf16.mxu0 %v2780
    %4668 = vmatpush1.bf16.msra.mxu0 %v2779
    %4669 = vmatprep.subr.bf16.mxu0 %v2790
    %4670 = vmatpush1.bf16.msra.mxu0 %v2789
    %4671 = vmatprep.subr.bf16.mxu0 %v2800
    %4672 = vmatpush1.bf16.msra.mxu0 %v2799
    %4673 = vmatprep.subr.bf16.mxu0 %v2810
    %4674 = vmatpush1.bf16.msra.mxu0 %v2809
    %4675 = vmatprep.subr.bf16.mxu0 %v2820
    %4676 = vmatpush1.bf16.msra.mxu0 %v2819
    %4677 = vmatprep.subr.bf16.mxu0 %v2830
    %4678 = vmatpush1.bf16.msra.mxu0 %v2829
    %4679 = vmatprep.subr.bf16.mxu0 %v2840
    %4680 = vmatpush1.bf16.msra.mxu0 %v2839
    %4681 = vmatprep.subr.bf16.mxu0 %v2850
    %4682 = vmatpush1.bf16.msra.mxu0 %v2849
    %4683 = vmatprep.subr.bf16.mxu0 %v2860
    %4684 = vmatpush1.bf16.msra.mxu0 %v2859
    %4685 = vmatprep.subr.bf16.mxu0 %v2870
    %4686 = vmatpush1.bf16.msra.mxu0 %v2869
    %4687 = vmatprep.subr.bf16.mxu0 %v2880
    %4688 = vmatpush1.bf16.msra.mxu0 %v2879
    %4689 = vmatprep.mubr.bf16.mxu0 %v786
    %4690 = vmatmul.mubr.bf16.gmra.mrb[0].mxu0 %v785
    %v4691 = vpop.f32.mrb[0].mxu0
    %v4692 = vadd.f32 %v758, %v4691
    %v4693 = vpop.f32.mrb[0].mxu0
    %v4694 = vadd.f32 %v762, %v4693
    %v4695 = vpop.f32.mrb[0].mxu0
    %v4696 = vpop.f32.mrb[0].mxu0
    %4697 = vdwg.mxu0
    %4698 = vmatprep.subr.bf16.mxu0 %v2890
    %4699 = vmatpush1.bf16.msra.mxu0 %v2889
    %4700 = vmatprep.subr.bf16.mxu0 %v2900
    %4701 = vmatpush1.bf16.msra.mxu0 %v2899
    %4702 = vmatprep.subr.bf16.mxu0 %v2910
    %4703 = vmatpush1.bf16.msra.mxu0 %v2909
    %4704 = vmatprep.subr.bf16.mxu0 %v2920
    %4705 = vmatpush1.bf16.msra.mxu0 %v2919
    %4706 = vmatprep.subr.bf16.mxu0 %v2930
    %4707 = vmatpush1.bf16.msra.mxu0 %v2929
    %4708 = vmatprep.subr.bf16.mxu0 %v2940
    %4709 = vmatpush1.bf16.msra.mxu0 %v2939
    %4710 = vmatprep.subr.bf16.mxu0 %v2950
    %4711 = vmatpush1.bf16.msra.mxu0 %v2949
    %4712 = vmatprep.subr.bf16.mxu0 %v2960
    %4713 = vmatpush1.bf16.msra.mxu0 %v2959
    %4714 = vmatprep.subr.bf16.mxu0 %v2970
    %4715 = vmatpush1.bf16.msra.mxu0 %v2969
    %4716 = vmatprep.subr.bf16.mxu0 %v2980
    %4717 = vmatpush1.bf16.msra.mxu0 %v2979
    %4718 = vmatprep.subr.bf16.mxu0 %v2990
    %4719 = vmatpush1.bf16.msra.mxu0 %v2989
    %4720 = vmatprep.subr.bf16.mxu0 %v3000
    %4721 = vmatpush1.bf16.msra.mxu0 %v2999
    %4722 = vmatprep.subr.bf16.mxu0 %v3010
    %4723 = vmatpush1.bf16.msra.mxu0 %v3009
    %4724 = vmatprep.subr.bf16.mxu0 %v3020
    %4725 = vmatpush1.bf16.msra.mxu0 %v3019
    %4726 = vmatprep.subr.bf16.mxu0 %v3030
    %4727 = vmatpush1.bf16.msra.mxu0 %v3029
    %4728 = vmatprep.subr.bf16.mxu0 %v3040
    %4729 = vmatpush1.bf16.msra.mxu0 %v3039
    %4730 = vmatprep.mubr.bf16.mxu0 %v788
    %4731 = vmatmul.mubr.bf16.gmra.mrb[0].mxu0 %v787
    %v4732 = vpop.f32.mrb[0].mxu0
    %v4733 = vadd.f32 %v4692, %v4732
    %v4734 = vpop.f32.mrb[0].mxu0
    %v4735 = vadd.f32 %v4694, %v4734
    %v4736 = vpop.f32.mrb[0].mxu0
    %v4737 = vpop.f32.mrb[0].mxu0
    %4738 = vdwg.mxu0
    %4739 = vmatprep.subr.bf16.mxu0 %v3050
    %4740 = vmatpush1.bf16.msra.mxu0 %v3049
    %4741 = vmatprep.subr.bf16.mxu0 %v3060
    %4742 = vmatpush1.bf16.msra.mxu0 %v3059
    %4743 = vmatprep.subr.bf16.mxu0 %v3070
    %4744 = vmatpush1.bf16.msra.mxu0 %v3069
    %4745 = vmatprep.subr.bf16.mxu0 %v3080
    %4746 = vmatpush1.bf16.msra.mxu0 %v3079
    %4747 = vmatprep.subr.bf16.mxu0 %v3090
    %4748 = vmatpush1.bf16.msra.mxu0 %v3089
    %4749 = vmatprep.subr.bf16.mxu0 %v3100
    %4750 = vmatpush1.bf16.msra.mxu0 %v3099
    %4751 = vmatprep.subr.bf16.mxu0 %v3110
    %4752 = vmatpush1.bf16.msra.mxu0 %v3109
    %4753 = vmatprep.subr.bf16.mxu0 %v3120
    %4754 = vmatpush1.bf16.msra.mxu0 %v3119
    %4755 = vmatprep.subr.bf16.mxu0 %v3130
    %4756 = vmatpush1.bf16.msra.mxu0 %v3129
    %4757 = vmatprep.subr.bf16.mxu0 %v3140
    %4758 = vmatpush1.bf16.msra.mxu0 %v3139
    %4759 = vmatprep.subr.bf16.mxu0 %v3150
    %4760 = vmatpush1.bf16.msra.mxu0 %v3149
    %4761 = vmatprep.subr.bf16.mxu0 %v3160
    %4762 = vmatpush1.bf16.msra.mxu0 %v3159
    %4763 = vmatprep.subr.bf16.mxu0 %v3170
    %4764 = vmatpush1.bf16.msra.mxu0 %v3169
    %4765 = vmatprep.subr.bf16.mxu0 %v3180
    %4766 = vmatpush1.bf16.msra.mxu0 %v3179
    %4767 = vmatprep.subr.bf16.mxu0 %v3190
    %4768 = vmatpush1.bf16.msra.mxu0 %v3189
    %4769 = vmatprep.subr.bf16.mxu0 %v3200
    %4770 = vmatpush1.bf16.msra.mxu0 %v3199
    %4771 = vmatprep.mubr.bf16.mxu0 %v790
    %4772 = vmatmul.mubr.bf16.gmra.mrb[0].mxu0 %v789
    %v4773 = vpop.f32.mrb[0].mxu0
    %v4774 = vadd.f32 %v4733, %v4773
    %v4775 = vpop.f32.mrb[0].mxu0
    %v4776 = vadd.f32 %v4735, %v4775
    %v4777 = vpop.f32.mrb[0].mxu0
    %v4778 = vpop.f32.mrb[0].mxu0
    %4779 = vdwg.mxu0
    %4780 = vmatprep.subr.bf16.mxu0 %v3210
    %4781 = vmatpush1.bf16.msra.mxu0 %v3209
    %4782 = vmatprep.subr.bf16.mxu0 %v3220
    %4783 = vmatpush1.bf16.msra.mxu0 %v3219
    %4784 = vmatprep.subr.bf16.mxu0 %v3230
    %4785 = vmatpush1.bf16.msra.mxu0 %v3229
    %4786 = vmatprep.subr.bf16.mxu0 %v3240
    %4787 = vmatpush1.bf16.msra.mxu0 %v3239
    %4788 = vmatprep.subr.bf16.mxu0 %v3250
    %4789 = vmatpush1.bf16.msra.mxu0 %v3249
    %4790 = vmatprep.subr.bf16.mxu0 %v3260
    %4791 = vmatpush1.bf16.msra.mxu0 %v3259
    %4792 = vmatprep.subr.bf16.mxu0 %v3270
    %4793 = vmatpush1.bf16.msra.mxu0 %v3269
    %4794 = vmatprep.subr.bf16.mxu0 %v3280
    %4795 = vmatpush1.bf16.msra.mxu0 %v3279
    %4796 = vmatprep.subr.bf16.mxu0 %v3290
    %4797 = vmatpush1.bf16.msra.mxu0 %v3289
    %4798 = vmatprep.subr.bf16.mxu0 %v3300
    %4799 = vmatpush1.bf16.msra.mxu0 %v3299
    %4800 = vmatprep.subr.bf16.mxu0 %v3310
    %4801 = vmatpush1.bf16.msra.mxu0 %v3309
    %4802 = vmatprep.subr.bf16.mxu0 %v3320
    %4803 = vmatpush1.bf16.msra.mxu0 %v3319
    %4804 = vmatprep.subr.bf16.mxu0 %v3330
    %4805 = vmatpush1.bf16.msra.mxu0 %v3329
    %4806 = vmatprep.subr.bf16.mxu0 %v3340
    %4807 = vmatpush1.bf16.msra.mxu0 %v3339
    %4808 = vmatprep.subr.bf16.mxu0 %v3350
    %4809 = vmatpush1.bf16.msra.mxu0 %v3349
    %4810 = vmatprep.subr.bf16.mxu0 %v3360
    %4811 = vmatpush1.bf16.msra.mxu0 %v3359
    %4812 = vmatprep.mubr.bf16.mxu0 %v792
    %4813 = vmatmul.mubr.bf16.gmra.mrb[0].mxu0 %v791
    %v4814 = vpop.f32.mrb[0].mxu0
    %v4815 = vadd.f32 %v4774, %v4814
    %v4816 = vpop.f32.mrb[0].mxu0
    %v4817 = vadd.f32 %v4776, %v4816
    %v4818 = vpop.f32.mrb[0].mxu0
    %v4819 = vpop.f32.mrb[0].mxu0
    %4820 = vdwg.mxu0
    %4821 = vst [vmem:[%s5] sm:$0xff] %v4159
    %4822 = vst [vmem:[%s5 + $0x8] sm:$0xff] %v4161
    %4823 = vst [vmem:[%s5 + $0x10] sm:$0xff] %v4323
    %4824 = vst [vmem:[%s5 + $0x18] sm:$0xff] %v4325
    %4825 = vst [vmem:[%s5 + $0x20] sm:$0xff] %v4487
    %4826 = vst [vmem:[%s5 + $0x28] sm:$0xff] %v4489
    %4827 = vst [vmem:[%s5 + $0x30] sm:$0xff] %v4651
    %4828 = vst [vmem:[%s5 + $0x38] sm:$0xff] %v4653
    %4829 = vst [vmem:[%s5 + $0x40] sm:$0xff] %v4815
    %4830 = vst [vmem:[%s5 + $0x48] sm:$0xff] %v4817
    %v4831 = vpack.c.bf16 %v4159, %v4159
    %v4832 = vpack.c.bf16 %v4161, %v4161
    %v4833 = vpack.c.bf16 %v4323, %v4323
    %v4834 = vpack.c.bf16 %v4325, %v4325
    %v4835 = vpack.c.bf16 %v4487, %v4487
    %v4836 = vpack.c.bf16 %v4489, %v4489
    %v4837 = vpack.c.bf16 %v4651, %v4651
    %v4838 = vpack.c.bf16 %v4653, %v4653
    %v4839 = vpack.c.bf16 %v4815, %v4815
    %v4840 = vpack.c.bf16 %v4817, %v4817
    %v4841 = vld [vmem:[#allocation7] sm:$0xf]
    %v4842 = vld [vmem:[#allocation7 + $0x4] sm:$0xf]
    %v4843 = vld [vmem:[#allocation7 + $0x8] sm:$0xf]
    %v4844 = vld [vmem:[#allocation7 + $0xc] sm:$0xf]
    %v4845 = vld [vmem:[#allocation7 + $0x10] sm:$0xf]
    %v4846 = vld [vmem:[#allocation7 + $0x14] sm:$0xf]
    %v4847 = vld [vmem:[#allocation7 + $0x18] sm:$0xf]
    %v4848 = vld [vmem:[#allocation7 + $0x1c] sm:$0xf]
    %v4849 = vld [vmem:[#allocation7 + $0x20] sm:$0xf]
    %v4850 = vld [vmem:[#allocation7 + $0x24] sm:$0xf]
    %v4851 = vld [vmem:[#allocation7 + $0x28] sm:$0xf]
    %v4852 = vld [vmem:[#allocation7 + $0x2c] sm:$0xf]
    %v4853 = vld [vmem:[#allocation7 + $0x30] sm:$0xf]
    %v4854 = vld [vmem:[#allocation7 + $0x34] sm:$0xf]
    %v4855 = vld [vmem:[#allocation7 + $0x38] sm:$0xf]
    %v4856 = vld [vmem:[#allocation7 + $0x3c] sm:$0xf]
    %v4857 = vld [vmem:[#allocation7 + $0x40] sm:$0xf]
    %v4858 = vld [vmem:[#allocation7 + $0x44] sm:$0xf]
    %v4859 = vld [vmem:[#allocation7 + $0x48] sm:$0xf]
    %v4860 = vld [vmem:[#allocation7 + $0x4c] sm:$0xf]
    %v4861 = vld [vmem:[#allocation7 + $0x50] sm:$0xf]
    %v4862 = vld [vmem:[#allocation7 + $0x54] sm:$0xf]
    %v4863 = vld [vmem:[#allocation7 + $0x58] sm:$0xf]
    %v4864 = vld [vmem:[#allocation7 + $0x5c] sm:$0xf]
    %v4865 = vld [vmem:[#allocation7 + $0x60] sm:$0xf]
    %v4866 = vld [vmem:[#allocation7 + $0x64] sm:$0xf]
    %v4867 = vld [vmem:[#allocation7 + $0x68] sm:$0xf]
    %v4868 = vld [vmem:[#allocation7 + $0x6c] sm:$0xf]
    %v4869 = vld [vmem:[#allocation7 + $0x70] sm:$0xf]
    %v4870 = vld [vmem:[#allocation7 + $0x74] sm:$0xf]
    %v4871 = vld [vmem:[#allocation7 + $0x78] sm:$0xf]
    %v4872 = vld [vmem:[#allocation7 + $0x7c] sm:$0xf]
    %v4873 = vld [vmem:[#allocation7 + $0x80] sm:$0xf]
    %v4874 = vld [vmem:[#allocation7 + $0x84] sm:$0xf]
    %v4875 = vld [vmem:[#allocation7 + $0x88] sm:$0xf]
    %v4876 = vld [vmem:[#allocation7 + $0x8c] sm:$0xf]
    %v4877 = vld [vmem:[#allocation7 + $0x90] sm:$0xf]
    %v4878 = vld [vmem:[#allocation7 + $0x94] sm:$0xf]
    %v4879 = vld [vmem:[#allocation7 + $0x98] sm:$0xf]
    %v4880 = vld [vmem:[#allocation7 + $0x9c] sm:$0xf]
    %v4881 = vld [vmem:[#allocation7 + $0xa0] sm:$0xf]
    %v4882 = vld [vmem:[#allocation7 + $0xa4] sm:$0xf]
    %v4883 = vld [vmem:[#allocation7 + $0xa8] sm:$0xf]
    %v4884 = vld [vmem:[#allocation7 + $0xac] sm:$0xf]
    %v4885 = vld [vmem:[#allocation7 + $0xb0] sm:$0xf]
    %v4886 = vld [vmem:[#allocation7 + $0xb4] sm:$0xf]
    %v4887 = vld [vmem:[#allocation7 + $0xb8] sm:$0xf]
    %v4888 = vld [vmem:[#allocation7 + $0xbc] sm:$0xf]
    %v4889 = vld [vmem:[#allocation7 + $0xc0] sm:$0xf]
    %v4890 = vld [vmem:[#allocation7 + $0xc4] sm:$0xf]
    %v4891 = vld [vmem:[#allocation7 + $0xc8] sm:$0xf]
    %v4892 = vld [vmem:[#allocation7 + $0xcc] sm:$0xf]
    %v4893 = vld [vmem:[#allocation7 + $0xd0] sm:$0xf]
    %v4894 = vld [vmem:[#allocation7 + $0xd4] sm:$0xf]
    %v4895 = vld [vmem:[#allocation7 + $0xd8] sm:$0xf]
    %v4896 = vld [vmem:[#allocation7 + $0xdc] sm:$0xf]
    %v4897 = vld [vmem:[#allocation7 + $0xe0] sm:$0xf]
    %v4898 = vld [vmem:[#allocation7 + $0xe4] sm:$0xf]
    %v4899 = vld [vmem:[#allocation7 + $0xe8] sm:$0xf]
    %v4900 = vld [vmem:[#allocation7 + $0xec] sm:$0xf]
    %v4901 = vld [vmem:[#allocation7 + $0xf0] sm:$0xf]
    %v4902 = vld [vmem:[#allocation7 + $0xf4] sm:$0xf]
    %v4903 = vld [vmem:[#allocation7 + $0xf8] sm:$0xf]
    %v4904 = vld [vmem:[#allocation7 + $0xfc] sm:$0xf]
    %v4905 = vld [vmem:[#allocation7 + $0x100] sm:$0xf]
    %v4906 = vld [vmem:[#allocation7 + $0x104] sm:$0xf]
    %v4907 = vld [vmem:[#allocation7 + $0x108] sm:$0xf]
    %v4908 = vld [vmem:[#allocation7 + $0x10c] sm:$0xf]
    %v4909 = vld [vmem:[#allocation7 + $0x110] sm:$0xf]
    %v4910 = vld [vmem:[#allocation7 + $0x114] sm:$0xf]
    %v4911 = vld [vmem:[#allocation7 + $0x118] sm:$0xf]
    %v4912 = vld [vmem:[#allocation7 + $0x11c] sm:$0xf]
    %v4913 = vld [vmem:[#allocation7 + $0x120] sm:$0xf]
    %v4914 = vld [vmem:[#allocation7 + $0x124] sm:$0xf]
    %v4915 = vld [vmem:[#allocation7 + $0x128] sm:$0xf]
    %v4916 = vld [vmem:[#allocation7 + $0x12c] sm:$0xf]
    %v4917 = vld [vmem:[#allocation7 + $0x130] sm:$0xf]
    %v4918 = vld [vmem:[#allocation7 + $0x134] sm:$0xf]
    %v4919 = vld [vmem:[#allocation7 + $0x138] sm:$0xf]
    %v4920 = vld [vmem:[#allocation7 + $0x13c] sm:$0xf]
    %v4921 = vld [vmem:[#allocation7 + $0x140] sm:$0xf]
    %v4922 = vld [vmem:[#allocation7 + $0x144] sm:$0xf]
    %v4923 = vld [vmem:[#allocation7 + $0x148] sm:$0xf]
    %v4924 = vld [vmem:[#allocation7 + $0x14c] sm:$0xf]
    %v4925 = vld [vmem:[#allocation7 + $0x150] sm:$0xf]
    %v4926 = vld [vmem:[#allocation7 + $0x154] sm:$0xf]
    %v4927 = vld [vmem:[#allocation7 + $0x158] sm:$0xf]
    %v4928 = vld [vmem:[#allocation7 + $0x15c] sm:$0xf]
    %v4929 = vld [vmem:[#allocation7 + $0x160] sm:$0xf]
    %v4930 = vld [vmem:[#allocation7 + $0x164] sm:$0xf]
    %v4931 = vld [vmem:[#allocation7 + $0x168] sm:$0xf]
    %v4932 = vld [vmem:[#allocation7 + $0x16c] sm:$0xf]
    %v4933 = vld [vmem:[#allocation7 + $0x170] sm:$0xf]
    %v4934 = vld [vmem:[#allocation7 + $0x174] sm:$0xf]
    %v4935 = vld [vmem:[#allocation7 + $0x178] sm:$0xf]
    %v4936 = vld [vmem:[#allocation7 + $0x17c] sm:$0xf]
    %v4937 = vld [vmem:[#allocation7 + $0x180] sm:$0xf]
    %v4938 = vld [vmem:[#allocation7 + $0x184] sm:$0xf]
    %v4939 = vld [vmem:[#allocation7 + $0x188] sm:$0xf]
    %v4940 = vld [vmem:[#allocation7 + $0x18c] sm:$0xf]
    %v4941 = vld [vmem:[#allocation7 + $0x190] sm:$0xf]
    %v4942 = vld [vmem:[#allocation7 + $0x194] sm:$0xf]
    %v4943 = vld [vmem:[#allocation7 + $0x198] sm:$0xf]
    %v4944 = vld [vmem:[#allocation7 + $0x19c] sm:$0xf]
    %v4945 = vld [vmem:[#allocation7 + $0x1a0] sm:$0xf]
    %v4946 = vld [vmem:[#allocation7 + $0x1a4] sm:$0xf]
    %v4947 = vld [vmem:[#allocation7 + $0x1a8] sm:$0xf]
    %v4948 = vld [vmem:[#allocation7 + $0x1ac] sm:$0xf]
    %v4949 = vld [vmem:[#allocation7 + $0x1b0] sm:$0xf]
    %v4950 = vld [vmem:[#allocation7 + $0x1b4] sm:$0xf]
    %v4951 = vld [vmem:[#allocation7 + $0x1b8] sm:$0xf]
    %v4952 = vld [vmem:[#allocation7 + $0x1bc] sm:$0xf]
    %v4953 = vld [vmem:[#allocation7 + $0x1c0] sm:$0xf]
    %v4954 = vld [vmem:[#allocation7 + $0x1c4] sm:$0xf]
    %v4955 = vld [vmem:[#allocation7 + $0x1c8] sm:$0xf]
    %v4956 = vld [vmem:[#allocation7 + $0x1cc] sm:$0xf]
    %v4957 = vld [vmem:[#allocation7 + $0x1d0] sm:$0xf]
    %v4958 = vld [vmem:[#allocation7 + $0x1d4] sm:$0xf]
    %v4959 = vld [vmem:[#allocation7 + $0x1d8] sm:$0xf]
    %v4960 = vld [vmem:[#allocation7 + $0x1dc] sm:$0xf]
    %v4961 = vld [vmem:[#allocation7 + $0x1e0] sm:$0xf]
    %v4962 = vld [vmem:[#allocation7 + $0x1e4] sm:$0xf]
    %v4963 = vld [vmem:[#allocation7 + $0x1e8] sm:$0xf]
    %v4964 = vld [vmem:[#allocation7 + $0x1ec] sm:$0xf]
    %v4965 = vld [vmem:[#allocation7 + $0x1f0] sm:$0xf]
    %v4966 = vld [vmem:[#allocation7 + $0x1f4] sm:$0xf]
    %v4967 = vld [vmem:[#allocation7 + $0x1f8] sm:$0xf]
    %v4968 = vld [vmem:[#allocation7 + $0x1fc] sm:$0xf]
    %v4969 = vld [vmem:[#allocation7 + $0x200] sm:$0xf]
    %v4970 = vld [vmem:[#allocation7 + $0x204] sm:$0xf]
    %v4971 = vld [vmem:[#allocation7 + $0x208] sm:$0xf]
    %v4972 = vld [vmem:[#allocation7 + $0x20c] sm:$0xf]
    %v4973 = vld [vmem:[#allocation7 + $0x210] sm:$0xf]
    %v4974 = vld [vmem:[#allocation7 + $0x214] sm:$0xf]
    %v4975 = vld [vmem:[#allocation7 + $0x218] sm:$0xf]
    %v4976 = vld [vmem:[#allocation7 + $0x21c] sm:$0xf]
    %v4977 = vld [vmem:[#allocation7 + $0x220] sm:$0xf]
    %v4978 = vld [vmem:[#allocation7 + $0x224] sm:$0xf]
    %v4979 = vld [vmem:[#allocation7 + $0x228] sm:$0xf]
    %v4980 = vld [vmem:[#allocation7 + $0x22c] sm:$0xf]
    %v4981 = vld [vmem:[#allocation7 + $0x230] sm:$0xf]
    %v4982 = vld [vmem:[#allocation7 + $0x234] sm:$0xf]
    %v4983 = vld [vmem:[#allocation7 + $0x238] sm:$0xf]
    %v4984 = vld [vmem:[#allocation7 + $0x23c] sm:$0xf]
    %v4985 = vld [vmem:[#allocation7 + $0x240] sm:$0xf]
    %v4986 = vld [vmem:[#allocation7 + $0x244] sm:$0xf]
    %v4987 = vld [vmem:[#allocation7 + $0x248] sm:$0xf]
    %v4988 = vld [vmem:[#allocation7 + $0x24c] sm:$0xf]
    %v4989 = vld [vmem:[#allocation7 + $0x250] sm:$0xf]
    %v4990 = vld [vmem:[#allocation7 + $0x254] sm:$0xf]
    %v4991 = vld [vmem:[#allocation7 + $0x258] sm:$0xf]
    %v4992 = vld [vmem:[#allocation7 + $0x25c] sm:$0xf]
    %v4993 = vld [vmem:[#allocation7 + $0x260] sm:$0xf]
    %v4994 = vld [vmem:[#allocation7 + $0x264] sm:$0xf]
    %v4995 = vld [vmem:[#allocation7 + $0x268] sm:$0xf]
    %v4996 = vld [vmem:[#allocation7 + $0x26c] sm:$0xf]
    %v4997 = vld [vmem:[#allocation7 + $0x270] sm:$0xf]
    %v4998 = vld [vmem:[#allocation7 + $0x274] sm:$0xf]
    %v4999 = vld [vmem:[#allocation7 + $0x278] sm:$0xf]
    %v5000 = vld [vmem:[#allocation7 + $0x27c] sm:$0xf]
    %v5001 = vld [vmem:[#allocation8] sm:$0x1]
    %v5003 = vlaneseq
    %v5004 = vshrl.u32 %v5003, 7
    %v5005 = vsub.s32 0, %v5004
    %v5006 = vrot.slane %v5001, %v5005
    %v5168 = vunpack.c.l.b16 %v4841
    %v5169 = vunpack.c.l.b16 %v4842
    %v5170 = vunpack.c.l.b16 %v4843
    %v5171 = vunpack.c.l.b16 %v4844
    %v5172 = vunpack.c.l.b16 %v4845
    %v5173 = vunpack.c.l.b16 %v4846
    %v5174 = vunpack.c.l.b16 %v4847
    %v5175 = vunpack.c.l.b16 %v4848
    %v5176 = vunpack.c.l.b16 %v4849
    %v5177 = vunpack.c.l.b16 %v4850
    %v5178 = vunpack.c.l.b16 %v4851
    %v5179 = vunpack.c.l.b16 %v4852
    %v5180 = vunpack.c.l.b16 %v4853
    %v5181 = vunpack.c.l.b16 %v4854
    %v5182 = vunpack.c.l.b16 %v4855
    %v5183 = vunpack.c.l.b16 %v4856
    %v5184 = vunpack.c.l.b16 %v4857
    %v5185 = vunpack.c.l.b16 %v4858
    %v5186 = vunpack.c.l.b16 %v4859
    %v5187 = vunpack.c.l.b16 %v4860
    %v5188 = vunpack.c.l.b16 %v4861
    %v5189 = vunpack.c.l.b16 %v4862
    %v5190 = vunpack.c.l.b16 %v4863
    %v5191 = vunpack.c.l.b16 %v4864
    %v5192 = vunpack.c.l.b16 %v4865
    %v5193 = vunpack.c.l.b16 %v4866
    %v5194 = vunpack.c.l.b16 %v4867
    %v5195 = vunpack.c.l.b16 %v4868
    %v5196 = vunpack.c.l.b16 %v4869
    %v5197 = vunpack.c.l.b16 %v4870
    %v5198 = vunpack.c.l.b16 %v4871
    %v5199 = vunpack.c.l.b16 %v4872
    %v5200 = vunpack.c.l.b16 %v4873
    %v5201 = vunpack.c.l.b16 %v4874
    %v5202 = vunpack.c.l.b16 %v4875
    %v5203 = vunpack.c.l.b16 %v4876
    %v5204 = vunpack.c.l.b16 %v4877
    %v5205 = vunpack.c.l.b16 %v4878
    %v5206 = vunpack.c.l.b16 %v4879
    %v5207 = vunpack.c.l.b16 %v4880
    %v5208 = vunpack.c.l.b16 %v4881
    %v5209 = vunpack.c.l.b16 %v4882
    %v5210 = vunpack.c.l.b16 %v4883
    %v5211 = vunpack.c.l.b16 %v4884
    %v5212 = vunpack.c.l.b16 %v4885
    %v5213 = vunpack.c.l.b16 %v4886
    %v5214 = vunpack.c.l.b16 %v4887
    %v5215 = vunpack.c.l.b16 %v4888
    %v5216 = vunpack.c.l.b16 %v4889
    %v5217 = vunpack.c.l.b16 %v4890
    %v5218 = vunpack.c.l.b16 %v4891
    %v5219 = vunpack.c.l.b16 %v4892
    %v5220 = vunpack.c.l.b16 %v4893
    %v5221 = vunpack.c.l.b16 %v4894
    %v5222 = vunpack.c.l.b16 %v4895
    %v5223 = vunpack.c.l.b16 %v4896
    %v5224 = vunpack.c.l.b16 %v4897
    %v5225 = vunpack.c.l.b16 %v4898
    %v5226 = vunpack.c.l.b16 %v4899
    %v5227 = vunpack.c.l.b16 %v4900
    %v5228 = vunpack.c.l.b16 %v4901
    %v5229 = vunpack.c.l.b16 %v4902
    %v5230 = vunpack.c.l.b16 %v4903
    %v5231 = vunpack.c.l.b16 %v4904
    %v5232 = vunpack.c.l.b16 %v4905
    %v5233 = vunpack.c.l.b16 %v4906
    %v5234 = vunpack.c.l.b16 %v4907
    %v5235 = vunpack.c.l.b16 %v4908
    %v5236 = vunpack.c.l.b16 %v4909
    %v5237 = vunpack.c.l.b16 %v4910
    %v5238 = vunpack.c.l.b16 %v4911
    %v5239 = vunpack.c.l.b16 %v4912
    %v5240 = vunpack.c.l.b16 %v4913
    %v5241 = vunpack.c.l.b16 %v4914
    %v5242 = vunpack.c.l.b16 %v4915
    %v5243 = vunpack.c.l.b16 %v4916
    %v5244 = vunpack.c.l.b16 %v4917
    %v5245 = vunpack.c.l.b16 %v4918
    %v5246 = vunpack.c.l.b16 %v4919
    %v5247 = vunpack.c.l.b16 %v4920
    %v5248 = vunpack.c.l.b16 %v4921
    %v5249 = vunpack.c.l.b16 %v4922
    %v5250 = vunpack.c.l.b16 %v4923
    %v5251 = vunpack.c.l.b16 %v4924
    %v5252 = vunpack.c.l.b16 %v4925
    %v5253 = vunpack.c.l.b16 %v4926
    %v5254 = vunpack.c.l.b16 %v4927
    %v5255 = vunpack.c.l.b16 %v4928
    %v5256 = vunpack.c.l.b16 %v4929
    %v5257 = vunpack.c.l.b16 %v4930
    %v5258 = vunpack.c.l.b16 %v4931
    %v5259 = vunpack.c.l.b16 %v4932
    %v5260 = vunpack.c.l.b16 %v4933
    %v5261 = vunpack.c.l.b16 %v4934
    %v5262 = vunpack.c.l.b16 %v4935
    %v5263 = vunpack.c.l.b16 %v4936
    %v5264 = vunpack.c.l.b16 %v4937
    %v5265 = vunpack.c.l.b16 %v4938
    %v5266 = vunpack.c.l.b16 %v4939
    %v5267 = vunpack.c.l.b16 %v4940
    %v5268 = vunpack.c.l.b16 %v4941
    %v5269 = vunpack.c.l.b16 %v4942
    %v5270 = vunpack.c.l.b16 %v4943
    %v5271 = vunpack.c.l.b16 %v4944
    %v5272 = vunpack.c.l.b16 %v4945
    %v5273 = vunpack.c.l.b16 %v4946
    %v5274 = vunpack.c.l.b16 %v4947
    %v5275 = vunpack.c.l.b16 %v4948
    %v5276 = vunpack.c.l.b16 %v4949
    %v5277 = vunpack.c.l.b16 %v4950
    %v5278 = vunpack.c.l.b16 %v4951
    %v5279 = vunpack.c.l.b16 %v4952
    %v5280 = vunpack.c.l.b16 %v4953
    %v5281 = vunpack.c.l.b16 %v4954
    %v5282 = vunpack.c.l.b16 %v4955
    %v5283 = vunpack.c.l.b16 %v4956
    %v5284 = vunpack.c.l.b16 %v4957
    %v5285 = vunpack.c.l.b16 %v4958
    %v5286 = vunpack.c.l.b16 %v4959
    %v5287 = vunpack.c.l.b16 %v4960
    %v5288 = vunpack.c.l.b16 %v4961
    %v5289 = vunpack.c.l.b16 %v4962
    %v5290 = vunpack.c.l.b16 %v4963
    %v5291 = vunpack.c.l.b16 %v4964
    %v5292 = vunpack.c.l.b16 %v4965
    %v5293 = vunpack.c.l.b16 %v4966
    %v5294 = vunpack.c.l.b16 %v4967
    %v5295 = vunpack.c.l.b16 %v4968
    %v5296 = vunpack.c.l.b16 %v4969
    %v5297 = vunpack.c.l.b16 %v4970
    %v5298 = vunpack.c.l.b16 %v4971
    %v5299 = vunpack.c.l.b16 %v4972
    %v5300 = vunpack.c.l.b16 %v4973
    %v5301 = vunpack.c.l.b16 %v4974
    %v5302 = vunpack.c.l.b16 %v4975
    %v5303 = vunpack.c.l.b16 %v4976
    %v5304 = vunpack.c.l.b16 %v4977
    %v5305 = vunpack.c.l.b16 %v4978
    %v5306 = vunpack.c.l.b16 %v4979
    %v5307 = vunpack.c.l.b16 %v4980
    %v5308 = vunpack.c.l.b16 %v4981
    %v5309 = vunpack.c.l.b16 %v4982
    %v5310 = vunpack.c.l.b16 %v4983
    %v5311 = vunpack.c.l.b16 %v4984
    %v5312 = vunpack.c.l.b16 %v4985
    %v5313 = vunpack.c.l.b16 %v4986
    %v5314 = vunpack.c.l.b16 %v4987
    %v5315 = vunpack.c.l.b16 %v4988
    %v5316 = vunpack.c.l.b16 %v4989
    %v5317 = vunpack.c.l.b16 %v4990
    %v5318 = vunpack.c.l.b16 %v4991
    %v5319 = vunpack.c.l.b16 %v4992
    %v5320 = vunpack.c.l.b16 %v4993
    %v5321 = vunpack.c.l.b16 %v4994
    %v5322 = vunpack.c.l.b16 %v4995
    %v5323 = vunpack.c.l.b16 %v4996
    %v5324 = vunpack.c.l.b16 %v4997
    %v5325 = vunpack.c.l.b16 %v4998
    %v5326 = vunpack.c.l.b16 %v4999
    %v5327 = vunpack.c.l.b16 %v5000
    %v5328 = vpack.c.b16 %v5169, %v5168
    %v5329 = vpack.c.b16 %v5171, %v5170
    %v5330 = vpack.c.b16 %v5173, %v5172
    %v5331 = vpack.c.b16 %v5175, %v5174
    %v5332 = vpack.c.b16 %v5177, %v5176
    %v5333 = vpack.c.b16 %v5179, %v5178
    %v5334 = vpack.c.b16 %v5181, %v5180
    %v5335 = vpack.c.b16 %v5183, %v5182
    %v5336 = vpack.c.b16 %v5185, %v5184
    %v5337 = vpack.c.b16 %v5187, %v5186
    %v5338 = vpack.c.b16 %v5189, %v5188
    %v5339 = vpack.c.b16 %v5191, %v5190
    %v5340 = vpack.c.b16 %v5193, %v5192
    %v5341 = vpack.c.b16 %v5195, %v5194
    %v5342 = vpack.c.b16 %v5197, %v5196
    %v5343 = vpack.c.b16 %v5199, %v5198
    %v5344 = vpack.c.b16 %v5201, %v5200
    %v5345 = vpack.c.b16 %v5203, %v5202
    %v5346 = vpack.c.b16 %v5205, %v5204
    %v5347 = vpack.c.b16 %v5207, %v5206
    %v5348 = vpack.c.b16 %v5209, %v5208
    %v5349 = vpack.c.b16 %v5211, %v5210
    %v5350 = vpack.c.b16 %v5213, %v5212
    %v5351 = vpack.c.b16 %v5215, %v5214
    %v5352 = vpack.c.b16 %v5217, %v5216
    %v5353 = vpack.c.b16 %v5219, %v5218
    %v5354 = vpack.c.b16 %v5221, %v5220
    %v5355 = vpack.c.b16 %v5223, %v5222
    %v5356 = vpack.c.b16 %v5225, %v5224
    %v5357 = vpack.c.b16 %v5227, %v5226
    %v5358 = vpack.c.b16 %v5229, %v5228
    %v5359 = vpack.c.b16 %v5231, %v5230
    %v5360 = vpack.c.b16 %v5233, %v5232
    %v5361 = vpack.c.b16 %v5235, %v5234
    %v5362 = vpack.c.b16 %v5237, %v5236
    %v5363 = vpack.c.b16 %v5239, %v5238
    %v5364 = vpack.c.b16 %v5241, %v5240
    %v5365 = vpack.c.b16 %v5243, %v5242
    %v5366 = vpack.c.b16 %v5245, %v5244
    %v5367 = vpack.c.b16 %v5247, %v5246
    %v5368 = vpack.c.b16 %v5249, %v5248
    %v5369 = vpack.c.b16 %v5251, %v5250
    %v5370 = vpack.c.b16 %v5253, %v5252
    %v5371 = vpack.c.b16 %v5255, %v5254
    %v5372 = vpack.c.b16 %v5257, %v5256
    %v5373 = vpack.c.b16 %v5259, %v5258
    %v5374 = vpack.c.b16 %v5261, %v5260
    %v5375 = vpack.c.b16 %v5263, %v5262
    %v5376 = vpack.c.b16 %v5265, %v5264
    %v5377 = vpack.c.b16 %v5267, %v5266
    %v5378 = vpack.c.b16 %v5269, %v5268
    %v5379 = vpack.c.b16 %v5271, %v5270
    %v5380 = vpack.c.b16 %v5273, %v5272
    %v5381 = vpack.c.b16 %v5275, %v5274
    %v5382 = vpack.c.b16 %v5277, %v5276
    %v5383 = vpack.c.b16 %v5279, %v5278
    %v5384 = vpack.c.b16 %v5281, %v5280
    %v5385 = vpack.c.b16 %v5283, %v5282
    %v5386 = vpack.c.b16 %v5285, %v5284
    %v5387 = vpack.c.b16 %v5287, %v5286
    %v5388 = vpack.c.b16 %v5289, %v5288
    %v5389 = vpack.c.b16 %v5291, %v5290
    %v5390 = vpack.c.b16 %v5293, %v5292
    %v5391 = vpack.c.b16 %v5295, %v5294
    %v5392 = vpack.c.b16 %v5297, %v5296
    %v5393 = vpack.c.b16 %v5299, %v5298
    %v5394 = vpack.c.b16 %v5301, %v5300
    %v5395 = vpack.c.b16 %v5303, %v5302
    %v5396 = vpack.c.b16 %v5305, %v5304
    %v5397 = vpack.c.b16 %v5307, %v5306
    %v5398 = vpack.c.b16 %v5309, %v5308
    %v5399 = vpack.c.b16 %v5311, %v5310
    %v5400 = vpack.c.b16 %v5313, %v5312
    %v5401 = vpack.c.b16 %v5315, %v5314
    %v5402 = vpack.c.b16 %v5317, %v5316
    %v5403 = vpack.c.b16 %v5319, %v5318
    %v5404 = vpack.c.b16 %v5321, %v5320
    %v5405 = vpack.c.b16 %v5323, %v5322
    %v5406 = vpack.c.b16 %v5325, %v5324
    %v5407 = vpack.c.b16 %v5327, %v5326
    %5488 = vmatprep.subr.bf16.mxu0 0
    %5489 = vmatpush1.bf16.msra.mxu0 %v5328
    %5490 = vmatprep.subr.bf16.mxu0 0
    %5491 = vmatpush1.bf16.msra.mxu0 %v5329
    %5492 = vmatprep.subr.bf16.mxu0 0
    %5493 = vmatpush1.bf16.msra.mxu0 %v5330
    %5494 = vmatprep.subr.bf16.mxu0 0
    %5495 = vmatpush1.bf16.msra.mxu0 %v5331
    %5496 = vmatprep.subr.bf16.mxu0 0
    %5497 = vmatpush1.bf16.msra.mxu0 %v5332
    %5498 = vmatprep.subr.bf16.mxu0 0
    %5499 = vmatpush1.bf16.msra.mxu0 %v5333
    %5500 = vmatprep.subr.bf16.mxu0 0
    %5501 = vmatpush1.bf16.msra.mxu0 %v5334
    %5502 = vmatprep.subr.bf16.mxu0 0
    %5503 = vmatpush1.bf16.msra.mxu0 %v5335
    %5504 = vmatprep.subr.bf16.mxu0 0
    %5505 = vmatpush1.bf16.msra.mxu0 %v5336
    %5506 = vmatprep.subr.bf16.mxu0 0
    %5507 = vmatpush1.bf16.msra.mxu0 %v5337
    %5508 = vmatprep.subr.bf16.mxu0 0
    %5509 = vmatpush1.bf16.msra.mxu0 %v5338
    %5510 = vmatprep.subr.bf16.mxu0 0
    %5511 = vmatpush1.bf16.msra.mxu0 %v5339
    %5512 = vmatprep.subr.bf16.mxu0 0
    %5513 = vmatpush1.bf16.msra.mxu0 %v5340
    %5514 = vmatprep.subr.bf16.mxu0 0
    %5515 = vmatpush1.bf16.msra.mxu0 %v5341
    %5516 = vmatprep.subr.bf16.mxu0 0
    %5517 = vmatpush1.bf16.msra.mxu0 %v5342
    %5518 = vmatprep.subr.bf16.mxu0 0
    %5519 = vmatpush1.bf16.msra.mxu0 %v5343
    %5520 = vmatprep.mubr.bf16.mxu0 %v4832
    %5521 = vmatmul.mubr.bf16.gmra.mrb[0].mxu0 %v4831
    %v5522 = vpop.f32.mrb[0].mxu0
    %v5523 = vadd.f32 %v5006, %v5522
    %v5524 = vpop.f32.mrb[0].mxu0
    %v5525 = vpop.f32.mrb[0].mxu0
    %v5526 = vpop.f32.mrb[0].mxu0
    %5527 = vdwg.mxu0
    %5528 = vmatprep.subr.bf16.mxu0 0
    %5529 = vmatpush1.bf16.msra.mxu0 %v5344
    %5530 = vmatprep.subr.bf16.mxu0 0
    %5531 = vmatpush1.bf16.msra.mxu0 %v5345
    %5532 = vmatprep.subr.bf16.mxu0 0
    %5533 = vmatpush1.bf16.msra.mxu0 %v5346
    %5534 = vmatprep.subr.bf16.mxu0 0
    %5535 = vmatpush1.bf16.msra.mxu0 %v5347
    %5536 = vmatprep.subr.bf16.mxu0 0
    %5537 = vmatpush1.bf16.msra.mxu0 %v5348
    %5538 = vmatprep.subr.bf16.mxu0 0
    %5539 = vmatpush1.bf16.msra.mxu0 %v5349
    %5540 = vmatprep.subr.bf16.mxu0 0
    %5541 = vmatpush1.bf16.msra.mxu0 %v5350
    %5542 = vmatprep.subr.bf16.mxu0 0
    %5543 = vmatpush1.bf16.msra.mxu0 %v5351
    %5544 = vmatprep.subr.bf16.mxu0 0
    %5545 = vmatpush1.bf16.msra.mxu0 %v5352
    %5546 = vmatprep.subr.bf16.mxu0 0
    %5547 = vmatpush1.bf16.msra.mxu0 %v5353
    %5548 = vmatprep.subr.bf16.mxu0 0
    %5549 = vmatpush1.bf16.msra.mxu0 %v5354
    %5550 = vmatprep.subr.bf16.mxu0 0
    %5551 = vmatpush1.bf16.msra.mxu0 %v5355
    %5552 = vmatprep.subr.bf16.mxu0 0
    %5553 = vmatpush1.bf16.msra.mxu0 %v5356
    %5554 = vmatprep.subr.bf16.mxu0 0
    %5555 = vmatpush1.bf16.msra.mxu0 %v5357
    %5556 = vmatprep.subr.bf16.mxu0 0
    %5557 = vmatpush1.bf16.msra.mxu0 %v5358
    %5558 = vmatprep.subr.bf16.mxu0 0
    %5559 = vmatpush1.bf16.msra.mxu0 %v5359
    %5560 = vmatprep.mubr.bf16.mxu0 %v4834
    %5561 = vmatmul.mubr.bf16.gmra.mrb[0].mxu0 %v4833
    %v5562 = vpop.f32.mrb[0].mxu0
    %v5563 = vadd.f32 %v5523, %v5562
    %v5564 = vpop.f32.mrb[0].mxu0
    %v5565 = vpop.f32.mrb[0].mxu0
    %v5566 = vpop.f32.mrb[0].mxu0
    %5567 = vdwg.mxu0
    %5568 = vmatprep.subr.bf16.mxu0 0
    %5569 = vmatpush1.bf16.msra.mxu0 %v5360
    %5570 = vmatprep.subr.bf16.mxu0 0
    %5571 = vmatpush1.bf16.msra.mxu0 %v5361
    %5572 = vmatprep.subr.bf16.mxu0 0
    %5573 = vmatpush1.bf16.msra.mxu0 %v5362
    %5574 = vmatprep.subr.bf16.mxu0 0
    %5575 = vmatpush1.bf16.msra.mxu0 %v5363
    %5576 = vmatprep.subr.bf16.mxu0 0
    %5577 = vmatpush1.bf16.msra.mxu0 %v5364
    %5578 = vmatprep.subr.bf16.mxu0 0
    %5579 = vmatpush1.bf16.msra.mxu0 %v5365
    %5580 = vmatprep.subr.bf16.mxu0 0
    %5581 = vmatpush1.bf16.msra.mxu0 %v5366
    %5582 = vmatprep.subr.bf16.mxu0 0
    %5583 = vmatpush1.bf16.msra.mxu0 %v5367
    %5584 = vmatprep.subr.bf16.mxu0 0
    %5585 = vmatpush1.bf16.msra.mxu0 %v5368
    %5586 = vmatprep.subr.bf16.mxu0 0
    %5587 = vmatpush1.bf16.msra.mxu0 %v5369
    %5588 = vmatprep.subr.bf16.mxu0 0
    %5589 = vmatpush1.bf16.msra.mxu0 %v5370
    %5590 = vmatprep.subr.bf16.mxu0 0
    %5591 = vmatpush1.bf16.msra.mxu0 %v5371
    %5592 = vmatprep.subr.bf16.mxu0 0
    %5593 = vmatpush1.bf16.msra.mxu0 %v5372
    %5594 = vmatprep.subr.bf16.mxu0 0
    %5595 = vmatpush1.bf16.msra.mxu0 %v5373
    %5596 = vmatprep.subr.bf16.mxu0 0
    %5597 = vmatpush1.bf16.msra.mxu0 %v5374
    %5598 = vmatprep.subr.bf16.mxu0 0
    %5599 = vmatpush1.bf16.msra.mxu0 %v5375
    %5600 = vmatprep.mubr.bf16.mxu0 %v4836
    %5601 = vmatmul.mubr.bf16.gmra.mrb[0].mxu0 %v4835
    %v5602 = vpop.f32.mrb[0].mxu0
    %v5603 = vadd.f32 %v5563, %v5602
    %v5604 = vpop.f32.mrb[0].mxu0
    %v5605 = vpop.f32.mrb[0].mxu0
    %v5606 = vpop.f32.mrb[0].mxu0
    %5607 = vdwg.mxu0
    %5608 = vmatprep.subr.bf16.mxu0 0
    %5609 = vmatpush1.bf16.msra.mxu0 %v5376
    %5610 = vmatprep.subr.bf16.mxu0 0
    %5611 = vmatpush1.bf16.msra.mxu0 %v5377
    %5612 = vmatprep.subr.bf16.mxu0 0
    %5613 = vmatpush1.bf16.msra.mxu0 %v5378
    %5614 = vmatprep.subr.bf16.mxu0 0
    %5615 = vmatpush1.bf16.msra.mxu0 %v5379
    %5616 = vmatprep.subr.bf16.mxu0 0
    %5617 = vmatpush1.bf16.msra.mxu0 %v5380
    %5618 = vmatprep.subr.bf16.mxu0 0
    %5619 = vmatpush1.bf16.msra.mxu0 %v5381
    %5620 = vmatprep.subr.bf16.mxu0 0
    %5621 = vmatpush1.bf16.msra.mxu0 %v5382
    %5622 = vmatprep.subr.bf16.mxu0 0
    %5623 = vmatpush1.bf16.msra.mxu0 %v5383
    %5624 = vmatprep.subr.bf16.mxu0 0
    %5625 = vmatpush1.bf16.msra.mxu0 %v5384
    %5626 = vmatprep.subr.bf16.mxu0 0
    %5627 = vmatpush1.bf16.msra.mxu0 %v5385
    %5628 = vmatprep.subr.bf16.mxu0 0
    %5629 = vmatpush1.bf16.msra.mxu0 %v5386
    %5630 = vmatprep.subr.bf16.mxu0 0
    %5631 = vmatpush1.bf16.msra.mxu0 %v5387
    %5632 = vmatprep.subr.bf16.mxu0 0
    %5633 = vmatpush1.bf16.msra.mxu0 %v5388
    %5634 = vmatprep.subr.bf16.mxu0 0
    %5635 = vmatpush1.bf16.msra.mxu0 %v5389
    %5636 = vmatprep.subr.bf16.mxu0 0
    %5637 = vmatpush1.bf16.msra.mxu0 %v5390
    %5638 = vmatprep.subr.bf16.mxu0 0
    %5639 = vmatpush1.bf16.msra.mxu0 %v5391
    %5640 = vmatprep.mubr.bf16.mxu0 %v4838
    %5641 = vmatmul.mubr.bf16.gmra.mrb[0].mxu0 %v4837
    %v5642 = vpop.f32.mrb[0].mxu0
    %v5643 = vadd.f32 %v5603, %v5642
    %v5644 = vpop.f32.mrb[0].mxu0
    %v5645 = vpop.f32.mrb[0].mxu0
    %v5646 = vpop.f32.mrb[0].mxu0
    %5647 = vdwg.mxu0
    %5648 = vmatprep.subr.bf16.mxu0 0
    %5649 = vmatpush1.bf16.msra.mxu0 %v5392
    %5650 = vmatprep.subr.bf16.mxu0 0
    %5651 = vmatpush1.bf16.msra.mxu0 %v5393
    %5652 = vmatprep.subr.bf16.mxu0 0
    %5653 = vmatpush1.bf16.msra.mxu0 %v5394
    %5654 = vmatprep.subr.bf16.mxu0 0
    %5655 = vmatpush1.bf16.msra.mxu0 %v5395
    %5656 = vmatprep.subr.bf16.mxu0 0
    %5657 = vmatpush1.bf16.msra.mxu0 %v5396
    %5658 = vmatprep.subr.bf16.mxu0 0
    %5659 = vmatpush1.bf16.msra.mxu0 %v5397
    %5660 = vmatprep.subr.bf16.mxu0 0
    %5661 = vmatpush1.bf16.msra.mxu0 %v5398
    %5662 = vmatprep.subr.bf16.mxu0 0
    %5663 = vmatpush1.bf16.msra.mxu0 %v5399
    %5664 = vmatprep.subr.bf16.mxu0 0
    %5665 = vmatpush1.bf16.msra.mxu0 %v5400
    %5666 = vmatprep.subr.bf16.mxu0 0
    %5667 = vmatpush1.bf16.msra.mxu0 %v5401
    %5668 = vmatprep.subr.bf16.mxu0 0
    %5669 = vmatpush1.bf16.msra.mxu0 %v5402
    %5670 = vmatprep.subr.bf16.mxu0 0
    %5671 = vmatpush1.bf16.msra.mxu0 %v5403
    %5672 = vmatprep.subr.bf16.mxu0 0
    %5673 = vmatpush1.bf16.msra.mxu0 %v5404
    %5674 = vmatprep.subr.bf16.mxu0 0
    %5675 = vmatpush1.bf16.msra.mxu0 %v5405
    %5676 = vmatprep.subr.bf16.mxu0 0
    %5677 = vmatpush1.bf16.msra.mxu0 %v5406
    %5678 = vmatprep.subr.bf16.mxu0 0
    %5679 = vmatpush1.bf16.msra.mxu0 %v5407
    %5680 = vmatprep.mubr.bf16.mxu0 %v4840
    %5681 = vmatmul.mubr.bf16.gmra.mrb[0].mxu0 %v4839
    %v5682 = vpop.f32.mrb[0].mxu0
    %v5683 = vadd.f32 %v5643, %v5682
    %v5684 = vpop.f32.mrb[0].mxu0
    %v5685 = vpop.f32.mrb[0].mxu0
    %v5686 = vpop.f32.mrb[0].mxu0
    %5687 = vdwg.mxu0
    %5688 = vst [vmem:[#allocation10] sm:$0xff] %v5683
    // Predicated region
    $region38: #{cls_time_freq_encoder.1} parent=1 // pred_check
      _
    $region39: #{cls_time_freq_encoder.1} parent=1 // pred_check_branch
      %5690 = sbr.rel (0) target = $region41
    $region40: #{cls_time_freq_encoder.1} parent=1 // pred_region
      _
    $region41: #{cls_time_freq_encoder.1} parent=1 // pred_fallthru
      _
    // Predicated region
    $region42: #{cls_time_freq_encoder.1} parent=1 // pred_check
      _
    $region43: #{cls_time_freq_encoder.1} parent=1 // pred_check_branch
      %5692 = sbr.rel (0) target = $region45
    $region44: #{cls_time_freq_encoder.1} parent=1 // pred_region
      %s5694 = ssub.s32 128, 128
      %5695 = vsyncadd [#allocation4], %s5694
      %s5697 = sshll.u32 [#allocation10], 4
      %s5698 = int_to_ptr.vmem [resolvable:$true] %s5697
      %5700 = dma.vmem_to_hbm [thread:$0]  %s5698, 128, %s6, [#allocation4]
    $region45: #{cls_time_freq_encoder.1} parent=1 // pred_fallthru
      _
    // Predicated region
    $region46: #{cls_time_freq_encoder.1} parent=1 // pred_check
      _
    $region47: #{cls_time_freq_encoder.1} parent=1 // pred_check_branch
      %5702 = sbr.rel (0) target = $region49
    $region48: #{cls_time_freq_encoder.1} parent=1 // pred_region
      _
    $region49: #{cls_time_freq_encoder.1} parent=1 // pred_fallthru
      _
    // Predicated region
    $region50: #{cls_time_freq_encoder.1} parent=1 // pred_check
      _
    $region51: #{cls_time_freq_encoder.1} parent=1 // pred_check_branch
      %5704 = sbr.rel (0) target = $region53
    $region52: #{cls_time_freq_encoder.1} parent=1 // pred_region
      %5705 = dma.done [#allocation4], 128
    $region53: #{cls_time_freq_encoder.1} parent=1 // pred_fallthru
      _
    %5706 = vsyncpa [#allocation3], 1
    %5707 = vsyncpa [#allocation6], 1
    %5708 = vsyncpa [#allocation9], 1
    %5709 = vsyncpa [#allocation4], 1

</llo_original>
